<compile_context>
chip_gen: v7x
topology: tpu7x:2x2x1
jax: 0.10.0
libtpu: 0.0.40
codegen_flags: <defaults>
</compile_context>

<pallas_src>
import functools

import numpy as np
import jax
import jax.numpy as jnp
from jax import lax
from jax.experimental import pallas as pl
from jax.experimental.pallas import tpu as pltpu

LANE = 128  # padded channel / class width -> lane-dense stores & wide fc K


# ----------------------------------------------------------------------------
# Host-built constant: fused (2x2 avg pool + dx column shift + dy zero pad)
# ----------------------------------------------------------------------------
def _make_pool_shift_mats(h, w):
    """(3*(h//2+2)*(w//2), h*w) matrix.

    Row block dx in {0,1,2} holds the 2x2-average-pooled map of a (h, w)
    feature map, column-shifted by (dx-1) with zero fill, with one zero row of
    width w//2 above and below (so layer-2 dy taps become 8-aligned row slices
    inside the kernel: rows [dx*80 + dy*8 : +64]).
    """
    h2, w2 = h // 2, w // 2
    rows_per_dx = (h2 + 2) * w2
    p = np.zeros((3 * rows_per_dx, h * w), np.float32)
    for dx in range(3):
        for hp in range(h2 + 2):
            hs = hp - 1
            if not (0 <= hs < h2):
                continue
            for wo in range(w2):
                ws = wo + dx - 1
                if not (0 <= ws < w2):
                    continue
                r = dx * rows_per_dx + hp * w2 + wo
                for a in range(2):
                    for b in range(2):
                        p[r, (2 * hs + a) * w + (2 * ws + b)] = 0.25
    return jnp.asarray(p, jnp.bfloat16)


# ----------------------------------------------------------------------------
# Fused forward kernel: conv1 -> relu -> pool -> conv2 -> relu -> global pool
#                       -> fc logits -> per-example cross entropy
# ----------------------------------------------------------------------------
def _fused_fwd_kernel(y_sref, patches_ref, w1_ref, b1_ref, pshift_ref,
                      w2_ref, b2_ref, fcw_ref, fcb_ref,
                      feats_ref, logits_ref, loss_ref, *, num_class, ph, pw):
    # y_sref      : (N,) int32 labels in SMEM (scalar prefetch)
    # patches_ref : (Nc, HW, 9*Cin) bf16  3x3 patches, taps fused on lanes
    # w1_ref      : (9*Cin, Ch)     bf16  conv1 weight (single wide-K contraction)
    # b1_ref      : (1, Ch)         f32
    # pshift_ref  : (3*(ph+2)*pw, HW) bf16  pool + dx-shift + dy-pad matrix
    # w2_ref      : (9, Ch, LANE)   bf16  conv2 per-tap weights (Cout padded to 128)
    # b2_ref      : (1, LANE)       f32
    # fcw_ref     : (LANE, LANE)    bf16  classifier (in/out zero-padded)
    # fcb_ref     : (1, LANE)       f32
    # feats_ref   : (1, Nc, LANE)   f32   globally pooled features
    # logits_ref  : (1, Nc, LANE)   f32   masked classifier logits
    # loss_ref    : (1, Nc, 1)      f32   per-example cross-entropy terms
    nc = patches_ref.shape[0]
    hw1 = patches_ref.shape[1]
    k1 = patches_ref.shape[2]
    ch = w1_ref.shape[1]
    hw2 = ph * pw                       # layer-2 spatial positions (8*8)
    rows_dx = (ph + 2) * pw             # rows per dx block in pshift (80)

    # ---- layer 1: 3x3 conv as ONE wide-K matmul over the whole chunk --------
    xs = patches_ref[...].reshape(nc * hw1, k1)                      # bf16
    y1 = jnp.dot(xs, w1_ref[...], preferred_element_type=jnp.float32)
    y1 = jnp.maximum(y1 + b1_ref[...], 0.0)                          # bias + ReLU
    y1b = y1.astype(jnp.bfloat16).reshape(nc, hw1, ch)

    # ---- 2x2 avg pool (+ dx shifts + dy zero padding) via one matrix --------
    pshift = pshift_ref[...]
    pm = jnp.stack(
        [jnp.dot(pshift, y1b[n], preferred_element_type=jnp.float32)
         for n in range(nc)], axis=0)                                # (Nc, 240, Ch) f32

    # ---- layer 2: 3x3 conv = 9 accumulating matmuls on aligned row slices ---
    acc = jnp.zeros((nc * hw2, LANE), jnp.float32)
    for dy in range(3):
        for dx in range(3):
            t = dy * 3 + dx
            start = dx * rows_dx + dy * pw                           # multiples of 8
            tap = pm[:, start:start + hw2, :].reshape(nc * hw2, ch)
            acc = acc + jnp.dot(tap.astype(jnp.bfloat16), w2_ref[t],
                                preferred_element_type=jnp.float32)
    y2 = jnp.maximum(acc + b2_ref[...], 0.0)                         # bias + ReLU

    # ---- 2x2 pool + AvgPool2d(fea) collapse into one global mean ------------
    feats = jnp.mean(y2.reshape(nc, hw2, LANE), axis=1)              # (Nc, LANE) f32
    feats_ref[0] = feats

    # ---- fake classifier + per-example cross entropy ------------------------
    logits = jnp.dot(feats.astype(jnp.bfloat16), fcw_ref[...],
                     preferred_element_type=jnp.float32) + fcb_ref[...]
    col = lax.broadcasted_iota(jnp.int32, (nc, LANE), 1)
    logits = jnp.where(col < num_class, logits, -1e30)               # mask padded cls
    logits_ref[0] = logits

    base = pl.program_id(0) * nc
    # labels read as scalars from SMEM (a label >= num_class would blow up the
    # loss, same as the reference with an out-of-range target).
    yvec = jnp.concatenate(
        [jnp.full((1, 1), y_sref[base + n], dtype=jnp.int32) for n in range(nc)],
        axis=0)                                                      # (Nc, 1)
    m = jnp.max(logits, axis=1, keepdims=True)
    lse = m + jnp.log(jnp.sum(jnp.exp(logits - m), axis=1, keepdims=True))
    picked = jnp.sum(jnp.where(col == yvec, logits, 0.0), axis=1, keepdims=True)
    loss_ref[0] = lse - picked


# ----------------------------------------------------------------------------
# Prototype cosine-matching head (eval / forward_proto)
# ----------------------------------------------------------------------------
def _proto_kernel(sup_ref, qry_ref, o_ref):
    # sup: (1, n_way, k_shot, C) pooled support feats ; qry: (1, q, C) ; out: (1, q, n_way)
    sup = sup_ref[0]
    qry = qry_ref[0]
    proto = jnp.mean(sup, axis=1)                    # mean over k_shot
    inv = lax.rsqrt(jnp.maximum(jnp.sum(proto * proto, axis=1, keepdims=True),
                                1e-24))              # F.normalize(p=2) on proto only,
    proto = proto * inv                              # query unnormalized (matches ref)
    o_ref[0] = lax.dot_general(qry, proto, (((1,), (1,)), ((), ())),
                               preferred_element_type=jnp.float32)


def proto_similarity(sup_f, qry_f):
    b, n_way, k_shot, c = sup_f.shape
    q = qry_f.shape[1]
    return pl.pallas_call(
        _proto_kernel,
        out_shape=jax.ShapeDtypeStruct((b, q, n_way), jnp.float32),
        grid=(b,),
        in_specs=[pl.BlockSpec((1, n_way, k_shot, c), lambda i: (i, 0, 0, 0)),
                  pl.BlockSpec((1, q, c), lambda i: (i, 0, 0))],
        out_specs=pl.BlockSpec((1, q, n_way), lambda i: (i, 0, 0)),
        compiler_params=pltpu.CompilerParams(dimension_semantics=("parallel",)),
    )(sup_f, qry_f)


# ----------------------------------------------------------------------------
# Model
# ----------------------------------------------------------------------------
class PretrainModelPallas:
    """Pallas port of PretrainModel (train -> forward_train, eval -> forward_proto).

    make_encoder(cfg) is an external factory; here it is a deterministic
    2-layer conv encoder (conv3x3 + ReLU + 2x2 avgpool) x2 producing
    out_channels feature maps of spatial size img_size // 4, and AvgPool2d(fea)
    is treated as the global pool over that map.
    # TODO(synk): swap in the real cfg-defined backbone and the
    # forward_dn4 / InnerproductSimilarity path (not reached by forward()).
    """

    def __init__(self, key, *, n_way=5, k_shot=1, in_channels=4,
                 hidden_channels=16, out_channels=32, pretrain_num_class=10,
                 img_size=16):
        self.n_way = n_way
        self.k_shot = k_shot
        self.in_channels = in_channels
        self.hidden = hidden_channels
        self.out_channels = out_channels
        self.num_class = pretrain_num_class
        self.img_size = img_size
        self.mel_gamma = 1.0
        self.eps_ = 1e-06
        self.training = True

        k1, k2, k3, k4, k5, k6 = jax.random.split(key, 6)

        def conv_init(k, cin, cout):
            scale = (2.0 / (9 * cin)) ** 0.5
            return jax.random.normal(k, (3, 3, cin, cout), jnp.float32) * scale

        conv1_w = conv_init(k1, in_channels, hidden_channels)
        conv1_b = jax.random.normal(k2, (hidden_channels,), jnp.float32) * 0.01
        conv2_w = conv_init(k3, hidden_channels, out_channels)
        conv2_b = jax.random.normal(k4, (out_channels,), jnp.float32) * 0.01
        fc_scale = (1.0 / out_channels) ** 0.5
        fc_w = jax.random.normal(k5, (out_channels, pretrain_num_class),
                                 jnp.float32) * fc_scale
        fc_b = jax.random.normal(k6, (pretrain_num_class,), jnp.float32) * fc_scale

        # conv1: 9 taps fused into one (9*Cin, Ch) contraction (tap-major rows).
        self.w1_mat = conv1_w.reshape(9 * in_channels, hidden_channels).astype(jnp.bfloat16)
        self.b1 = conv1_b.reshape(1, hidden_channels).astype(jnp.float32)
        # conv2: per-tap weights, out channels zero-padded to 128 (lane-dense).
        w2 = conv2_w.reshape(9, hidden_channels, out_channels)
        self.w2_taps = jnp.pad(w2, ((0, 0), (0, 0), (0, LANE - out_channels))
                               ).astype(jnp.bfloat16)
        self.b2 = jnp.pad(conv2_b, (0, LANE - out_channels)).reshape(1, LANE
                          ).astype(jnp.float32)
        # classifier, zero-padded to 128x128 (padding is exact: extra rows/cols are 0).
        self.fc_w = jnp.pad(fc_w, ((0, LANE - out_channels),
                                   (0, LANE - pretrain_num_class))).astype(jnp.bfloat16)
        self.fc_b = jnp.pad(fc_b, (0, LANE - pretrain_num_class)).reshape(1, LANE
                            ).astype(jnp.float32)
        # fused pool + dx-shift + dy-pad matrix (layer-1 spatial -> layer-2 taps).
        self.pshift = _make_pool_shift_mats(img_size, img_size)

    # ---- host-side XLA prep: NCHW -> (N, HW, 9*Cin) bf16 3x3 patches --------
    # TODO(synk): fold this layout prep into the kernel's first contraction.
    def _make_patches(self, x):
        n, c, h, w = x.shape
        xp = jnp.pad(x.astype(jnp.float32), ((0, 0), (0, 0), (1, 1), (1, 1)))
        taps = [xp[:, :, dy:dy + h, dx:dx + w] for dy in range(3) for dx in range(3)]
        p = jnp.stack(taps, axis=1)                    # (n, 9, c, h, w)
        p = jnp.transpose(p, (0, 3, 4, 1, 2))          # (n, h, w, 9, c)
        return p.reshape(n, h * w, 9 * c).astype(jnp.bfloat16)

    # ---- one fused pallas_call for the whole forward pass --------------------
    def _run_fused(self, x, y):
        n = x.shape[0]
        h = self.img_size
        hw1 = h * h
        k1 = 9 * self.in_channels
        ph = h // 2
        rows = 3 * (ph + 2) * ph
        g = 2 if (n % 2 == 0 and n > 1) else 1         # one fat block per TensorCore
        nc = n // g

        patches = self._make_patches(x)
        y_i32 = y.astype(jnp.int32).reshape(n)

        kern = functools.partial(_fused_fwd_kernel, num_class=self.num_class,
                                 ph=ph, pw=ph)
        feats, logits, loss = pl.pallas_call(
            kern,
            out_shape=(jax.ShapeDtypeStruct((g, nc, LANE), jnp.float32),
                       jax.ShapeDtypeStruct((g, nc, LANE), jnp.float32),
                       jax.ShapeDtypeStruct((g, nc, 1), jnp.float32)),
            grid_spec=pltpu.PrefetchScalarGridSpec(
                num_scalar_prefetch=1,                 # labels land in SMEM
                grid=(g,),
                in_specs=[
                    pl.BlockSpec((nc, hw1, k1), lambda i, y_: (i, 0, 0)),
                    pl.BlockSpec((k1, self.hidden), lambda i, y_: (0, 0)),
                    pl.BlockSpec((1, self.hidden), lambda i, y_: (0, 0)),
                    pl.BlockSpec((rows, hw1), lambda i, y_: (0, 0)),
                    pl.BlockSpec((9, self.hidden, LANE), lambda i, y_: (0, 0, 0)),
                    pl.BlockSpec((1, LANE), lambda i, y_: (0, 0)),
                    pl.BlockSpec((LANE, LANE), lambda i, y_: (0, 0)),
                    pl.BlockSpec((1, LANE), lambda i, y_: (0, 0)),
                ],
                out_specs=(
                    pl.BlockSpec((1, nc, LANE), lambda i, y_: (i, 0, 0)),
                    pl.BlockSpec((1, nc, LANE), lambda i, y_: (i, 0, 0)),
                    pl.BlockSpec((1, nc, 1), lambda i, y_: (i, 0, 0)),
                ),
            ),
            compiler_params=pltpu.CompilerParams(
                dimension_semantics=("parallel",)),
        )(y_i32, patches, self.w1_mat, self.b1, self.pshift,
          self.w2_taps, self.b2, self.fc_w, self.fc_b)
        return (feats.reshape(n, LANE), logits.reshape(n, LANE), loss.reshape(n))

    # ---- module-equivalent entry points --------------------------------------
    def forward_train(self, x, y):
        _, logits, loss_per_ex = self._run_fused(x, y)
        if self.training:
            return {'pretrain_loss': jnp.mean(loss_per_ex)}
        predict = jnp.argmax(logits, axis=1)
        return (predict == y.astype(predict.dtype)).astype(jnp.int32)   # device-side

    def forward_proto(self, support_x, support_y, query_x, query_y):
        b, q = query_x.shape[:2]
        sup_flat = support_x.reshape((-1,) + support_x.shape[-3:])
        qry_flat = query_x.reshape((-1,) + query_x.shape[-3:])
        ns = sup_flat.shape[0]
        allx = jnp.concatenate([sup_flat, qry_flat], axis=0)            # one encoder call
        dummy_y = jnp.zeros((allx.shape[0],), jnp.int32)
        feats, _, _ = self._run_fused(allx, dummy_y)
        sup_f = feats[:ns].reshape(b, self.n_way, self.k_shot, LANE)
        qry_f = feats[ns:].reshape(b, q, LANE)
        sims = proto_similarity(sup_f, qry_f).reshape(b * q, self.n_way)
        predict = jnp.argmax(sims, axis=1)
        qy = query_y.reshape(b * q)
        return (predict == qy.astype(predict.dtype)).astype(jnp.int32)  # device-side

    def forward(self, x=None, y=None, support_x=None, support_y=None,
                query_x=None, query_y=None):
        if self.training:
            return self.forward_train(x, y)
        return self.forward_proto(support_x, support_y, query_x, query_y)


# ----------------------------------------------------------------------------
# Demo
# ----------------------------------------------------------------------------
if __name__ == "__main__":
    key = jax.random.PRNGKey(0)
    kp, kx, ky, ks, kq, kqy = jax.random.split(key, 6)
    model = PretrainModelPallas(kp)

    # training-mode forward (forward_train): x is NCHW like the PyTorch module
    x = jax.random.normal(kx, (8, 4, 16, 16), jnp.float32)
    y = jax.random.randint(ky, (8,), 0, model.num_class)
    train_out = model.forward(x=x, y=y)
    loss = jax.block_until_ready(train_out['pretrain_loss'])
    assert bool(jnp.isfinite(loss))

    model.training = False

    # forward_train eval branch (logits head), device-side correctness bits
    bits = jax.block_until_ready(model.forward_train(x, y))
    assert bits.shape == (8,) and bool(jnp.all((bits == 0) | (bits == 1)))

    # eval-mode forward (forward_proto): 5-way 1-shot episode, batch=1, 6 queries
    support_x = jax.random.normal(ks, (1, 5, 4, 16, 16), jnp.float32)
    support_y = jnp.arange(5, dtype=jnp.int32).reshape(1, 5)
    query_x = jax.random.normal(kq, (1, 6, 4, 16, 16), jnp.float32)
    query_y = jax.random.randint(kqy, (1, 6), 0, 5)
    rewards = jax.block_until_ready(
        model.forward(support_x=support_x, support_y=support_y,
                      query_x=query_x, query_y=query_y))
    assert rewards.shape == (6,) and bool(jnp.all((rewards == 0) | (rewards == 1)))

    print("KERNEL_OK")
</pallas_src>

<mosaic_0001>
module attributes {stable_mosaic.version = 11 : i64} {
  func.func @_fused_fwd_kernel(%arg0: i32, %arg1: memref<8xi32, #tpu.memory_space<smem>>, %arg2: memref<4x256x36xbf16, #tpu.memory_space<vmem>>, %arg3: memref<36x16xbf16, #tpu.memory_space<vmem>>, %arg4: memref<1x16xf32, #tpu.memory_space<vmem>>, %arg5: memref<240x256xbf16, #tpu.memory_space<vmem>>, %arg6: memref<9x16x128xbf16, #tpu.memory_space<vmem>>, %arg7: memref<1x128xf32, #tpu.memory_space<vmem>>, %arg8: memref<128x128xbf16, #tpu.memory_space<vmem>>, %arg9: memref<1x128xf32, #tpu.memory_space<vmem>>, %arg10: memref<1x4x128xf32, #tpu.memory_space<vmem>>, %arg11: memref<1x4x128xf32, #tpu.memory_space<vmem>>, %arg12: memref<1x4x1xf32, #tpu.memory_space<vmem>>) attributes {dimension_semantics = [#tpu.dimension_semantics<parallel>], iteration_bounds = array<i64: 2>, scalar_prefetch = 1 : i64, scratch_operands = 0 : i64, tpu.core_type = #tpu.core_type<tc>, window_params = [{transform_indices = @transform_0, window_bounds = array<i64: 4, 256, 36>}, {pipeline_mode = #tpu.pipeline_mode<synchronous>, transform_indices = @transform_1, window_bounds = array<i64: 36, 16>}, {pipeline_mode = #tpu.pipeline_mode<synchronous>, transform_indices = @transform_2, window_bounds = array<i64: 1, 16>}, {pipeline_mode = #tpu.pipeline_mode<synchronous>, transform_indices = @transform_3, window_bounds = array<i64: 240, 256>}, {pipeline_mode = #tpu.pipeline_mode<synchronous>, transform_indices = @transform_4, window_bounds = array<i64: 9, 16, 128>}, {pipeline_mode = #tpu.pipeline_mode<synchronous>, transform_indices = @transform_5, window_bounds = array<i64: 1, 128>}, {pipeline_mode = #tpu.pipeline_mode<synchronous>, transform_indices = @transform_6, window_bounds = array<i64: 128, 128>}, {pipeline_mode = #tpu.pipeline_mode<synchronous>, transform_indices = @transform_7, window_bounds = array<i64: 1, 128>}, {transform_indices = @transform_8, window_bounds = array<i64: 1, 4, 128>}, {transform_indices = @transform_9, window_bounds = array<i64: 1, 4, 128>}, {transform_indices = @transform_10, window_bounds = array<i64: 1, 4, 1>}]} {
    %c0 = arith.constant 0 : index
    %c0_0 = arith.constant 0 : index
    %c0_1 = arith.constant 0 : index
    %0 = vector.load %arg2[%c0, %c0_0, %c0_1] : memref<4x256x36xbf16, #tpu.memory_space<vmem>>, vector<4x256x36xbf16>
    %1 = vector.shape_cast %0 : vector<4x256x36xbf16> to vector<1024x36xbf16>
    %c0_2 = arith.constant 0 : index
    %c0_3 = arith.constant 0 : index
    %2 = vector.load %arg3[%c0_2, %c0_3] : memref<36x16xbf16, #tpu.memory_space<vmem>>, vector<36x16xbf16>
    %cst = arith.constant dense<0.000000e+00> : vector<1024x16xf32>
    %3 = tpu.matmul %1, %2, %cst {dimension_numbers = #tpu.dot_dimension_numbers<[1], [0], [0], [1], [0, 0, 1, 1], [], []>} : vector<1024x36xbf16>, vector<36x16xbf16>, vector<1024x16xf32> -> vector<1024x16xf32>
    %c0_4 = arith.constant 0 : index
    %c0_5 = arith.constant 0 : index
    %4 = vector.load %arg4[%c0_4, %c0_5] : memref<1x16xf32, #tpu.memory_space<vmem>>, vector<1x16xf32>
    %5 = vector.broadcast %4 : vector<1x16xf32> to vector<1024x16xf32>
    %6 = arith.addf %3, %5 : vector<1024x16xf32>
    %cst_6 = arith.constant 0.000000e+00 : f32
    %7 = vector.broadcast %cst_6 : f32 to vector<1024x16xf32>
    %8 = arith.maximumf %6, %7 : vector<1024x16xf32>
    %9 = arith.truncf %8 : vector<1024x16xf32> to vector<1024x16xbf16>
    %10 = vector.shape_cast %9 : vector<1024x16xbf16> to vector<4x256x16xbf16>
    %c0_7 = arith.constant 0 : index
    %c0_8 = arith.constant 0 : index
    %11 = vector.load %arg5[%c0_7, %c0_8] : memref<240x256xbf16, #tpu.memory_space<vmem>>, vector<240x256xbf16>
    %12 = vector.extract_strided_slice %10 {offsets = [0, 0, 0], sizes = [1, 256, 16], strides = [1, 1, 1]} : vector<4x256x16xbf16> to vector<1x256x16xbf16>
    %13 = vector.shape_cast %12 : vector<1x256x16xbf16> to vector<256x16xbf16>
    %cst_9 = arith.constant dense<0.000000e+00> : vector<240x16xf32>
    %14 = tpu.matmul %11, %13, %cst_9 {dimension_numbers = #tpu.dot_dimension_numbers<[1], [0], [0], [1], [0, 0, 1, 1], [], []>} : vector<240x256xbf16>, vector<256x16xbf16>, vector<240x16xf32> -> vector<240x16xf32>
    %15 = vector.extract_strided_slice %10 {offsets = [1, 0, 0], sizes = [1, 256, 16], strides = [1, 1, 1]} : vector<4x256x16xbf16> to vector<1x256x16xbf16>
    %16 = vector.shape_cast %15 : vector<1x256x16xbf16> to vector<256x16xbf16>
    %cst_10 = arith.constant dense<0.000000e+00> : vector<240x16xf32>
    %17 = tpu.matmul %11, %16, %cst_10 {dimension_numbers = #tpu.dot_dimension_numbers<[1], [0], [0], [1], [0, 0, 1, 1], [], []>} : vector<240x256xbf16>, vector<256x16xbf16>, vector<240x16xf32> -> vector<240x16xf32>
    %18 = vector.extract_strided_slice %10 {offsets = [2, 0, 0], sizes = [1, 256, 16], strides = [1, 1, 1]} : vector<4x256x16xbf16> to vector<1x256x16xbf16>
    %19 = vector.shape_cast %18 : vector<1x256x16xbf16> to vector<256x16xbf16>
    %cst_11 = arith.constant dense<0.000000e+00> : vector<240x16xf32>
    %20 = tpu.matmul %11, %19, %cst_11 {dimension_numbers = #tpu.dot_dimension_numbers<[1], [0], [0], [1], [0, 0, 1, 1], [], []>} : vector<240x256xbf16>, vector<256x16xbf16>, vector<240x16xf32> -> vector<240x16xf32>
    %21 = vector.extract_strided_slice %10 {offsets = [3, 0, 0], sizes = [1, 256, 16], strides = [1, 1, 1]} : vector<4x256x16xbf16> to vector<1x256x16xbf16>
    %22 = vector.shape_cast %21 : vector<1x256x16xbf16> to vector<256x16xbf16>
    %cst_12 = arith.constant dense<0.000000e+00> : vector<240x16xf32>
    %23 = tpu.matmul %11, %22, %cst_12 {dimension_numbers = #tpu.dot_dimension_numbers<[1], [0], [0], [1], [0, 0, 1, 1], [], []>} : vector<240x256xbf16>, vector<256x16xbf16>, vector<240x16xf32> -> vector<240x16xf32>
    %24 = vector.shape_cast %14 : vector<240x16xf32> to vector<1x240x16xf32>
    %25 = vector.shape_cast %17 : vector<240x16xf32> to vector<1x240x16xf32>
    %26 = vector.shape_cast %20 : vector<240x16xf32> to vector<1x240x16xf32>
    %27 = vector.shape_cast %23 : vector<240x16xf32> to vector<1x240x16xf32>
    %28 = tpu.concatenate %24, %25, %26, %27 in 0 : vector<1x240x16xf32>, vector<1x240x16xf32>, vector<1x240x16xf32>, vector<1x240x16xf32> -> vector<4x240x16xf32>
    %cst_13 = arith.constant 0.000000e+00 : f32
    %29 = vector.broadcast %cst_13 : f32 to vector<256x128xf32>
    %30 = vector.extract_strided_slice %28 {offsets = [0, 0, 0], sizes = [4, 64, 16], strides = [1, 1, 1]} : vector<4x240x16xf32> to vector<4x64x16xf32>
    %31 = vector.shape_cast %30 : vector<4x64x16xf32> to vector<256x16xf32>
    %32 = arith.truncf %31 : vector<256x16xf32> to vector<256x16xbf16>
    %c0_14 = arith.constant 0 : index
    %c0_15 = arith.constant 0 : index
    %c0_16 = arith.constant 0 : index
    %33 = vector.load %arg6[%c0_14, %c0_15, %c0_16] : memref<9x16x128xbf16, #tpu.memory_space<vmem>>, vector<1x16x128xbf16>
    %34 = vector.shape_cast %33 : vector<1x16x128xbf16> to vector<16x128xbf16>
    %cst_17 = arith.constant dense<0.000000e+00> : vector<256x128xf32>
    %35 = tpu.matmul %32, %34, %cst_17 {dimension_numbers = #tpu.dot_dimension_numbers<[1], [0], [0], [1], [0, 0, 1, 1], [], []>} : vector<256x16xbf16>, vector<16x128xbf16>, vector<256x128xf32> -> vector<256x128xf32>
    %36 = arith.addf %29, %35 : vector<256x128xf32>
    %37 = vector.extract_strided_slice %28 {offsets = [0, 80, 0], sizes = [4, 64, 16], strides = [1, 1, 1]} : vector<4x240x16xf32> to vector<4x64x16xf32>
    %38 = vector.shape_cast %37 : vector<4x64x16xf32> to vector<256x16xf32>
    %39 = arith.truncf %38 : vector<256x16xf32> to vector<256x16xbf16>
    %c1 = arith.constant 1 : index
    %c0_18 = arith.constant 0 : index
    %c0_19 = arith.constant 0 : index
    %40 = vector.load %arg6[%c1, %c0_18, %c0_19] : memref<9x16x128xbf16, #tpu.memory_space<vmem>>, vector<1x16x128xbf16>
    %41 = vector.shape_cast %40 : vector<1x16x128xbf16> to vector<16x128xbf16>
    %cst_20 = arith.constant dense<0.000000e+00> : vector<256x128xf32>
    %42 = tpu.matmul %39, %41, %cst_20 {dimension_numbers = #tpu.dot_dimension_numbers<[1], [0], [0], [1], [0, 0, 1, 1], [], []>} : vector<256x16xbf16>, vector<16x128xbf16>, vector<256x128xf32> -> vector<256x128xf32>
    %43 = arith.addf %36, %42 : vector<256x128xf32>
    %44 = vector.extract_strided_slice %28 {offsets = [0, 160, 0], sizes = [4, 64, 16], strides = [1, 1, 1]} : vector<4x240x16xf32> to vector<4x64x16xf32>
    %45 = vector.shape_cast %44 : vector<4x64x16xf32> to vector<256x16xf32>
    %46 = arith.truncf %45 : vector<256x16xf32> to vector<256x16xbf16>
    %c2 = arith.constant 2 : index
    %c0_21 = arith.constant 0 : index
    %c0_22 = arith.constant 0 : index
    %47 = vector.load %arg6[%c2, %c0_21, %c0_22] : memref<9x16x128xbf16, #tpu.memory_space<vmem>>, vector<1x16x128xbf16>
    %48 = vector.shape_cast %47 : vector<1x16x128xbf16> to vector<16x128xbf16>
    %cst_23 = arith.constant dense<0.000000e+00> : vector<256x128xf32>
    %49 = tpu.matmul %46, %48, %cst_23 {dimension_numbers = #tpu.dot_dimension_numbers<[1], [0], [0], [1], [0, 0, 1, 1], [], []>} : vector<256x16xbf16>, vector<16x128xbf16>, vector<256x128xf32> -> vector<256x128xf32>
    %50 = arith.addf %43, %49 : vector<256x128xf32>
    %51 = vector.extract_strided_slice %28 {offsets = [0, 8, 0], sizes = [4, 64, 16], strides = [1, 1, 1]} : vector<4x240x16xf32> to vector<4x64x16xf32>
    %52 = vector.shape_cast %51 : vector<4x64x16xf32> to vector<256x16xf32>
    %53 = arith.truncf %52 : vector<256x16xf32> to vector<256x16xbf16>
    %c3 = arith.constant 3 : index
    %c0_24 = arith.constant 0 : index
    %c0_25 = arith.constant 0 : index
    %54 = vector.load %arg6[%c3, %c0_24, %c0_25] : memref<9x16x128xbf16, #tpu.memory_space<vmem>>, vector<1x16x128xbf16>
    %55 = vector.shape_cast %54 : vector<1x16x128xbf16> to vector<16x128xbf16>
    %cst_26 = arith.constant dense<0.000000e+00> : vector<256x128xf32>
    %56 = tpu.matmul %53, %55, %cst_26 {dimension_numbers = #tpu.dot_dimension_numbers<[1], [0], [0], [1], [0, 0, 1, 1], [], []>} : vector<256x16xbf16>, vector<16x128xbf16>, vector<256x128xf32> -> vector<256x128xf32>
    %57 = arith.addf %50, %56 : vector<256x128xf32>
    %58 = vector.extract_strided_slice %28 {offsets = [0, 88, 0], sizes = [4, 64, 16], strides = [1, 1, 1]} : vector<4x240x16xf32> to vector<4x64x16xf32>
    %59 = vector.shape_cast %58 : vector<4x64x16xf32> to vector<256x16xf32>
    %60 = arith.truncf %59 : vector<256x16xf32> to vector<256x16xbf16>
    %c4 = arith.constant 4 : index
    %c0_27 = arith.constant 0 : index
    %c0_28 = arith.constant 0 : index
    %61 = vector.load %arg6[%c4, %c0_27, %c0_28] : memref<9x16x128xbf16, #tpu.memory_space<vmem>>, vector<1x16x128xbf16>
    %62 = vector.shape_cast %61 : vector<1x16x128xbf16> to vector<16x128xbf16>
    %cst_29 = arith.constant dense<0.000000e+00> : vector<256x128xf32>
    %63 = tpu.matmul %60, %62, %cst_29 {dimension_numbers = #tpu.dot_dimension_numbers<[1], [0], [0], [1], [0, 0, 1, 1], [], []>} : vector<256x16xbf16>, vector<16x128xbf16>, vector<256x128xf32> -> vector<256x128xf32>
    %64 = arith.addf %57, %63 : vector<256x128xf32>
    %65 = vector.extract_strided_slice %28 {offsets = [0, 168, 0], sizes = [4, 64, 16], strides = [1, 1, 1]} : vector<4x240x16xf32> to vector<4x64x16xf32>
    %66 = vector.shape_cast %65 : vector<4x64x16xf32> to vector<256x16xf32>
    %67 = arith.truncf %66 : vector<256x16xf32> to vector<256x16xbf16>
    %c5 = arith.constant 5 : index
    %c0_30 = arith.constant 0 : index
    %c0_31 = arith.constant 0 : index
    %68 = vector.load %arg6[%c5, %c0_30, %c0_31] : memref<9x16x128xbf16, #tpu.memory_space<vmem>>, vector<1x16x128xbf16>
    %69 = vector.shape_cast %68 : vector<1x16x128xbf16> to vector<16x128xbf16>
    %cst_32 = arith.constant dense<0.000000e+00> : vector<256x128xf32>
    %70 = tpu.matmul %67, %69, %cst_32 {dimension_numbers = #tpu.dot_dimension_numbers<[1], [0], [0], [1], [0, 0, 1, 1], [], []>} : vector<256x16xbf16>, vector<16x128xbf16>, vector<256x128xf32> -> vector<256x128xf32>
    %71 = arith.addf %64, %70 : vector<256x128xf32>
    %72 = vector.extract_strided_slice %28 {offsets = [0, 16, 0], sizes = [4, 64, 16], strides = [1, 1, 1]} : vector<4x240x16xf32> to vector<4x64x16xf32>
    %73 = vector.shape_cast %72 : vector<4x64x16xf32> to vector<256x16xf32>
    %74 = arith.truncf %73 : vector<256x16xf32> to vector<256x16xbf16>
    %c6 = arith.constant 6 : index
    %c0_33 = arith.constant 0 : index
    %c0_34 = arith.constant 0 : index
    %75 = vector.load %arg6[%c6, %c0_33, %c0_34] : memref<9x16x128xbf16, #tpu.memory_space<vmem>>, vector<1x16x128xbf16>
    %76 = vector.shape_cast %75 : vector<1x16x128xbf16> to vector<16x128xbf16>
    %cst_35 = arith.constant dense<0.000000e+00> : vector<256x128xf32>
    %77 = tpu.matmul %74, %76, %cst_35 {dimension_numbers = #tpu.dot_dimension_numbers<[1], [0], [0], [1], [0, 0, 1, 1], [], []>} : vector<256x16xbf16>, vector<16x128xbf16>, vector<256x128xf32> -> vector<256x128xf32>
    %78 = arith.addf %71, %77 : vector<256x128xf32>
    %79 = vector.extract_strided_slice %28 {offsets = [0, 96, 0], sizes = [4, 64, 16], strides = [1, 1, 1]} : vector<4x240x16xf32> to vector<4x64x16xf32>
    %80 = vector.shape_cast %79 : vector<4x64x16xf32> to vector<256x16xf32>
    %81 = arith.truncf %80 : vector<256x16xf32> to vector<256x16xbf16>
    %c7 = arith.constant 7 : index
    %c0_36 = arith.constant 0 : index
    %c0_37 = arith.constant 0 : index
    %82 = vector.load %arg6[%c7, %c0_36, %c0_37] : memref<9x16x128xbf16, #tpu.memory_space<vmem>>, vector<1x16x128xbf16>
    %83 = vector.shape_cast %82 : vector<1x16x128xbf16> to vector<16x128xbf16>
    %cst_38 = arith.constant dense<0.000000e+00> : vector<256x128xf32>
    %84 = tpu.matmul %81, %83, %cst_38 {dimension_numbers = #tpu.dot_dimension_numbers<[1], [0], [0], [1], [0, 0, 1, 1], [], []>} : vector<256x16xbf16>, vector<16x128xbf16>, vector<256x128xf32> -> vector<256x128xf32>
    %85 = arith.addf %78, %84 : vector<256x128xf32>
    %86 = vector.extract_strided_slice %28 {offsets = [0, 176, 0], sizes = [4, 64, 16], strides = [1, 1, 1]} : vector<4x240x16xf32> to vector<4x64x16xf32>
    %87 = vector.shape_cast %86 : vector<4x64x16xf32> to vector<256x16xf32>
    %88 = arith.truncf %87 : vector<256x16xf32> to vector<256x16xbf16>
    %c8 = arith.constant 8 : index
    %c0_39 = arith.constant 0 : index
    %c0_40 = arith.constant 0 : index
    %89 = vector.load %arg6[%c8, %c0_39, %c0_40] : memref<9x16x128xbf16, #tpu.memory_space<vmem>>, vector<1x16x128xbf16>
    %90 = vector.shape_cast %89 : vector<1x16x128xbf16> to vector<16x128xbf16>
    %cst_41 = arith.constant dense<0.000000e+00> : vector<256x128xf32>
    %91 = tpu.matmul %88, %90, %cst_41 {dimension_numbers = #tpu.dot_dimension_numbers<[1], [0], [0], [1], [0, 0, 1, 1], [], []>} : vector<256x16xbf16>, vector<16x128xbf16>, vector<256x128xf32> -> vector<256x128xf32>
    %92 = arith.addf %85, %91 : vector<256x128xf32>
    %c0_42 = arith.constant 0 : index
    %c0_43 = arith.constant 0 : index
    %93 = vector.load %arg7[%c0_42, %c0_43] : memref<1x128xf32, #tpu.memory_space<vmem>>, vector<1x128xf32>
    %94 = vector.broadcast %93 : vector<1x128xf32> to vector<256x128xf32>
    %95 = arith.addf %92, %94 : vector<256x128xf32>
    %cst_44 = arith.constant 0.000000e+00 : f32
    %96 = vector.broadcast %cst_44 : f32 to vector<256x128xf32>
    %97 = arith.maximumf %95, %96 : vector<256x128xf32>
    %98 = vector.shape_cast %97 : vector<256x128xf32> to vector<4x64x128xf32>
    %cst_45 = arith.constant dense<0.000000e+00> : vector<4x128xf32>
    %99 = vector.multi_reduction <add>, %98, %cst_45 [1] : vector<4x64x128xf32> to vector<4x128xf32>
    %cst_46 = arith.constant 6.400000e+01 : f32
    %100 = vector.broadcast %cst_46 : f32 to vector<4x128xf32>
    %101 = arith.divf %99, %100 : vector<4x128xf32>
    %c0_47 = arith.constant 0 : index
    %c0_48 = arith.constant 0 : index
    %c0_49 = arith.constant 0 : index
    %102 = vector.load %arg10[%c0_47, %c0_48, %c0_49] : memref<1x4x128xf32, #tpu.memory_space<vmem>>, vector<1x4x128xf32>
    %103 = vector.shape_cast %102 : vector<1x4x128xf32> to vector<4x128xf32>
    %104 = vector.shape_cast %101 : vector<4x128xf32> to vector<1x4x128xf32>
    tpu.vector_store %arg10[%c0_47, %c0_48, %c0_49], %104 {strides = array<i32>} : memref<1x4x128xf32, #tpu.memory_space<vmem>>, vector<1x4x128xf32>,
    %105 = arith.truncf %101 : vector<4x128xf32> to vector<4x128xbf16>
    %c0_50 = arith.constant 0 : index
    %c0_51 = arith.constant 0 : index
    %106 = vector.load %arg8[%c0_50, %c0_51] : memref<128x128xbf16, #tpu.memory_space<vmem>>, vector<128x128xbf16>
    %cst_52 = arith.constant dense<0.000000e+00> : vector<4x128xf32>
    %107 = tpu.matmul %105, %106, %cst_52 {dimension_numbers = #tpu.dot_dimension_numbers<[1], [0], [0], [1], [0, 0, 1, 1], [], []>} : vector<4x128xbf16>, vector<128x128xbf16>, vector<4x128xf32> -> vector<4x128xf32>
    %c0_53 = arith.constant 0 : index
    %c0_54 = arith.constant 0 : index
    %108 = vector.load %arg9[%c0_53, %c0_54] : memref<1x128xf32, #tpu.memory_space<vmem>>, vector<1x128xf32>
    %109 = vector.broadcast %108 : vector<1x128xf32> to vector<4x128xf32>
    %110 = arith.addf %107, %109 : vector<4x128xf32>
    %111 = tpu.iota {dimensions = array<i32: 1>} : vector<4x128xi32>
    %c10_i32 = arith.constant 10 : i32
    %112 = vector.broadcast %c10_i32 : i32 to vector<4x128xi32>
    %113 = arith.cmpi slt, %111, %112 : vector<4x128xi32>
    %cst_55 = arith.constant -1.000000e+30 : f32
    %114 = vector.broadcast %cst_55 : f32 to vector<4x128xf32>
    %115 = arith.select %113, %110, %114 : vector<4x128xi1>, vector<4x128xf32>
    %c0_56 = arith.constant 0 : index
    %c0_57 = arith.constant 0 : index
    %c0_58 = arith.constant 0 : index
    %116 = vector.load %arg11[%c0_56, %c0_57, %c0_58] : memref<1x4x128xf32, #tpu.memory_space<vmem>>, vector<1x4x128xf32>
    %117 = vector.shape_cast %116 : vector<1x4x128xf32> to vector<4x128xf32>
    %118 = vector.shape_cast %115 : vector<4x128xf32> to vector<1x4x128xf32>
    tpu.vector_store %arg11[%c0_56, %c0_57, %c0_58], %118 {strides = array<i32>} : memref<1x4x128xf32, #tpu.memory_space<vmem>>, vector<1x4x128xf32>,
    %c4_i32 = arith.constant 4 : i32
    %119 = arith.muli %arg0, %c4_i32 : i32
    %c0_i32 = arith.constant 0 : i32
    %120 = arith.addi %119, %c0_i32 : i32
    %121 = arith.index_cast %120 : i32 to index
    %122 = memref.load %arg1[%121] : memref<8xi32, #tpu.memory_space<smem>>
    %123 = vector.broadcast %122 : i32 to vector<1x1xi32>
    %c1_i32 = arith.constant 1 : i32
    %124 = arith.addi %119, %c1_i32 : i32
    %125 = arith.index_cast %124 : i32 to index
    %126 = memref.load %arg1[%125] : memref<8xi32, #tpu.memory_space<smem>>
    %127 = vector.broadcast %126 : i32 to vector<1x1xi32>
    %c2_i32 = arith.constant 2 : i32
    %128 = arith.addi %119, %c2_i32 : i32
    %129 = arith.index_cast %128 : i32 to index
    %130 = memref.load %arg1[%129] : memref<8xi32, #tpu.memory_space<smem>>
    %131 = vector.broadcast %130 : i32 to vector<1x1xi32>
    %c3_i32 = arith.constant 3 : i32
    %132 = arith.addi %119, %c3_i32 : i32
    %133 = arith.index_cast %132 : i32 to index
    %134 = memref.load %arg1[%133] : memref<8xi32, #tpu.memory_space<smem>>
    %135 = vector.broadcast %134 : i32 to vector<1x1xi32>
    %136 = tpu.concatenate %123, %127, %131, %135 in 0 : vector<1x1xi32>, vector<1x1xi32>, vector<1x1xi32>, vector<1x1xi32> -> vector<4x1xi32>
    %cst_59 = arith.constant dense<0xFF800000> : vector<4xf32>
    %137 = vector.multi_reduction <maximumf>, %115, %cst_59 [1] : vector<4x128xf32> to vector<4xf32>
    %138 = vector.shape_cast %137 : vector<4xf32> to vector<4x1xf32>
    %139 = vector.broadcast %138 : vector<4x1xf32> to vector<4x128xf32>
    %140 = arith.subf %115, %139 : vector<4x128xf32>
    %141 = math.exp %140 : vector<4x128xf32>
    %cst_60 = arith.constant dense<0.000000e+00> : vector<4xf32>
    %142 = vector.multi_reduction <add>, %141, %cst_60 [1] : vector<4x128xf32> to vector<4xf32>
    %143 = vector.shape_cast %142 : vector<4xf32> to vector<4x1xf32>
    %144 = math.log %143 : vector<4x1xf32>
    %145 = arith.addf %138, %144 : vector<4x1xf32>
    %146 = vector.broadcast %136 : vector<4x1xi32> to vector<4x128xi32>
    %147 = arith.cmpi eq, %111, %146 : vector<4x128xi32>
    %cst_61 = arith.constant 0.000000e+00 : f32
    %148 = vector.broadcast %cst_61 : f32 to vector<4x128xf32>
    %149 = arith.select %147, %115, %148 : vector<4x128xi1>, vector<4x128xf32>
    %cst_62 = arith.constant dense<0.000000e+00> : vector<4xf32>
    %150 = vector.multi_reduction <add>, %149, %cst_62 [1] : vector<4x128xf32> to vector<4xf32>
    %151 = vector.shape_cast %150 : vector<4xf32> to vector<4x1xf32>
    %152 = arith.subf %145, %151 : vector<4x1xf32>
    %c0_63 = arith.constant 0 : index
    %c0_64 = arith.constant 0 : index
    %c0_65 = arith.constant 0 : index
    %153 = vector.load %arg12[%c0_63, %c0_64, %c0_65] : memref<1x4x1xf32, #tpu.memory_space<vmem>>, vector<1x4x1xf32>
    %154 = vector.shape_cast %153 : vector<1x4x1xf32> to vector<4x1xf32>
    %155 = vector.shape_cast %152 : vector<4x1xf32> to vector<1x4x1xf32>
    tpu.vector_store %arg12[%c0_63, %c0_64, %c0_65], %155 {strides = array<i32>} : memref<1x4x1xf32, #tpu.memory_space<vmem>>, vector<1x4x1xf32>,
    return
  }
  func.func @transform_0(%arg0: i32, %arg1: memref<8xi32, #tpu.memory_space<smem>>) -> (i32, i32, i32) {
    %c0_i32 = arith.constant 0 : i32
    %c0_i32_0 = arith.constant 0 : i32
    %c0_i32_1 = arith.constant 0 : i32
    return %arg0, %c0_i32, %c0_i32_0 : i32, i32, i32
  }
  func.func @transform_1(%arg0: i32, %arg1: memref<8xi32, #tpu.memory_space<smem>>) -> (i32, i32) {
    %c0_i32 = arith.constant 0 : i32
    %c0_i32_0 = arith.constant 0 : i32
    %c0_i32_1 = arith.constant 0 : i32
    return %c0_i32, %c0_i32_0 : i32, i32
  }
  func.func @transform_2(%arg0: i32, %arg1: memref<8xi32, #tpu.memory_space<smem>>) -> (i32, i32) {
    %c0_i32 = arith.constant 0 : i32
    %c0_i32_0 = arith.constant 0 : i32
    %c0_i32_1 = arith.constant 0 : i32
    return %c0_i32, %c0_i32_0 : i32, i32
  }
  func.func @transform_3(%arg0: i32, %arg1: memref<8xi32, #tpu.memory_space<smem>>) -> (i32, i32) {
    %c0_i32 = arith.constant 0 : i32
    %c0_i32_0 = arith.constant 0 : i32
    %c0_i32_1 = arith.constant 0 : i32
    return %c0_i32, %c0_i32_0 : i32, i32
  }
  func.func @transform_4(%arg0: i32, %arg1: memref<8xi32, #tpu.memory_space<smem>>) -> (i32, i32, i32) {
    %c0_i32 = arith.constant 0 : i32
    %c0_i32_0 = arith.constant 0 : i32
    %c0_i32_1 = arith.constant 0 : i32
    %c0_i32_2 = arith.constant 0 : i32
    return %c0_i32, %c0_i32_0, %c0_i32_1 : i32, i32, i32
  }
  func.func @transform_5(%arg0: i32, %arg1: memref<8xi32, #tpu.memory_space<smem>>) -> (i32, i32) {
    %c0_i32 = arith.constant 0 : i32
    %c0_i32_0 = arith.constant 0 : i32
    %c0_i32_1 = arith.constant 0 : i32
    return %c0_i32, %c0_i32_0 : i32, i32
  }
  func.func @transform_6(%arg0: i32, %arg1: memref<8xi32, #tpu.memory_space<smem>>) -> (i32, i32) {
    %c0_i32 = arith.constant 0 : i32
    %c0_i32_0 = arith.constant 0 : i32
    %c0_i32_1 = arith.constant 0 : i32
    return %c0_i32, %c0_i32_0 : i32, i32
  }
  func.func @transform_7(%arg0: i32, %arg1: memref<8xi32, #tpu.memory_space<smem>>) -> (i32, i32) {
    %c0_i32 = arith.constant 0 : i32
    %c0_i32_0 = arith.constant 0 : i32
    %c0_i32_1 = arith.constant 0 : i32
    return %c0_i32, %c0_i32_0 : i32, i32
  }
  func.func @transform_8(%arg0: i32, %arg1: memref<8xi32, #tpu.memory_space<smem>>) -> (i32, i32, i32) {
    %c0_i32 = arith.constant 0 : i32
    %c0_i32_0 = arith.constant 0 : i32
    %c0_i32_1 = arith.constant 0 : i32
    return %arg0, %c0_i32, %c0_i32_0 : i32, i32, i32
  }
  func.func @transform_9(%arg0: i32, %arg1: memref<8xi32, #tpu.memory_space<smem>>) -> (i32, i32, i32) {
    %c0_i32 = arith.constant 0 : i32
    %c0_i32_0 = arith.constant 0 : i32
    %c0_i32_1 = arith.constant 0 : i32
    return %arg0, %c0_i32, %c0_i32_0 : i32, i32, i32
  }
  func.func @transform_10(%arg0: i32, %arg1: memref<8xi32, #tpu.memory_space<smem>>) -> (i32, i32, i32) {
    %c0_i32 = arith.constant 0 : i32
    %c0_i32_0 = arith.constant 0 : i32
    %c0_i32_1 = arith.constant 0 : i32
    return %arg0, %c0_i32, %c0_i32_0 : i32, i32, i32
  }
}

</mosaic_0001>

<llo_original>
// kernel: tpu_custom_call.1
$region0: #{tpu_custom_call.1}
  #allocation0 [shape = 'u32[]', space=smem, size = 0x4, offset = 0x4, fixed_abs, tag = 'smem constant byte address 0x4 - core index']
  #allocation1 [shape = 'u32[144,128]{1,0:T(1,128)}', space=vmem, size = 0x12000, scoped, tag = 'internal scratch']
  #allocation2 [shape = 's32[1]{0}', space=sflag, size = 0x4, scoped, tag = 'scoped memory for tpu_custom_call.1']
  #allocation3 [shape = 'u8[512]{0}', space=smem, size = 0x200, scoped, tag = 'prefetched SMEM operand 0']
  %s0 = inlined_call_operand.vmem [shape: s32[8], index: 0, kind: input, shape index: {}]
  %s1 = inlined_call_operand.vmem [shape: bf16[8,256,36], index: 1, kind: input, shape index: {}]
  %s2 = inlined_call_operand.vmem [shape: bf16[36,16], index: 2, kind: input, shape index: {}]
  %s3 = inlined_call_operand.vmem [shape: f32[1,16], index: 3, kind: input, shape index: {}]
  %s4 = inlined_call_operand.vmem [shape: bf16[240,256], index: 4, kind: input, shape index: {}]
  %s5 = inlined_call_operand.vmem [shape: bf16[9,16,128], index: 5, kind: input, shape index: {}]
  %s6 = inlined_call_operand.vmem [shape: f32[1,128], index: 6, kind: input, shape index: {}]
  %s7 = inlined_call_operand.vmem [shape: bf16[128,128], index: 7, kind: input, shape index: {}]
  %s8 = inlined_call_operand.vmem [shape: f32[1,128], index: 8, kind: input, shape index: {}]
  %s9 = inlined_call_operand.hbm [shape: f32[2,4,128], index: 9, kind: output, shape index: {0}]
  %s10 = inlined_call_operand.hbm [shape: f32[2,4,128], index: 10, kind: output, shape index: {1}]
  %s11 = inlined_call_operand.vmem [shape: f32[2,4,1], index: 11, kind: output, shape index: {2}]
  %12 = xla_tuple %s9, %s10, %s11
  %s13 = sld [smem:[#allocation0]]
  $region81: #{tpu_custom_call.1} parent=0
    _
  %s15 = ssub.s32 1, %s13
  %s16 = scalar_select 0, %s15, %s13
  %s17 = sshll.u32 %s0, 4
  %s18 = int_to_ptr.vmem [resolvable:$true] %s17
  %20 = dma.vmem_to_smem %s18, 16, [#allocation3], [#allocation2]
  %21 = dma.done [#allocation2], 16
  %22 = sfence
  $region1: #{tpu_custom_call.1} parent=0
    #allocation4 [shape = 'u8[4096]{0}', space=vmem, size = 0x1000, scoped, tag = 'output window, operand 0']
    #allocation5 [shape = 's32[2]{0}', space=sflag, size = 0x8, scoped, tag = 'scoped memory for tpu_custom_call.1']
    #allocation6 [shape = 'u8[4096]{0}', space=vmem, size = 0x1000, scoped, tag = 'output window, operand 1']
    #allocation7 [shape = 's32[2]{0}', space=sflag, size = 0x8, scoped, tag = 'scoped memory for tpu_custom_call.1']
    %23 = vsyncpa [#allocation5], 0
    %s24 = scalar_lea.sflag [#allocation5], 1
    %25 = vsyncpa %s24, 0
    %26 = vsyncpa [#allocation7], 0
    %s27 = scalar_lea.sflag [#allocation7], 1
    %28 = vsyncpa %s27, 0
    loop: start=0, step=1, limit=4
    $region2: #{tpu_custom_call.1} parent=1 // loop_pre_header
      _
    $region3: #{tpu_custom_call.1} parent=1 // loop_header
      %s30 = sphi 0, %s34
      %p31 = scmp.ge.s32.totalorder %s30, 4
      %s40 = sphi 0, %s42
      %s43 = sphi 0, %s40
      %s44 = sphi 0, %s43
      %s60 = sphi 0, %s44
      %s64 = sphi 0, %s64
      %s66 = sphi 0, %s64
      %s67 = sphi 0, %s66
      %s81 = sphi 0, %s67
      %s85 = sphi 0, %s85
      %s87 = sphi 0, %s85
      %s88 = sphi 0, %s87
      %s102 = sphi 0, %s88
      %s106 = sphi 0, %s106
      %s108 = sphi 0, %s106
      %s109 = sphi 0, %s108
      %s123 = sphi 0, %s109
      %s127 = sphi 0, %s127
      %s129 = sphi 0, %s127
      %s130 = sphi 0, %s129
      %s144 = sphi 0, %s130
      %s148 = sphi 0, %s148
      %s150 = sphi 0, %s148
      %s151 = sphi 0, %s150
      %s165 = sphi 0, %s151
      %s169 = sphi 0, %s169
      %s171 = sphi 0, %s169
      %s172 = sphi 0, %s171
      %s186 = sphi 0, %s172
      %s190 = sphi 0, %s190
      %s192 = sphi 0, %s190
      %s193 = sphi 0, %s192
      %s207 = sphi 0, %s193
      %s213 = sphi 0, %s215
      %s216 = sphi 0, %s213
      %s217 = sphi 0, %s216
      %s233 = sphi 0, %s217
      %s239 = sphi 0, %s241
      %s242 = sphi 0, %s239
      %s243 = sphi 0, %s242
      %s259 = sphi 0, %s243
      %s265 = sphi 0, %s267
      %s268 = sphi 0, %s265
      %s269 = sphi 0, %s268
      %s285 = sphi 0, %s269
    $region4: #{tpu_custom_call.1} parent=1 // loop_header_branch
      %33 = sbr.rel (%p31) target = $region8
    $region5: #{tpu_custom_call.1} parent=1 // loop_body
      %s35 = ssub.s32 %s30, 1
      %s36 = ssub.s32 %s30, 2
      %s37 = sadd.s32 %s30, 1
      %s38 = ssub.s32 %s30, %s37
      %p39 = scmp.eq.s32.totalorder %s38, 0
      %s41 = sadd.s32 %s40, 1
      %s42 = scalar_select %p39, %s40, %s41
      %p45 = pneg %p39
      %p46 = scmp.eq.s32.totalorder %s30, 1
      %p47 = por %p45, %p46
      %p48 = scmp.ne.s32.totalorder %s40, %s43
      %p49 = scmp.eq.s32.totalorder %s30, 0
      %p50 = por %p48, %p49
      %p51 = scmp.ne.s32.totalorder %s40, %s43
      %p52 = scmp.eq.s32.totalorder %s35, 1
      %p53 = por %p51, %p52
      %p54 = scmp.ne.s32.totalorder %s43, %s44
      %p55 = scmp.eq.s32.totalorder %s35, 0
      %p56 = por %p54, %p55
      %p57 = scmp.ne.s32.totalorder %s43, %s44
      %p58 = scmp.eq.s32.totalorder %s36, 1
      %p59 = por %p57, %p58
      %p61 = scmp.ne.s32.totalorder %s44, %s60
      %p62 = scmp.eq.s32.totalorder %s36, 0
      %p63 = por %p61, %p62
      %s65 = sadd.s32 %s64, 1
      %p68 = scmp.eq.s32.totalorder %s30, 1
      %p69 = scmp.ne.s32.totalorder %s64, %s66
      %p70 = scmp.eq.s32.totalorder %s30, 0
      %p71 = por %p69, %p70
      %p72 = scmp.ne.s32.totalorder %s64, %s66
      %p73 = scmp.eq.s32.totalorder %s35, 1
      %p74 = por %p72, %p73
      %p75 = scmp.ne.s32.totalorder %s66, %s67
      %p76 = scmp.eq.s32.totalorder %s35, 0
      %p77 = por %p75, %p76
      %p78 = scmp.ne.s32.totalorder %s66, %s67
      %p79 = scmp.eq.s32.totalorder %s36, 1
      %p80 = por %p78, %p79
      %p82 = scmp.ne.s32.totalorder %s67, %s81
      %p83 = scmp.eq.s32.totalorder %s36, 0
      %p84 = por %p82, %p83
      %s86 = sadd.s32 %s85, 1
      %p89 = scmp.eq.s32.totalorder %s30, 1
      %p90 = scmp.ne.s32.totalorder %s85, %s87
      %p91 = scmp.eq.s32.totalorder %s30, 0
      %p92 = por %p90, %p91
      %p93 = scmp.ne.s32.totalorder %s85, %s87
      %p94 = scmp.eq.s32.totalorder %s35, 1
      %p95 = por %p93, %p94
      %p96 = scmp.ne.s32.totalorder %s87, %s88
      %p97 = scmp.eq.s32.totalorder %s35, 0
      %p98 = por %p96, %p97
      %p99 = scmp.ne.s32.totalorder %s87, %s88
      %p100 = scmp.eq.s32.totalorder %s36, 1
      %p101 = por %p99, %p100
      %p103 = scmp.ne.s32.totalorder %s88, %s102
      %p104 = scmp.eq.s32.totalorder %s36, 0
      %p105 = por %p103, %p104
      %s107 = sadd.s32 %s106, 1
      %p110 = scmp.eq.s32.totalorder %s30, 1
      %p111 = scmp.ne.s32.totalorder %s106, %s108
      %p112 = scmp.eq.s32.totalorder %s30, 0
      %p113 = por %p111, %p112
      %p114 = scmp.ne.s32.totalorder %s106, %s108
      %p115 = scmp.eq.s32.totalorder %s35, 1
      %p116 = por %p114, %p115
      %p117 = scmp.ne.s32.totalorder %s108, %s109
      %p118 = scmp.eq.s32.totalorder %s35, 0
      %p119 = por %p117, %p118
      %p120 = scmp.ne.s32.totalorder %s108, %s109
      %p121 = scmp.eq.s32.totalorder %s36, 1
      %p122 = por %p120, %p121
      %p124 = scmp.ne.s32.totalorder %s109, %s123
      %p125 = scmp.eq.s32.totalorder %s36, 0
      %p126 = por %p124, %p125
      %s128 = sadd.s32 %s127, 1
      %p131 = scmp.eq.s32.totalorder %s30, 1
      %p132 = scmp.ne.s32.totalorder %s127, %s129
      %p133 = scmp.eq.s32.totalorder %s30, 0
      %p134 = por %p132, %p133
      %p135 = scmp.ne.s32.totalorder %s127, %s129
      %p136 = scmp.eq.s32.totalorder %s35, 1
      %p137 = por %p135, %p136
      %p138 = scmp.ne.s32.totalorder %s129, %s130
      %p139 = scmp.eq.s32.totalorder %s35, 0
      %p140 = por %p138, %p139
      %p141 = scmp.ne.s32.totalorder %s129, %s130
      %p142 = scmp.eq.s32.totalorder %s36, 1
      %p143 = por %p141, %p142
      %p145 = scmp.ne.s32.totalorder %s130, %s144
      %p146 = scmp.eq.s32.totalorder %s36, 0
      %p147 = por %p145, %p146
      %s149 = sadd.s32 %s148, 1
      %p152 = scmp.eq.s32.totalorder %s30, 1
      %p153 = scmp.ne.s32.totalorder %s148, %s150
      %p154 = scmp.eq.s32.totalorder %s30, 0
      %p155 = por %p153, %p154
      %p156 = scmp.ne.s32.totalorder %s148, %s150
      %p157 = scmp.eq.s32.totalorder %s35, 1
      %p158 = por %p156, %p157
      %p159 = scmp.ne.s32.totalorder %s150, %s151
      %p160 = scmp.eq.s32.totalorder %s35, 0
      %p161 = por %p159, %p160
      %p162 = scmp.ne.s32.totalorder %s150, %s151
      %p163 = scmp.eq.s32.totalorder %s36, 1
      %p164 = por %p162, %p163
      %p166 = scmp.ne.s32.totalorder %s151, %s165
      %p167 = scmp.eq.s32.totalorder %s36, 0
      %p168 = por %p166, %p167
      %s170 = sadd.s32 %s169, 1
      %p173 = scmp.eq.s32.totalorder %s30, 1
      %p174 = scmp.ne.s32.totalorder %s169, %s171
      %p175 = scmp.eq.s32.totalorder %s30, 0
      %p176 = por %p174, %p175
      %p177 = scmp.ne.s32.totalorder %s169, %s171
      %p178 = scmp.eq.s32.totalorder %s35, 1
      %p179 = por %p177, %p178
      %p180 = scmp.ne.s32.totalorder %s171, %s172
      %p181 = scmp.eq.s32.totalorder %s35, 0
      %p182 = por %p180, %p181
      %p183 = scmp.ne.s32.totalorder %s171, %s172
      %p184 = scmp.eq.s32.totalorder %s36, 1
      %p185 = por %p183, %p184
      %p187 = scmp.ne.s32.totalorder %s172, %s186
      %p188 = scmp.eq.s32.totalorder %s36, 0
      %p189 = por %p187, %p188
      %s191 = sadd.s32 %s190, 1
      %p194 = scmp.eq.s32.totalorder %s30, 1
      %p195 = scmp.ne.s32.totalorder %s190, %s192
      %p196 = scmp.eq.s32.totalorder %s30, 0
      %p197 = por %p195, %p196
      %p198 = scmp.ne.s32.totalorder %s190, %s192
      %p199 = scmp.eq.s32.totalorder %s35, 1
      %p200 = por %p198, %p199
      %p201 = scmp.ne.s32.totalorder %s192, %s193
      %p202 = scmp.eq.s32.totalorder %s35, 0
      %p203 = por %p201, %p202
      %p204 = scmp.ne.s32.totalorder %s192, %s193
      %p205 = scmp.eq.s32.totalorder %s36, 1
      %p206 = por %p204, %p205
      %p208 = scmp.ne.s32.totalorder %s193, %s207
      %p209 = scmp.eq.s32.totalorder %s36, 0
      %p210 = por %p208, %p209
      %s211 = ssub.s32 %s30, %s37
      %p212 = scmp.eq.s32.totalorder %s211, 0
      %s214 = sadd.s32 %s213, 1
      %s215 = scalar_select %p212, %s213, %s214
      %p218 = pneg %p212
      %p219 = scmp.eq.s32.totalorder %s30, 1
      %p220 = por %p218, %p219
      %p221 = scmp.ne.s32.totalorder %s213, %s216
      %p222 = scmp.eq.s32.totalorder %s30, 0
      %p223 = por %p221, %p222
      %p224 = scmp.ne.s32.totalorder %s213, %s216
      %p225 = scmp.eq.s32.totalorder %s35, 1
      %p226 = por %p224, %p225
      %p227 = scmp.ne.s32.totalorder %s216, %s217
      %p228 = scmp.eq.s32.totalorder %s35, 0
      %p229 = por %p227, %p228
      %p230 = scmp.ne.s32.totalorder %s216, %s217
      %p231 = scmp.eq.s32.totalorder %s36, 1
      %p232 = por %p230, %p231
      %p234 = scmp.ne.s32.totalorder %s217, %s233
      %p235 = scmp.eq.s32.totalorder %s36, 0
      %p236 = por %p234, %p235
      %s237 = ssub.s32 %s30, %s37
      %p238 = scmp.eq.s32.totalorder %s237, 0
      %s240 = sadd.s32 %s239, 1
      %s241 = scalar_select %p238, %s239, %s240
      %p244 = pneg %p238
      %p245 = scmp.eq.s32.totalorder %s30, 1
      %p246 = por %p244, %p245
      %p247 = scmp.ne.s32.totalorder %s239, %s242
      %p248 = scmp.eq.s32.totalorder %s30, 0
      %p249 = por %p247, %p248
      %p250 = scmp.ne.s32.totalorder %s239, %s242
      %p251 = scmp.eq.s32.totalorder %s35, 1
      %p252 = por %p250, %p251
      %p253 = scmp.ne.s32.totalorder %s242, %s243
      %p254 = scmp.eq.s32.totalorder %s35, 0
      %p255 = por %p253, %p254
      %p256 = scmp.ne.s32.totalorder %s242, %s243
      %p257 = scmp.eq.s32.totalorder %s36, 1
      %p258 = por %p256, %p257
      %p260 = scmp.ne.s32.totalorder %s243, %s259
      %p261 = scmp.eq.s32.totalorder %s36, 0
      %p262 = por %p260, %p261
      %s263 = ssub.s32 %s30, %s37
      %p264 = scmp.eq.s32.totalorder %s263, 0
      %s266 = sadd.s32 %s265, 1
      %s267 = scalar_select %p264, %s265, %s266
      %p270 = pneg %p264
      %p271 = scmp.eq.s32.totalorder %s30, 1
      %p272 = por %p270, %p271
      %p273 = scmp.ne.s32.totalorder %s265, %s268
      %p274 = scmp.eq.s32.totalorder %s30, 0
      %p275 = por %p273, %p274
      %p276 = scmp.ne.s32.totalorder %s265, %s268
      %p277 = scmp.eq.s32.totalorder %s35, 1
      %p278 = por %p276, %p277
      %p279 = scmp.ne.s32.totalorder %s268, %s269
      %p280 = scmp.eq.s32.totalorder %s35, 0
      %p281 = por %p279, %p280
      %p282 = scmp.ne.s32.totalorder %s268, %s269
      %p283 = scmp.eq.s32.totalorder %s36, 1
      %p284 = por %p282, %p283
      %p286 = scmp.ne.s32.totalorder %s269, %s285
      %p287 = scmp.eq.s32.totalorder %s36, 0
      %p288 = por %p286, %p287
      %p289 = scmp.le.s32.totalorder 1, %s30
      %p290 = scmp.lt.s32.totalorder %s30, 3
      %p291 = pnand %p289, %p290
      %p292 = pneg %p291
      // Predicated region
      $region9: #{tpu_custom_call.1} parent=5 // pred_check
        _
      $region10: #{tpu_custom_call.1} parent=5 // pred_check_branch
        %294 = sbr.rel (%p291) target = $region12
      $region11: #{tpu_custom_call.1} parent=5 // pred_region
        %s295 = ssub.s32 %s30, 1
        // Predicated region
        $region13: #{tpu_custom_call.1} parent=11 // pred_check
          %p296 = pneg %p77
        $region14: #{tpu_custom_call.1} parent=11 // pred_check_branch
          %298 = sbr.rel (%p296) target = $region16
        $region15: #{tpu_custom_call.1} parent=11 // pred_region
          _
        $region16: #{tpu_custom_call.1} parent=11 // pred_fallthru
          _
        // Predicated region
        $region17: #{tpu_custom_call.1} parent=11 // pred_check
          %p299 = pneg %p98
        $region18: #{tpu_custom_call.1} parent=11 // pred_check_branch
          %301 = sbr.rel (%p299) target = $region20
        $region19: #{tpu_custom_call.1} parent=11 // pred_region
          _
        $region20: #{tpu_custom_call.1} parent=11 // pred_fallthru
          _
        // Predicated region
        $region21: #{tpu_custom_call.1} parent=11 // pred_check
          %p302 = pneg %p119
        $region22: #{tpu_custom_call.1} parent=11 // pred_check_branch
          %304 = sbr.rel (%p302) target = $region24
        $region23: #{tpu_custom_call.1} parent=11 // pred_region
          _
        $region24: #{tpu_custom_call.1} parent=11 // pred_fallthru
          _
        // Predicated region
        $region25: #{tpu_custom_call.1} parent=11 // pred_check
          %p305 = pneg %p140
        $region26: #{tpu_custom_call.1} parent=11 // pred_check_branch
          %307 = sbr.rel (%p305) target = $region28
        $region27: #{tpu_custom_call.1} parent=11 // pred_region
          _
        $region28: #{tpu_custom_call.1} parent=11 // pred_fallthru
          _
        // Predicated region
        $region29: #{tpu_custom_call.1} parent=11 // pred_check
          %p308 = pneg %p161
        $region30: #{tpu_custom_call.1} parent=11 // pred_check_branch
          %310 = sbr.rel (%p308) target = $region32
        $region31: #{tpu_custom_call.1} parent=11 // pred_region
          _
        $region32: #{tpu_custom_call.1} parent=11 // pred_fallthru
          _
        // Predicated region
        $region33: #{tpu_custom_call.1} parent=11 // pred_check
          %p311 = pneg %p182
        $region34: #{tpu_custom_call.1} parent=11 // pred_check_branch
          %313 = sbr.rel (%p311) target = $region36
        $region35: #{tpu_custom_call.1} parent=11 // pred_region
          _
        $region36: #{tpu_custom_call.1} parent=11 // pred_fallthru
          _
        // Predicated region
        $region37: #{tpu_custom_call.1} parent=11 // pred_check
          %p314 = pneg %p203
        $region38: #{tpu_custom_call.1} parent=11 // pred_check_branch
          %316 = sbr.rel (%p314) target = $region40
        $region39: #{tpu_custom_call.1} parent=11 // pred_region
          _
        $region40: #{tpu_custom_call.1} parent=11 // pred_fallthru
          _
      $region12: #{tpu_custom_call.1} parent=5 // pred_fallthru
        _
      %p317 = scmp.lt.s32.totalorder %s30, 2
      // Predicated region
      $region41: #{tpu_custom_call.1} parent=5 // pred_check
        %p318 = pneg %p317
      $region42: #{tpu_custom_call.1} parent=5 // pred_check_branch
        %320 = sbr.rel (%p318) target = $region44
      $region43: #{tpu_custom_call.1} parent=5 // pred_region
        // Predicated region
        $region45: #{tpu_custom_call.1} parent=43 // pred_check
          %p321 = pneg %p50
        $region46: #{tpu_custom_call.1} parent=43 // pred_check_branch
          %323 = sbr.rel (%p321) target = $region48
        $region47: #{tpu_custom_call.1} parent=43 // pred_region
          %s324 = smul.u32 4, %s30
          %p325 = scmp.lt.s32.totalorder %s324, 7
          %s326 = scalar_select %p325, %s324, 7
          %s327 = smul.addr %s326, 32
          %s328 = smul.addr %s327, 4
          %s329 = scalar_lea.vmem %s1, %s328
          %s330 = smul.u32 4, %s30
        $region48: #{tpu_custom_call.1} parent=43 // pred_fallthru
          _
      $region44: #{tpu_custom_call.1} parent=5 // pred_fallthru
        _
      %p331 = scmp.le.s32.totalorder 1, %s30
      %p332 = scmp.lt.s32.totalorder %s30, 3
      %p333 = pnand %p331, %p332
      %p334 = pneg %p333
      // Predicated region
      $region49: #{tpu_custom_call.1} parent=5 // pred_check
        _
      $region50: #{tpu_custom_call.1} parent=5 // pred_check_branch
        %336 = sbr.rel (%p333) target = $region52
      $region51: #{tpu_custom_call.1} parent=5 // pred_region
        %s337 = ssub.s32 %s30, 1
        %s338 = smul.u32 4, %s35
        %p339 = scmp.lt.s32.totalorder %s338, 7
        %s340 = scalar_select %p339, %s338, 7
        %s341 = smul.addr %s340, 32
        %s342 = smul.addr %s341, 4
        %s343 = scalar_lea.vmem %s1, %s342
        %p344 = pneg %p56
        %p345 = pneg %p53
        %p346 = pneg %p77
        %p347 = pneg %p74
        %p348 = pneg %p98
        %p349 = pneg %p95
        %p350 = pneg %p119
        %p351 = pneg %p116
        %p352 = pneg %p140
        %p353 = pneg %p137
        %p354 = pneg %p161
        %p355 = pneg %p158
        %p356 = pneg %p182
        %p357 = pneg %p179
        %p358 = pneg %p203
        %p359 = pneg %p200
        %p360 = pneg %p229
        %p361 = pneg %p226
        %s362 = sand.u32 %s216, 1
        %s363 = scalar_lea.sflag [#allocation5], %s362
        %s364 = sand.u32 %s216, 1
        %s365 = smul.addr %s364, 4
        %s366 = scalar_lea.vmem [#allocation4], %s365
        %p367 = pneg %p255
        %p368 = pneg %p252
        %s369 = sand.u32 %s242, 1
        %s370 = scalar_lea.sflag [#allocation7], %s369
        %s371 = sand.u32 %s242, 1
        %s372 = smul.addr %s371, 4
        %s373 = scalar_lea.vmem [#allocation6], %s372
        %p374 = pneg %p281
        %p375 = pneg %p278
        %p376 = scmp.lt.s32.totalorder %s35, 1
        %s377 = scalar_select %p376, %s35, 1
        %s378 = smul.addr %s377, 4
        %s379 = scalar_lea.vmem %s11, %s378
        %s380 = smul.u32 4, %s35
        %p381 = scmp.lt.s32.totalorder %s380, 7
        %s382 = scalar_select %p381, %s380, 7
        %s383 = smul.addr %s382, 32
        %s384 = smul.addr %s383, 4
        %s385 = scalar_lea.vmem %s1, %s384
        %s386 = smul.u32 4, %s35
        %p387 = scmp.lt.s32.totalorder %s35, 1
        %s388 = scalar_select %p387, %s35, 1
        %s389 = smul.addr %s388, 4
        %s390 = scalar_lea.vmem %s11, %s389
        %v392 = vld [vmem:[%s385] sm:$0xf]
        %v393 = vld [vmem:[%s385 + $0x4] sm:$0xf]
        %v394 = vld [vmem:[%s385 + $0x8] sm:$0xf]
        %v395 = vld [vmem:[%s385 + $0xc] sm:$0xf]
        %v396 = vld [vmem:[%s385 + $0x10] sm:$0xf]
        %v397 = vld [vmem:[%s385 + $0x14] sm:$0xf]
        %v398 = vld [vmem:[%s385 + $0x18] sm:$0xf]
        %v399 = vld [vmem:[%s385 + $0x1c] sm:$0xf]
        %v400 = vld [vmem:[%s385 + $0x20] sm:$0xf]
        %v401 = vld [vmem:[%s385 + $0x24] sm:$0xf]
        %v402 = vld [vmem:[%s385 + $0x28] sm:$0xf]
        %v403 = vld [vmem:[%s385 + $0x2c] sm:$0xf]
        %v404 = vld [vmem:[%s385 + $0x30] sm:$0xf]
        %v405 = vld [vmem:[%s385 + $0x34] sm:$0xf]
        %v406 = vld [vmem:[%s385 + $0x38] sm:$0xf]
        %v407 = vld [vmem:[%s385 + $0x3c] sm:$0xf]
        %v408 = vld [vmem:[%s385 + $0x40] sm:$0xf]
        %v409 = vld [vmem:[%s385 + $0x44] sm:$0xf]
        %v410 = vld [vmem:[%s385 + $0x48] sm:$0xf]
        %v411 = vld [vmem:[%s385 + $0x4c] sm:$0xf]
        %v412 = vld [vmem:[%s385 + $0x50] sm:$0xf]
        %v413 = vld [vmem:[%s385 + $0x54] sm:$0xf]
        %v414 = vld [vmem:[%s385 + $0x58] sm:$0xf]
        %v415 = vld [vmem:[%s385 + $0x5c] sm:$0xf]
        %v416 = vld [vmem:[%s385 + $0x60] sm:$0xf]
        %v417 = vld [vmem:[%s385 + $0x64] sm:$0xf]
        %v418 = vld [vmem:[%s385 + $0x68] sm:$0xf]
        %v419 = vld [vmem:[%s385 + $0x6c] sm:$0xf]
        %v420 = vld [vmem:[%s385 + $0x70] sm:$0xf]
        %v421 = vld [vmem:[%s385 + $0x74] sm:$0xf]
        %v422 = vld [vmem:[%s385 + $0x78] sm:$0xf]
        %v423 = vld [vmem:[%s385 + $0x7c] sm:$0xf]
        %v424 = vld [vmem:[%s385 + $0x80] sm:$0xf]
        %v425 = vld [vmem:[%s385 + $0x84] sm:$0xf]
        %v426 = vld [vmem:[%s385 + $0x88] sm:$0xf]
        %v427 = vld [vmem:[%s385 + $0x8c] sm:$0xf]
        %v428 = vld [vmem:[%s385 + $0x90] sm:$0xf]
        %v429 = vld [vmem:[%s385 + $0x94] sm:$0xf]
        %v430 = vld [vmem:[%s385 + $0x98] sm:$0xf]
        %v431 = vld [vmem:[%s385 + $0x9c] sm:$0xf]
        %v432 = vld [vmem:[%s385 + $0xa0] sm:$0xf]
        %v433 = vld [vmem:[%s385 + $0xa4] sm:$0xf]
        %v434 = vld [vmem:[%s385 + $0xa8] sm:$0xf]
        %v435 = vld [vmem:[%s385 + $0xac] sm:$0xf]
        %v436 = vld [vmem:[%s385 + $0xb0] sm:$0xf]
        %v437 = vld [vmem:[%s385 + $0xb4] sm:$0xf]
        %v438 = vld [vmem:[%s385 + $0xb8] sm:$0xf]
        %v439 = vld [vmem:[%s385 + $0xbc] sm:$0xf]
        %v440 = vld [vmem:[%s385 + $0xc0] sm:$0xf]
        %v441 = vld [vmem:[%s385 + $0xc4] sm:$0xf]
        %v442 = vld [vmem:[%s385 + $0xc8] sm:$0xf]
        %v443 = vld [vmem:[%s385 + $0xcc] sm:$0xf]
        %v444 = vld [vmem:[%s385 + $0xd0] sm:$0xf]
        %v445 = vld [vmem:[%s385 + $0xd4] sm:$0xf]
        %v446 = vld [vmem:[%s385 + $0xd8] sm:$0xf]
        %v447 = vld [vmem:[%s385 + $0xdc] sm:$0xf]
        %v448 = vld [vmem:[%s385 + $0xe0] sm:$0xf]
        %v449 = vld [vmem:[%s385 + $0xe4] sm:$0xf]
        %v450 = vld [vmem:[%s385 + $0xe8] sm:$0xf]
        %v451 = vld [vmem:[%s385 + $0xec] sm:$0xf]
        %v452 = vld [vmem:[%s385 + $0xf0] sm:$0xf]
        %v453 = vld [vmem:[%s385 + $0xf4] sm:$0xf]
        %v454 = vld [vmem:[%s385 + $0xf8] sm:$0xf]
        %v455 = vld [vmem:[%s385 + $0xfc] sm:$0xf]
        %v456 = vld [vmem:[%s385 + $0x100] sm:$0xf]
        %v457 = vld [vmem:[%s385 + $0x104] sm:$0xf]
        %v458 = vld [vmem:[%s385 + $0x108] sm:$0xf]
        %v459 = vld [vmem:[%s385 + $0x10c] sm:$0xf]
        %v460 = vld [vmem:[%s385 + $0x110] sm:$0xf]
        %v461 = vld [vmem:[%s385 + $0x114] sm:$0xf]
        %v462 = vld [vmem:[%s385 + $0x118] sm:$0xf]
        %v463 = vld [vmem:[%s385 + $0x11c] sm:$0xf]
        %v464 = vld [vmem:[%s385 + $0x120] sm:$0xf]
        %v465 = vld [vmem:[%s385 + $0x124] sm:$0xf]
        %v466 = vld [vmem:[%s385 + $0x128] sm:$0xf]
        %v467 = vld [vmem:[%s385 + $0x12c] sm:$0xf]
        %v468 = vld [vmem:[%s385 + $0x130] sm:$0xf]
        %v469 = vld [vmem:[%s385 + $0x134] sm:$0xf]
        %v470 = vld [vmem:[%s385 + $0x138] sm:$0xf]
        %v471 = vld [vmem:[%s385 + $0x13c] sm:$0xf]
        %v472 = vld [vmem:[%s385 + $0x140] sm:$0xf]
        %v473 = vld [vmem:[%s385 + $0x144] sm:$0xf]
        %v474 = vld [vmem:[%s385 + $0x148] sm:$0xf]
        %v475 = vld [vmem:[%s385 + $0x14c] sm:$0xf]
        %v476 = vld [vmem:[%s385 + $0x150] sm:$0xf]
        %v477 = vld [vmem:[%s385 + $0x154] sm:$0xf]
        %v478 = vld [vmem:[%s385 + $0x158] sm:$0xf]
        %v479 = vld [vmem:[%s385 + $0x15c] sm:$0xf]
        %v480 = vld [vmem:[%s385 + $0x160] sm:$0xf]
        %v481 = vld [vmem:[%s385 + $0x164] sm:$0xf]
        %v482 = vld [vmem:[%s385 + $0x168] sm:$0xf]
        %v483 = vld [vmem:[%s385 + $0x16c] sm:$0xf]
        %v484 = vld [vmem:[%s385 + $0x170] sm:$0xf]
        %v485 = vld [vmem:[%s385 + $0x174] sm:$0xf]
        %v486 = vld [vmem:[%s385 + $0x178] sm:$0xf]
        %v487 = vld [vmem:[%s385 + $0x17c] sm:$0xf]
        %v488 = vld [vmem:[%s385 + $0x180] sm:$0xf]
        %v489 = vld [vmem:[%s385 + $0x184] sm:$0xf]
        %v490 = vld [vmem:[%s385 + $0x188] sm:$0xf]
        %v491 = vld [vmem:[%s385 + $0x18c] sm:$0xf]
        %v492 = vld [vmem:[%s385 + $0x190] sm:$0xf]
        %v493 = vld [vmem:[%s385 + $0x194] sm:$0xf]
        %v494 = vld [vmem:[%s385 + $0x198] sm:$0xf]
        %v495 = vld [vmem:[%s385 + $0x19c] sm:$0xf]
        %v496 = vld [vmem:[%s385 + $0x1a0] sm:$0xf]
        %v497 = vld [vmem:[%s385 + $0x1a4] sm:$0xf]
        %v498 = vld [vmem:[%s385 + $0x1a8] sm:$0xf]
        %v499 = vld [vmem:[%s385 + $0x1ac] sm:$0xf]
        %v500 = vld [vmem:[%s385 + $0x1b0] sm:$0xf]
        %v501 = vld [vmem:[%s385 + $0x1b4] sm:$0xf]
        %v502 = vld [vmem:[%s385 + $0x1b8] sm:$0xf]
        %v503 = vld [vmem:[%s385 + $0x1bc] sm:$0xf]
        %v504 = vld [vmem:[%s385 + $0x1c0] sm:$0xf]
        %v505 = vld [vmem:[%s385 + $0x1c4] sm:$0xf]
        %v506 = vld [vmem:[%s385 + $0x1c8] sm:$0xf]
        %v507 = vld [vmem:[%s385 + $0x1cc] sm:$0xf]
        %v508 = vld [vmem:[%s385 + $0x1d0] sm:$0xf]
        %v509 = vld [vmem:[%s385 + $0x1d4] sm:$0xf]
        %v510 = vld [vmem:[%s385 + $0x1d8] sm:$0xf]
        %v511 = vld [vmem:[%s385 + $0x1dc] sm:$0xf]
        %v512 = vld [vmem:[%s385 + $0x1e0] sm:$0xf]
        %v513 = vld [vmem:[%s385 + $0x1e4] sm:$0xf]
        %v514 = vld [vmem:[%s385 + $0x1e8] sm:$0xf]
        %v515 = vld [vmem:[%s385 + $0x1ec] sm:$0xf]
        %v516 = vld [vmem:[%s385 + $0x1f0] sm:$0xf]
        %v517 = vld [vmem:[%s385 + $0x1f4] sm:$0xf]
        %v518 = vld [vmem:[%s385 + $0x1f8] sm:$0xf]
        %v519 = vld [vmem:[%s385 + $0x1fc] sm:$0xf]
        %v520 = vld [vmem:[%s2] sm:$0xf]
        %v521 = vld [vmem:[%s2 + $0x4] sm:$0xf]
        %v522 = vld [vmem:[%s2 + $0x8] sm:$0xf]
        %v523 = vld [vmem:[%s2 + $0xc] sm:$0xf]
        %v524 = vld [vmem:[%s2 + $0x10] sm:$0x3]
        %v525 = vld [vmem:[%s3] sm:$0x1]
        %v527 = vlaneseq
        %v528 = vshrl.u32 %v527, 7
        %v529 = vsub.s32 0, %v528
        %v530 = vrot.slane %v525, %v529
        %v660 = vunpack.c.l.b16 %v392
        %v661 = vunpack.c.l.b16 %v393
        %v662 = vunpack.c.l.b16 %v394
        %v663 = vunpack.c.l.b16 %v395
        %v664 = vunpack.c.l.b16 %v396
        %v665 = vunpack.c.l.b16 %v397
        %v666 = vunpack.c.l.b16 %v398
        %v667 = vunpack.c.l.b16 %v399
        %v668 = vunpack.c.l.b16 %v400
        %v669 = vunpack.c.l.b16 %v401
        %v670 = vunpack.c.l.b16 %v402
        %v671 = vunpack.c.l.b16 %v403
        %v672 = vunpack.c.l.b16 %v404
        %v673 = vunpack.c.l.b16 %v405
        %v674 = vunpack.c.l.b16 %v406
        %v675 = vunpack.c.l.b16 %v407
        %v676 = vunpack.c.l.b16 %v408
        %v677 = vunpack.c.l.b16 %v409
        %v678 = vunpack.c.l.b16 %v410
        %v679 = vunpack.c.l.b16 %v411
        %v680 = vunpack.c.l.b16 %v412
        %v681 = vunpack.c.l.b16 %v413
        %v682 = vunpack.c.l.b16 %v414
        %v683 = vunpack.c.l.b16 %v415
        %v684 = vunpack.c.l.b16 %v416
        %v685 = vunpack.c.l.b16 %v417
        %v686 = vunpack.c.l.b16 %v418
        %v687 = vunpack.c.l.b16 %v419
        %v688 = vunpack.c.l.b16 %v420
        %v689 = vunpack.c.l.b16 %v421
        %v690 = vunpack.c.l.b16 %v422
        %v691 = vunpack.c.l.b16 %v423
        %v692 = vunpack.c.l.b16 %v424
        %v693 = vunpack.c.l.b16 %v425
        %v694 = vunpack.c.l.b16 %v426
        %v695 = vunpack.c.l.b16 %v427
        %v696 = vunpack.c.l.b16 %v428
        %v697 = vunpack.c.l.b16 %v429
        %v698 = vunpack.c.l.b16 %v430
        %v699 = vunpack.c.l.b16 %v431
        %v700 = vunpack.c.l.b16 %v432
        %v701 = vunpack.c.l.b16 %v433
        %v702 = vunpack.c.l.b16 %v434
        %v703 = vunpack.c.l.b16 %v435
        %v704 = vunpack.c.l.b16 %v436
        %v705 = vunpack.c.l.b16 %v437
        %v706 = vunpack.c.l.b16 %v438
        %v707 = vunpack.c.l.b16 %v439
        %v708 = vunpack.c.l.b16 %v440
        %v709 = vunpack.c.l.b16 %v441
        %v710 = vunpack.c.l.b16 %v442
        %v711 = vunpack.c.l.b16 %v443
        %v712 = vunpack.c.l.b16 %v444
        %v713 = vunpack.c.l.b16 %v445
        %v714 = vunpack.c.l.b16 %v446
        %v715 = vunpack.c.l.b16 %v447
        %v716 = vunpack.c.l.b16 %v448
        %v717 = vunpack.c.l.b16 %v449
        %v718 = vunpack.c.l.b16 %v450
        %v719 = vunpack.c.l.b16 %v451
        %v720 = vunpack.c.l.b16 %v452
        %v721 = vunpack.c.l.b16 %v453
        %v722 = vunpack.c.l.b16 %v454
        %v723 = vunpack.c.l.b16 %v455
        %v724 = vunpack.c.l.b16 %v456
        %v725 = vunpack.c.l.b16 %v457
        %v726 = vunpack.c.l.b16 %v458
        %v727 = vunpack.c.l.b16 %v459
        %v728 = vunpack.c.l.b16 %v460
        %v729 = vunpack.c.l.b16 %v461
        %v730 = vunpack.c.l.b16 %v462
        %v731 = vunpack.c.l.b16 %v463
        %v732 = vunpack.c.l.b16 %v464
        %v733 = vunpack.c.l.b16 %v465
        %v734 = vunpack.c.l.b16 %v466
        %v735 = vunpack.c.l.b16 %v467
        %v736 = vunpack.c.l.b16 %v468
        %v737 = vunpack.c.l.b16 %v469
        %v738 = vunpack.c.l.b16 %v470
        %v739 = vunpack.c.l.b16 %v471
        %v740 = vunpack.c.l.b16 %v472
        %v741 = vunpack.c.l.b16 %v473
        %v742 = vunpack.c.l.b16 %v474
        %v743 = vunpack.c.l.b16 %v475
        %v744 = vunpack.c.l.b16 %v476
        %v745 = vunpack.c.l.b16 %v477
        %v746 = vunpack.c.l.b16 %v478
        %v747 = vunpack.c.l.b16 %v479
        %v748 = vunpack.c.l.b16 %v480
        %v749 = vunpack.c.l.b16 %v481
        %v750 = vunpack.c.l.b16 %v482
        %v751 = vunpack.c.l.b16 %v483
        %v752 = vunpack.c.l.b16 %v484
        %v753 = vunpack.c.l.b16 %v485
        %v754 = vunpack.c.l.b16 %v486
        %v755 = vunpack.c.l.b16 %v487
        %v756 = vunpack.c.l.b16 %v488
        %v757 = vunpack.c.l.b16 %v489
        %v758 = vunpack.c.l.b16 %v490
        %v759 = vunpack.c.l.b16 %v491
        %v760 = vunpack.c.l.b16 %v492
        %v761 = vunpack.c.l.b16 %v493
        %v762 = vunpack.c.l.b16 %v494
        %v763 = vunpack.c.l.b16 %v495
        %v764 = vunpack.c.l.b16 %v496
        %v765 = vunpack.c.l.b16 %v497
        %v766 = vunpack.c.l.b16 %v498
        %v767 = vunpack.c.l.b16 %v499
        %v768 = vunpack.c.l.b16 %v500
        %v769 = vunpack.c.l.b16 %v501
        %v770 = vunpack.c.l.b16 %v502
        %v771 = vunpack.c.l.b16 %v503
        %v772 = vunpack.c.l.b16 %v504
        %v773 = vunpack.c.l.b16 %v505
        %v774 = vunpack.c.l.b16 %v506
        %v775 = vunpack.c.l.b16 %v507
        %v776 = vunpack.c.l.b16 %v508
        %v777 = vunpack.c.l.b16 %v509
        %v778 = vunpack.c.l.b16 %v510
        %v779 = vunpack.c.l.b16 %v511
        %v780 = vunpack.c.l.b16 %v512
        %v781 = vunpack.c.l.b16 %v513
        %v782 = vunpack.c.l.b16 %v514
        %v783 = vunpack.c.l.b16 %v515
        %v784 = vunpack.c.l.b16 %v516
        %v785 = vunpack.c.l.b16 %v517
        %v786 = vunpack.c.l.b16 %v518
        %v787 = vunpack.c.l.b16 %v519
        %v788 = vpack.c.b16 %v661, %v660
        %v789 = vpack.c.b16 %v663, %v662
        %v790 = vpack.c.b16 %v665, %v664
        %v791 = vpack.c.b16 %v667, %v666
        %v792 = vpack.c.b16 %v669, %v668
        %v793 = vpack.c.b16 %v671, %v670
        %v794 = vpack.c.b16 %v673, %v672
        %v795 = vpack.c.b16 %v675, %v674
        %v796 = vpack.c.b16 %v677, %v676
        %v797 = vpack.c.b16 %v679, %v678
        %v798 = vpack.c.b16 %v681, %v680
        %v799 = vpack.c.b16 %v683, %v682
        %v800 = vpack.c.b16 %v685, %v684
        %v801 = vpack.c.b16 %v687, %v686
        %v802 = vpack.c.b16 %v689, %v688
        %v803 = vpack.c.b16 %v691, %v690
        %v804 = vpack.c.b16 %v693, %v692
        %v805 = vpack.c.b16 %v695, %v694
        %v806 = vpack.c.b16 %v697, %v696
        %v807 = vpack.c.b16 %v699, %v698
        %v808 = vpack.c.b16 %v701, %v700
        %v809 = vpack.c.b16 %v703, %v702
        %v810 = vpack.c.b16 %v705, %v704
        %v811 = vpack.c.b16 %v707, %v706
        %v812 = vpack.c.b16 %v709, %v708
        %v813 = vpack.c.b16 %v711, %v710
        %v814 = vpack.c.b16 %v713, %v712
        %v815 = vpack.c.b16 %v715, %v714
        %v816 = vpack.c.b16 %v717, %v716
        %v817 = vpack.c.b16 %v719, %v718
        %v818 = vpack.c.b16 %v721, %v720
        %v819 = vpack.c.b16 %v723, %v722
        %v820 = vpack.c.b16 %v725, %v724
        %v821 = vpack.c.b16 %v727, %v726
        %v822 = vpack.c.b16 %v729, %v728
        %v823 = vpack.c.b16 %v731, %v730
        %v824 = vpack.c.b16 %v733, %v732
        %v825 = vpack.c.b16 %v735, %v734
        %v826 = vpack.c.b16 %v737, %v736
        %v827 = vpack.c.b16 %v739, %v738
        %v828 = vpack.c.b16 %v741, %v740
        %v829 = vpack.c.b16 %v743, %v742
        %v830 = vpack.c.b16 %v745, %v744
        %v831 = vpack.c.b16 %v747, %v746
        %v832 = vpack.c.b16 %v749, %v748
        %v833 = vpack.c.b16 %v751, %v750
        %v834 = vpack.c.b16 %v753, %v752
        %v835 = vpack.c.b16 %v755, %v754
        %v836 = vpack.c.b16 %v757, %v756
        %v837 = vpack.c.b16 %v759, %v758
        %v838 = vpack.c.b16 %v761, %v760
        %v839 = vpack.c.b16 %v763, %v762
        %v840 = vpack.c.b16 %v765, %v764
        %v841 = vpack.c.b16 %v767, %v766
        %v842 = vpack.c.b16 %v769, %v768
        %v843 = vpack.c.b16 %v771, %v770
        %v844 = vpack.c.b16 %v773, %v772
        %v845 = vpack.c.b16 %v775, %v774
        %v846 = vpack.c.b16 %v777, %v776
        %v847 = vpack.c.b16 %v779, %v778
        %v848 = vpack.c.b16 %v781, %v780
        %v849 = vpack.c.b16 %v783, %v782
        %v850 = vpack.c.b16 %v785, %v784
        %v851 = vpack.c.b16 %v787, %v786
        %v857 = vunpack.c.l.b16 %v520
        %v858 = vunpack.c.l.b16 %v521
        %v859 = vunpack.c.l.b16 %v522
        %v860 = vunpack.c.l.b16 %v523
        %v861 = vunpack.c.l.b16 %v524
        %v862 = vpack.c.b16 %v858, %v857
        %v863 = vpack.c.b16 %v860, %v859
        %v864 = vpack.c.b16 %v861, %v861
        %vm867 = vcmask 293888
        %v869 = vsel %vm867, %v788, 0
        %v872 = vsel %vm867, %v789, 0
        %v875 = vsel %vm867, %v790, 0
        %v878 = vsel %vm867, %v791, 0
        %v881 = vsel %vm867, %v792, 0
        %v884 = vsel %vm867, %v793, 0
        %v887 = vsel %vm867, %v794, 0
        %v890 = vsel %vm867, %v795, 0
        %v893 = vsel %vm867, %v796, 0
        %v896 = vsel %vm867, %v797, 0
        %v899 = vsel %vm867, %v798, 0
        %v902 = vsel %vm867, %v799, 0
        %v905 = vsel %vm867, %v800, 0
        %v908 = vsel %vm867, %v801, 0
        %v911 = vsel %vm867, %v802, 0
        %v914 = vsel %vm867, %v803, 0
        %v917 = vsel %vm867, %v804, 0
        %v920 = vsel %vm867, %v805, 0
        %v923 = vsel %vm867, %v806, 0
        %v926 = vsel %vm867, %v807, 0
        %v929 = vsel %vm867, %v808, 0
        %v932 = vsel %vm867, %v809, 0
        %v935 = vsel %vm867, %v810, 0
        %v938 = vsel %vm867, %v811, 0
        %v941 = vsel %vm867, %v812, 0
        %v944 = vsel %vm867, %v813, 0
        %v947 = vsel %vm867, %v814, 0
        %v950 = vsel %vm867, %v815, 0
        %v953 = vsel %vm867, %v816, 0
        %v956 = vsel %vm867, %v817, 0
        %v959 = vsel %vm867, %v818, 0
        %v962 = vsel %vm867, %v819, 0
        %v965 = vsel %vm867, %v820, 0
        %v968 = vsel %vm867, %v821, 0
        %v971 = vsel %vm867, %v822, 0
        %v974 = vsel %vm867, %v823, 0
        %v977 = vsel %vm867, %v824, 0
        %v980 = vsel %vm867, %v825, 0
        %v983 = vsel %vm867, %v826, 0
        %v986 = vsel %vm867, %v827, 0
        %v989 = vsel %vm867, %v828, 0
        %v992 = vsel %vm867, %v829, 0
        %v995 = vsel %vm867, %v830, 0
        %v998 = vsel %vm867, %v831, 0
        %v1001 = vsel %vm867, %v832, 0
        %v1004 = vsel %vm867, %v833, 0
        %v1007 = vsel %vm867, %v834, 0
        %v1010 = vsel %vm867, %v835, 0
        %v1013 = vsel %vm867, %v836, 0
        %v1016 = vsel %vm867, %v837, 0
        %v1019 = vsel %vm867, %v838, 0
        %v1022 = vsel %vm867, %v839, 0
        %v1025 = vsel %vm867, %v840, 0
        %v1028 = vsel %vm867, %v841, 0
        %v1031 = vsel %vm867, %v842, 0
        %v1034 = vsel %vm867, %v843, 0
        %v1037 = vsel %vm867, %v844, 0
        %v1040 = vsel %vm867, %v845, 0
        %v1043 = vsel %vm867, %v846, 0
        %v1046 = vsel %vm867, %v847, 0
        %v1049 = vsel %vm867, %v848, 0
        %v1052 = vsel %vm867, %v849, 0
        %v1055 = vsel %vm867, %v850, 0
        %v1058 = vsel %vm867, %v851, 0
        %vm1060 = vcmask 1041408
        %v1062 = vsel %vm1060, %v864, 0
        %1064 = vmatprep.subr.bf16.mxu0 0
        %1065 = vmatpush1.bf16.msra.mxu0 %v862
        %1066 = vmatprep.subr.bf16.mxu0 0
        %1067 = vmatpush1.bf16.msra.mxu0 %v863
        %1068 = vmatprep.subr.bf16.mxu0 0
        %1069 = vmatpush1.bf16.msra.mxu0 %v1062
        %1070 = vmatprep.subr.bf16.mxu0 0
        %1071 = vmatpush1.bf16.msra.mxu0 0
        %1072 = vmatprep.subr.bf16.mxu0 0
        %1073 = vmatpush1.bf16.msra.mxu0 0
        %1074 = vmatprep.subr.bf16.mxu0 0
        %1075 = vmatpush1.bf16.msra.mxu0 0
        %1076 = vmatprep.subr.bf16.mxu0 0
        %1077 = vmatpush1.bf16.msra.mxu0 0
        %1078 = vmatprep.subr.bf16.mxu0 0
        %1079 = vmatpush1.bf16.msra.mxu0 0
        %1080 = vmatprep.subr.bf16.mxu0 0
        %1081 = vmatpush1.bf16.msra.mxu0 0
        %1082 = vmatprep.subr.bf16.mxu0 0
        %1083 = vmatpush1.bf16.msra.mxu0 0
        %1084 = vmatprep.subr.bf16.mxu0 0
        %1085 = vmatpush1.bf16.msra.mxu0 0
        %1086 = vmatprep.subr.bf16.mxu0 0
        %1087 = vmatpush1.bf16.msra.mxu0 0
        %1088 = vmatprep.subr.bf16.mxu0 0
        %1089 = vmatpush1.bf16.msra.mxu0 0
        %1090 = vmatprep.subr.bf16.mxu0 0
        %1091 = vmatpush1.bf16.msra.mxu0 0
        %1092 = vmatprep.subr.bf16.mxu0 0
        %1093 = vmatpush1.bf16.msra.mxu0 0
        %1094 = vmatprep.subr.bf16.mxu0 0
        %1095 = vmatpush1.bf16.msra.mxu0 0
        %1096 = vmatprep.mubr.bf16.mxu0 0
        %1097 = vmatmul.mubr.bf16.gmra.mrb[0].mxu0 %v869
        %v1098 = vpop.f32.mrb[0].mxu0
        %v1099 = vadd.f32 %v530, %v1098
        %v1100 = vpop.f32.mrb[0].mxu0
        %v1101 = vpop.f32.mrb[0].mxu0
        %v1102 = vadd.f32 %v530, %v1101
        %v1103 = vpop.f32.mrb[0].mxu0
        %1104 = vmatprep.mubr.bf16.mxu0 0
        %1105 = vmatmul.mubr.bf16.gmra.mrb[0].mxu0 %v872
        %v1106 = vpop.f32.mrb[0].mxu0
        %v1107 = vadd.f32 %v530, %v1106
        %v1108 = vpop.f32.mrb[0].mxu0
        %v1109 = vpop.f32.mrb[0].mxu0
        %v1110 = vadd.f32 %v530, %v1109
        %v1111 = vpop.f32.mrb[0].mxu0
        %1112 = vmatprep.mubr.bf16.mxu0 0
        %1113 = vmatmul.mubr.bf16.gmra.mrb[0].mxu0 %v875
        %v1114 = vpop.f32.mrb[0].mxu0
        %v1115 = vadd.f32 %v530, %v1114
        %v1116 = vpop.f32.mrb[0].mxu0
        %v1117 = vpop.f32.mrb[0].mxu0
        %v1118 = vadd.f32 %v530, %v1117
        %v1119 = vpop.f32.mrb[0].mxu0
        %1120 = vmatprep.mubr.bf16.mxu0 0
        %1121 = vmatmul.mubr.bf16.gmra.mrb[0].mxu0 %v878
        %v1122 = vpop.f32.mrb[0].mxu0
        %v1123 = vadd.f32 %v530, %v1122
        %v1124 = vpop.f32.mrb[0].mxu0
        %v1125 = vpop.f32.mrb[0].mxu0
        %v1126 = vadd.f32 %v530, %v1125
        %v1127 = vpop.f32.mrb[0].mxu0
        %1128 = vmatprep.mubr.bf16.mxu0 0
        %1129 = vmatmul.mubr.bf16.gmra.mrb[0].mxu0 %v881
        %v1130 = vpop.f32.mrb[0].mxu0
        %v1131 = vadd.f32 %v530, %v1130
        %v1132 = vpop.f32.mrb[0].mxu0
        %v1133 = vpop.f32.mrb[0].mxu0
        %v1134 = vadd.f32 %v530, %v1133
        %v1135 = vpop.f32.mrb[0].mxu0
        %1136 = vmatprep.mubr.bf16.mxu0 0
        %1137 = vmatmul.mubr.bf16.gmra.mrb[0].mxu0 %v884
        %v1138 = vpop.f32.mrb[0].mxu0
        %v1139 = vadd.f32 %v530, %v1138
        %v1140 = vpop.f32.mrb[0].mxu0
        %v1141 = vpop.f32.mrb[0].mxu0
        %v1142 = vadd.f32 %v530, %v1141
        %v1143 = vpop.f32.mrb[0].mxu0
        %1144 = vmatprep.mubr.bf16.mxu0 0
        %1145 = vmatmul.mubr.bf16.gmra.mrb[0].mxu0 %v887
        %v1146 = vpop.f32.mrb[0].mxu0
        %v1147 = vadd.f32 %v530, %v1146
        %v1148 = vpop.f32.mrb[0].mxu0
        %v1149 = vpop.f32.mrb[0].mxu0
        %v1150 = vadd.f32 %v530, %v1149
        %v1151 = vpop.f32.mrb[0].mxu0
        %1152 = vmatprep.mubr.bf16.mxu0 0
        %1153 = vmatmul.mubr.bf16.gmra.mrb[0].mxu0 %v890
        %v1154 = vpop.f32.mrb[0].mxu0
        %v1155 = vadd.f32 %v530, %v1154
        %v1156 = vpop.f32.mrb[0].mxu0
        %v1157 = vpop.f32.mrb[0].mxu0
        %v1158 = vadd.f32 %v530, %v1157
        %v1159 = vpop.f32.mrb[0].mxu0
        %1160 = vmatprep.mubr.bf16.mxu0 0
        %1161 = vmatmul.mubr.bf16.gmra.mrb[0].mxu0 %v893
        %v1162 = vpop.f32.mrb[0].mxu0
        %v1163 = vadd.f32 %v530, %v1162
        %v1164 = vpop.f32.mrb[0].mxu0
        %v1165 = vpop.f32.mrb[0].mxu0
        %v1166 = vadd.f32 %v530, %v1165
        %v1167 = vpop.f32.mrb[0].mxu0
        %1168 = vmatprep.mubr.bf16.mxu0 0
        %1169 = vmatmul.mubr.bf16.gmra.mrb[0].mxu0 %v896
        %v1170 = vpop.f32.mrb[0].mxu0
        %v1171 = vadd.f32 %v530, %v1170
        %v1172 = vpop.f32.mrb[0].mxu0
        %v1173 = vpop.f32.mrb[0].mxu0
        %v1174 = vadd.f32 %v530, %v1173
        %v1175 = vpop.f32.mrb[0].mxu0
        %1176 = vmatprep.mubr.bf16.mxu0 0
        %1177 = vmatmul.mubr.bf16.gmra.mrb[0].mxu0 %v899
        %v1178 = vpop.f32.mrb[0].mxu0
        %v1179 = vadd.f32 %v530, %v1178
        %v1180 = vpop.f32.mrb[0].mxu0
        %v1181 = vpop.f32.mrb[0].mxu0
        %v1182 = vadd.f32 %v530, %v1181
        %v1183 = vpop.f32.mrb[0].mxu0
        %1184 = vmatprep.mubr.bf16.mxu0 0
        %1185 = vmatmul.mubr.bf16.gmra.mrb[0].mxu0 %v902
        %v1186 = vpop.f32.mrb[0].mxu0
        %v1187 = vadd.f32 %v530, %v1186
        %v1188 = vpop.f32.mrb[0].mxu0
        %v1189 = vpop.f32.mrb[0].mxu0
        %v1190 = vadd.f32 %v530, %v1189
        %v1191 = vpop.f32.mrb[0].mxu0
        %1192 = vmatprep.mubr.bf16.mxu0 0
        %1193 = vmatmul.mubr.bf16.gmra.mrb[0].mxu0 %v905
        %v1194 = vpop.f32.mrb[0].mxu0
        %v1195 = vadd.f32 %v530, %v1194
        %v1196 = vpop.f32.mrb[0].mxu0
        %v1197 = vpop.f32.mrb[0].mxu0
        %v1198 = vadd.f32 %v530, %v1197
        %v1199 = vpop.f32.mrb[0].mxu0
        %1200 = vmatprep.mubr.bf16.mxu0 0
        %1201 = vmatmul.mubr.bf16.gmra.mrb[0].mxu0 %v908
        %v1202 = vpop.f32.mrb[0].mxu0
        %v1203 = vadd.f32 %v530, %v1202
        %v1204 = vpop.f32.mrb[0].mxu0
        %v1205 = vpop.f32.mrb[0].mxu0
        %v1206 = vadd.f32 %v530, %v1205
        %v1207 = vpop.f32.mrb[0].mxu0
        %1208 = vmatprep.mubr.bf16.mxu0 0
        %1209 = vmatmul.mubr.bf16.gmra.mrb[0].mxu0 %v911
        %v1210 = vpop.f32.mrb[0].mxu0
        %v1211 = vadd.f32 %v530, %v1210
        %v1212 = vpop.f32.mrb[0].mxu0
        %v1213 = vpop.f32.mrb[0].mxu0
        %v1214 = vadd.f32 %v530, %v1213
        %v1215 = vpop.f32.mrb[0].mxu0
        %1216 = vmatprep.mubr.bf16.mxu0 0
        %1217 = vmatmul.mubr.bf16.gmra.mrb[0].mxu0 %v914
        %v1218 = vpop.f32.mrb[0].mxu0
        %v1219 = vadd.f32 %v530, %v1218
        %v1220 = vpop.f32.mrb[0].mxu0
        %v1221 = vpop.f32.mrb[0].mxu0
        %v1222 = vadd.f32 %v530, %v1221
        %v1223 = vpop.f32.mrb[0].mxu0
        %1224 = vmatprep.mubr.bf16.mxu0 0
        %1225 = vmatmul.mubr.bf16.gmra.mrb[0].mxu0 %v917
        %v1226 = vpop.f32.mrb[0].mxu0
        %v1227 = vadd.f32 %v530, %v1226
        %v1228 = vpop.f32.mrb[0].mxu0
        %v1229 = vpop.f32.mrb[0].mxu0
        %v1230 = vadd.f32 %v530, %v1229
        %v1231 = vpop.f32.mrb[0].mxu0
        %1232 = vmatprep.mubr.bf16.mxu0 0
        %1233 = vmatmul.mubr.bf16.gmra.mrb[0].mxu0 %v920
        %v1234 = vpop.f32.mrb[0].mxu0
        %v1235 = vadd.f32 %v530, %v1234
        %v1236 = vpop.f32.mrb[0].mxu0
        %v1237 = vpop.f32.mrb[0].mxu0
        %v1238 = vadd.f32 %v530, %v1237
        %v1239 = vpop.f32.mrb[0].mxu0
        %1240 = vmatprep.mubr.bf16.mxu0 0
        %1241 = vmatmul.mubr.bf16.gmra.mrb[0].mxu0 %v923
        %v1242 = vpop.f32.mrb[0].mxu0
        %v1243 = vadd.f32 %v530, %v1242
        %v1244 = vpop.f32.mrb[0].mxu0
        %v1245 = vpop.f32.mrb[0].mxu0
        %v1246 = vadd.f32 %v530, %v1245
        %v1247 = vpop.f32.mrb[0].mxu0
        %1248 = vmatprep.mubr.bf16.mxu0 0
        %1249 = vmatmul.mubr.bf16.gmra.mrb[0].mxu0 %v926
        %v1250 = vpop.f32.mrb[0].mxu0
        %v1251 = vadd.f32 %v530, %v1250
        %v1252 = vpop.f32.mrb[0].mxu0
        %v1253 = vpop.f32.mrb[0].mxu0
        %v1254 = vadd.f32 %v530, %v1253
        %v1255 = vpop.f32.mrb[0].mxu0
        %1256 = vmatprep.mubr.bf16.mxu0 0
        %1257 = vmatmul.mubr.bf16.gmra.mrb[0].mxu0 %v929
        %v1258 = vpop.f32.mrb[0].mxu0
        %v1259 = vadd.f32 %v530, %v1258
        %v1260 = vpop.f32.mrb[0].mxu0
        %v1261 = vpop.f32.mrb[0].mxu0
        %v1262 = vadd.f32 %v530, %v1261
        %v1263 = vpop.f32.mrb[0].mxu0
        %1264 = vmatprep.mubr.bf16.mxu0 0
        %1265 = vmatmul.mubr.bf16.gmra.mrb[0].mxu0 %v932
        %v1266 = vpop.f32.mrb[0].mxu0
        %v1267 = vadd.f32 %v530, %v1266
        %v1268 = vpop.f32.mrb[0].mxu0
        %v1269 = vpop.f32.mrb[0].mxu0
        %v1270 = vadd.f32 %v530, %v1269
        %v1271 = vpop.f32.mrb[0].mxu0
        %1272 = vmatprep.mubr.bf16.mxu0 0
        %1273 = vmatmul.mubr.bf16.gmra.mrb[0].mxu0 %v935
        %v1274 = vpop.f32.mrb[0].mxu0
        %v1275 = vadd.f32 %v530, %v1274
        %v1276 = vpop.f32.mrb[0].mxu0
        %v1277 = vpop.f32.mrb[0].mxu0
        %v1278 = vadd.f32 %v530, %v1277
        %v1279 = vpop.f32.mrb[0].mxu0
        %1280 = vmatprep.mubr.bf16.mxu0 0
        %1281 = vmatmul.mubr.bf16.gmra.mrb[0].mxu0 %v938
        %v1282 = vpop.f32.mrb[0].mxu0
        %v1283 = vadd.f32 %v530, %v1282
        %v1284 = vpop.f32.mrb[0].mxu0
        %v1285 = vpop.f32.mrb[0].mxu0
        %v1286 = vadd.f32 %v530, %v1285
        %v1287 = vpop.f32.mrb[0].mxu0
        %1288 = vmatprep.mubr.bf16.mxu0 0
        %1289 = vmatmul.mubr.bf16.gmra.mrb[0].mxu0 %v941
        %v1290 = vpop.f32.mrb[0].mxu0
        %v1291 = vadd.f32 %v530, %v1290
        %v1292 = vpop.f32.mrb[0].mxu0
        %v1293 = vpop.f32.mrb[0].mxu0
        %v1294 = vadd.f32 %v530, %v1293
        %v1295 = vpop.f32.mrb[0].mxu0
        %1296 = vmatprep.mubr.bf16.mxu0 0
        %1297 = vmatmul.mubr.bf16.gmra.mrb[0].mxu0 %v944
        %v1298 = vpop.f32.mrb[0].mxu0
        %v1299 = vadd.f32 %v530, %v1298
        %v1300 = vpop.f32.mrb[0].mxu0
        %v1301 = vpop.f32.mrb[0].mxu0
        %v1302 = vadd.f32 %v530, %v1301
        %v1303 = vpop.f32.mrb[0].mxu0
        %1304 = vmatprep.mubr.bf16.mxu0 0
        %1305 = vmatmul.mubr.bf16.gmra.mrb[0].mxu0 %v947
        %v1306 = vpop.f32.mrb[0].mxu0
        %v1307 = vadd.f32 %v530, %v1306
        %v1308 = vpop.f32.mrb[0].mxu0
        %v1309 = vpop.f32.mrb[0].mxu0
        %v1310 = vadd.f32 %v530, %v1309
        %v1311 = vpop.f32.mrb[0].mxu0
        %1312 = vmatprep.mubr.bf16.mxu0 0
        %1313 = vmatmul.mubr.bf16.gmra.mrb[0].mxu0 %v950
        %v1314 = vpop.f32.mrb[0].mxu0
        %v1315 = vadd.f32 %v530, %v1314
        %v1316 = vpop.f32.mrb[0].mxu0
        %v1317 = vpop.f32.mrb[0].mxu0
        %v1318 = vadd.f32 %v530, %v1317
        %v1319 = vpop.f32.mrb[0].mxu0
        %1320 = vmatprep.mubr.bf16.mxu0 0
        %1321 = vmatmul.mubr.bf16.gmra.mrb[0].mxu0 %v953
        %v1322 = vpop.f32.mrb[0].mxu0
        %v1323 = vadd.f32 %v530, %v1322
        %v1324 = vpop.f32.mrb[0].mxu0
        %v1325 = vpop.f32.mrb[0].mxu0
        %v1326 = vadd.f32 %v530, %v1325
        %v1327 = vpop.f32.mrb[0].mxu0
        %1328 = vmatprep.mubr.bf16.mxu0 0
        %1329 = vmatmul.mubr.bf16.gmra.mrb[0].mxu0 %v956
        %v1330 = vpop.f32.mrb[0].mxu0
        %v1331 = vadd.f32 %v530, %v1330
        %v1332 = vpop.f32.mrb[0].mxu0
        %v1333 = vpop.f32.mrb[0].mxu0
        %v1334 = vadd.f32 %v530, %v1333
        %v1335 = vpop.f32.mrb[0].mxu0
        %1336 = vmatprep.mubr.bf16.mxu0 0
        %1337 = vmatmul.mubr.bf16.gmra.mrb[0].mxu0 %v959
        %v1338 = vpop.f32.mrb[0].mxu0
        %v1339 = vadd.f32 %v530, %v1338
        %v1340 = vpop.f32.mrb[0].mxu0
        %v1341 = vpop.f32.mrb[0].mxu0
        %v1342 = vadd.f32 %v530, %v1341
        %v1343 = vpop.f32.mrb[0].mxu0
        %1344 = vmatprep.mubr.bf16.mxu0 0
        %1345 = vmatmul.mubr.bf16.gmra.mrb[0].mxu0 %v962
        %v1346 = vpop.f32.mrb[0].mxu0
        %v1347 = vadd.f32 %v530, %v1346
        %v1348 = vpop.f32.mrb[0].mxu0
        %v1349 = vpop.f32.mrb[0].mxu0
        %v1350 = vadd.f32 %v530, %v1349
        %v1351 = vpop.f32.mrb[0].mxu0
        %1352 = vmatprep.mubr.bf16.mxu0 0
        %1353 = vmatmul.mubr.bf16.gmra.mrb[0].mxu0 %v965
        %v1354 = vpop.f32.mrb[0].mxu0
        %v1355 = vadd.f32 %v530, %v1354
        %v1356 = vpop.f32.mrb[0].mxu0
        %v1357 = vpop.f32.mrb[0].mxu0
        %v1358 = vadd.f32 %v530, %v1357
        %v1359 = vpop.f32.mrb[0].mxu0
        %1360 = vmatprep.mubr.bf16.mxu0 0
        %1361 = vmatmul.mubr.bf16.gmra.mrb[0].mxu0 %v968
        %v1362 = vpop.f32.mrb[0].mxu0
        %v1363 = vadd.f32 %v530, %v1362
        %v1364 = vpop.f32.mrb[0].mxu0
        %v1365 = vpop.f32.mrb[0].mxu0
        %v1366 = vadd.f32 %v530, %v1365
        %v1367 = vpop.f32.mrb[0].mxu0
        %1368 = vmatprep.mubr.bf16.mxu0 0
        %1369 = vmatmul.mubr.bf16.gmra.mrb[0].mxu0 %v971
        %v1370 = vpop.f32.mrb[0].mxu0
        %v1371 = vadd.f32 %v530, %v1370
        %v1372 = vpop.f32.mrb[0].mxu0
        %v1373 = vpop.f32.mrb[0].mxu0
        %v1374 = vadd.f32 %v530, %v1373
        %v1375 = vpop.f32.mrb[0].mxu0
        %1376 = vmatprep.mubr.bf16.mxu0 0
        %1377 = vmatmul.mubr.bf16.gmra.mrb[0].mxu0 %v974
        %v1378 = vpop.f32.mrb[0].mxu0
        %v1379 = vadd.f32 %v530, %v1378
        %v1380 = vpop.f32.mrb[0].mxu0
        %v1381 = vpop.f32.mrb[0].mxu0
        %v1382 = vadd.f32 %v530, %v1381
        %v1383 = vpop.f32.mrb[0].mxu0
        %1384 = vmatprep.mubr.bf16.mxu0 0
        %1385 = vmatmul.mubr.bf16.gmra.mrb[0].mxu0 %v977
        %v1386 = vpop.f32.mrb[0].mxu0
        %v1387 = vadd.f32 %v530, %v1386
        %v1388 = vpop.f32.mrb[0].mxu0
        %v1389 = vpop.f32.mrb[0].mxu0
        %v1390 = vadd.f32 %v530, %v1389
        %v1391 = vpop.f32.mrb[0].mxu0
        %1392 = vmatprep.mubr.bf16.mxu0 0
        %1393 = vmatmul.mubr.bf16.gmra.mrb[0].mxu0 %v980
        %v1394 = vpop.f32.mrb[0].mxu0
        %v1395 = vadd.f32 %v530, %v1394
        %v1396 = vpop.f32.mrb[0].mxu0
        %v1397 = vpop.f32.mrb[0].mxu0
        %v1398 = vadd.f32 %v530, %v1397
        %v1399 = vpop.f32.mrb[0].mxu0
        %1400 = vmatprep.mubr.bf16.mxu0 0
        %1401 = vmatmul.mubr.bf16.gmra.mrb[0].mxu0 %v983
        %v1402 = vpop.f32.mrb[0].mxu0
        %v1403 = vadd.f32 %v530, %v1402
        %v1404 = vpop.f32.mrb[0].mxu0
        %v1405 = vpop.f32.mrb[0].mxu0
        %v1406 = vadd.f32 %v530, %v1405
        %v1407 = vpop.f32.mrb[0].mxu0
        %1408 = vmatprep.mubr.bf16.mxu0 0
        %1409 = vmatmul.mubr.bf16.gmra.mrb[0].mxu0 %v986
        %v1410 = vpop.f32.mrb[0].mxu0
        %v1411 = vadd.f32 %v530, %v1410
        %v1412 = vpop.f32.mrb[0].mxu0
        %v1413 = vpop.f32.mrb[0].mxu0
        %v1414 = vadd.f32 %v530, %v1413
        %v1415 = vpop.f32.mrb[0].mxu0
        %1416 = vmatprep.mubr.bf16.mxu0 0
        %1417 = vmatmul.mubr.bf16.gmra.mrb[0].mxu0 %v989
        %v1418 = vpop.f32.mrb[0].mxu0
        %v1419 = vadd.f32 %v530, %v1418
        %v1420 = vpop.f32.mrb[0].mxu0
        %v1421 = vpop.f32.mrb[0].mxu0
        %v1422 = vadd.f32 %v530, %v1421
        %v1423 = vpop.f32.mrb[0].mxu0
        %1424 = vmatprep.mubr.bf16.mxu0 0
        %1425 = vmatmul.mubr.bf16.gmra.mrb[0].mxu0 %v992
        %v1426 = vpop.f32.mrb[0].mxu0
        %v1427 = vadd.f32 %v530, %v1426
        %v1428 = vpop.f32.mrb[0].mxu0
        %v1429 = vpop.f32.mrb[0].mxu0
        %v1430 = vadd.f32 %v530, %v1429
        %v1431 = vpop.f32.mrb[0].mxu0
        %1432 = vmatprep.mubr.bf16.mxu0 0
        %1433 = vmatmul.mubr.bf16.gmra.mrb[0].mxu0 %v995
        %v1434 = vpop.f32.mrb[0].mxu0
        %v1435 = vadd.f32 %v530, %v1434
        %v1436 = vpop.f32.mrb[0].mxu0
        %v1437 = vpop.f32.mrb[0].mxu0
        %v1438 = vadd.f32 %v530, %v1437
        %v1439 = vpop.f32.mrb[0].mxu0
        %1440 = vmatprep.mubr.bf16.mxu0 0
        %1441 = vmatmul.mubr.bf16.gmra.mrb[0].mxu0 %v998
        %v1442 = vpop.f32.mrb[0].mxu0
        %v1443 = vadd.f32 %v530, %v1442
        %v1444 = vpop.f32.mrb[0].mxu0
        %v1445 = vpop.f32.mrb[0].mxu0
        %v1446 = vadd.f32 %v530, %v1445
        %v1447 = vpop.f32.mrb[0].mxu0
        %1448 = vmatprep.mubr.bf16.mxu0 0
        %1449 = vmatmul.mubr.bf16.gmra.mrb[0].mxu0 %v1001
        %v1450 = vpop.f32.mrb[0].mxu0
        %v1451 = vadd.f32 %v530, %v1450
        %v1452 = vpop.f32.mrb[0].mxu0
        %v1453 = vpop.f32.mrb[0].mxu0
        %v1454 = vadd.f32 %v530, %v1453
        %v1455 = vpop.f32.mrb[0].mxu0
        %1456 = vmatprep.mubr.bf16.mxu0 0
        %1457 = vmatmul.mubr.bf16.gmra.mrb[0].mxu0 %v1004
        %v1458 = vpop.f32.mrb[0].mxu0
        %v1459 = vadd.f32 %v530, %v1458
        %v1460 = vpop.f32.mrb[0].mxu0
        %v1461 = vpop.f32.mrb[0].mxu0
        %v1462 = vadd.f32 %v530, %v1461
        %v1463 = vpop.f32.mrb[0].mxu0
        %1464 = vmatprep.mubr.bf16.mxu0 0
        %1465 = vmatmul.mubr.bf16.gmra.mrb[0].mxu0 %v1007
        %v1466 = vpop.f32.mrb[0].mxu0
        %v1467 = vadd.f32 %v530, %v1466
        %v1468 = vpop.f32.mrb[0].mxu0
        %v1469 = vpop.f32.mrb[0].mxu0
        %v1470 = vadd.f32 %v530, %v1469
        %v1471 = vpop.f32.mrb[0].mxu0
        %1472 = vmatprep.mubr.bf16.mxu0 0
        %1473 = vmatmul.mubr.bf16.gmra.mrb[0].mxu0 %v1010
        %v1474 = vpop.f32.mrb[0].mxu0
        %v1475 = vadd.f32 %v530, %v1474
        %v1476 = vpop.f32.mrb[0].mxu0
        %v1477 = vpop.f32.mrb[0].mxu0
        %v1478 = vadd.f32 %v530, %v1477
        %v1479 = vpop.f32.mrb[0].mxu0
        %1480 = vmatprep.mubr.bf16.mxu0 0
        %1481 = vmatmul.mubr.bf16.gmra.mrb[0].mxu0 %v1013
        %v1482 = vpop.f32.mrb[0].mxu0
        %v1483 = vadd.f32 %v530, %v1482
        %v1484 = vpop.f32.mrb[0].mxu0
        %v1485 = vpop.f32.mrb[0].mxu0
        %v1486 = vadd.f32 %v530, %v1485
        %v1487 = vpop.f32.mrb[0].mxu0
        %1488 = vmatprep.mubr.bf16.mxu0 0
        %1489 = vmatmul.mubr.bf16.gmra.mrb[0].mxu0 %v1016
        %v1490 = vpop.f32.mrb[0].mxu0
        %v1491 = vadd.f32 %v530, %v1490
        %v1492 = vpop.f32.mrb[0].mxu0
        %v1493 = vpop.f32.mrb[0].mxu0
        %v1494 = vadd.f32 %v530, %v1493
        %v1495 = vpop.f32.mrb[0].mxu0
        %1496 = vmatprep.mubr.bf16.mxu0 0
        %1497 = vmatmul.mubr.bf16.gmra.mrb[0].mxu0 %v1019
        %v1498 = vpop.f32.mrb[0].mxu0
        %v1499 = vadd.f32 %v530, %v1498
        %v1500 = vpop.f32.mrb[0].mxu0
        %v1501 = vpop.f32.mrb[0].mxu0
        %v1502 = vadd.f32 %v530, %v1501
        %v1503 = vpop.f32.mrb[0].mxu0
        %1504 = vmatprep.mubr.bf16.mxu0 0
        %1505 = vmatmul.mubr.bf16.gmra.mrb[0].mxu0 %v1022
        %v1506 = vpop.f32.mrb[0].mxu0
        %v1507 = vadd.f32 %v530, %v1506
        %v1508 = vpop.f32.mrb[0].mxu0
        %v1509 = vpop.f32.mrb[0].mxu0
        %v1510 = vadd.f32 %v530, %v1509
        %v1511 = vpop.f32.mrb[0].mxu0
        %1512 = vmatprep.mubr.bf16.mxu0 0
        %1513 = vmatmul.mubr.bf16.gmra.mrb[0].mxu0 %v1025
        %v1514 = vpop.f32.mrb[0].mxu0
        %v1515 = vadd.f32 %v530, %v1514
        %v1516 = vpop.f32.mrb[0].mxu0
        %v1517 = vpop.f32.mrb[0].mxu0
        %v1518 = vadd.f32 %v530, %v1517
        %v1519 = vpop.f32.mrb[0].mxu0
        %1520 = vmatprep.mubr.bf16.mxu0 0
        %1521 = vmatmul.mubr.bf16.gmra.mrb[0].mxu0 %v1028
        %v1522 = vpop.f32.mrb[0].mxu0
        %v1523 = vadd.f32 %v530, %v1522
        %v1524 = vpop.f32.mrb[0].mxu0
        %v1525 = vpop.f32.mrb[0].mxu0
        %v1526 = vadd.f32 %v530, %v1525
        %v1527 = vpop.f32.mrb[0].mxu0
        %1528 = vmatprep.mubr.bf16.mxu0 0
        %1529 = vmatmul.mubr.bf16.gmra.mrb[0].mxu0 %v1031
        %v1530 = vpop.f32.mrb[0].mxu0
        %v1531 = vadd.f32 %v530, %v1530
        %v1532 = vpop.f32.mrb[0].mxu0
        %v1533 = vpop.f32.mrb[0].mxu0
        %v1534 = vadd.f32 %v530, %v1533
        %v1535 = vpop.f32.mrb[0].mxu0
        %1536 = vmatprep.mubr.bf16.mxu0 0
        %1537 = vmatmul.mubr.bf16.gmra.mrb[0].mxu0 %v1034
        %v1538 = vpop.f32.mrb[0].mxu0
        %v1539 = vadd.f32 %v530, %v1538
        %v1540 = vpop.f32.mrb[0].mxu0
        %v1541 = vpop.f32.mrb[0].mxu0
        %v1542 = vadd.f32 %v530, %v1541
        %v1543 = vpop.f32.mrb[0].mxu0
        %1544 = vmatprep.mubr.bf16.mxu0 0
        %1545 = vmatmul.mubr.bf16.gmra.mrb[0].mxu0 %v1037
        %v1546 = vpop.f32.mrb[0].mxu0
        %v1547 = vadd.f32 %v530, %v1546
        %v1548 = vpop.f32.mrb[0].mxu0
        %v1549 = vpop.f32.mrb[0].mxu0
        %v1550 = vadd.f32 %v530, %v1549
        %v1551 = vpop.f32.mrb[0].mxu0
        %1552 = vmatprep.mubr.bf16.mxu0 0
        %1553 = vmatmul.mubr.bf16.gmra.mrb[0].mxu0 %v1040
        %v1554 = vpop.f32.mrb[0].mxu0
        %v1555 = vadd.f32 %v530, %v1554
        %v1556 = vpop.f32.mrb[0].mxu0
        %v1557 = vpop.f32.mrb[0].mxu0
        %v1558 = vadd.f32 %v530, %v1557
        %v1559 = vpop.f32.mrb[0].mxu0
        %1560 = vmatprep.mubr.bf16.mxu0 0
        %1561 = vmatmul.mubr.bf16.gmra.mrb[0].mxu0 %v1043
        %v1562 = vpop.f32.mrb[0].mxu0
        %v1563 = vadd.f32 %v530, %v1562
        %v1564 = vpop.f32.mrb[0].mxu0
        %v1565 = vpop.f32.mrb[0].mxu0
        %v1566 = vadd.f32 %v530, %v1565
        %v1567 = vpop.f32.mrb[0].mxu0
        %1568 = vmatprep.mubr.bf16.mxu0 0
        %1569 = vmatmul.mubr.bf16.gmra.mrb[0].mxu0 %v1046
        %v1570 = vpop.f32.mrb[0].mxu0
        %v1571 = vadd.f32 %v530, %v1570
        %v1572 = vpop.f32.mrb[0].mxu0
        %v1573 = vpop.f32.mrb[0].mxu0
        %v1574 = vadd.f32 %v530, %v1573
        %v1575 = vpop.f32.mrb[0].mxu0
        %1576 = vmatprep.mubr.bf16.mxu0 0
        %1577 = vmatmul.mubr.bf16.gmra.mrb[0].mxu0 %v1049
        %v1578 = vpop.f32.mrb[0].mxu0
        %v1579 = vadd.f32 %v530, %v1578
        %v1580 = vpop.f32.mrb[0].mxu0
        %v1581 = vpop.f32.mrb[0].mxu0
        %v1582 = vadd.f32 %v530, %v1581
        %v1583 = vpop.f32.mrb[0].mxu0
        %1584 = vmatprep.mubr.bf16.mxu0 0
        %1585 = vmatmul.mubr.bf16.gmra.mrb[0].mxu0 %v1052
        %v1586 = vpop.f32.mrb[0].mxu0
        %v1587 = vadd.f32 %v530, %v1586
        %v1588 = vpop.f32.mrb[0].mxu0
        %v1589 = vpop.f32.mrb[0].mxu0
        %v1590 = vadd.f32 %v530, %v1589
        %v1591 = vpop.f32.mrb[0].mxu0
        %1592 = vmatprep.mubr.bf16.mxu0 0
        %1593 = vmatmul.mubr.bf16.gmra.mrb[0].mxu0 %v1055
        %v1594 = vpop.f32.mrb[0].mxu0
        %v1595 = vadd.f32 %v530, %v1594
        %v1596 = vpop.f32.mrb[0].mxu0
        %v1597 = vpop.f32.mrb[0].mxu0
        %v1598 = vadd.f32 %v530, %v1597
        %v1599 = vpop.f32.mrb[0].mxu0
        %1600 = vmatprep.mubr.bf16.mxu0 0
        %1601 = vmatmul.mubr.bf16.gmra.mrb[0].mxu0 %v1058
        %v1602 = vpop.f32.mrb[0].mxu0
        %v1603 = vadd.f32 %v530, %v1602
        %v1604 = vpop.f32.mrb[0].mxu0
        %v1605 = vpop.f32.mrb[0].mxu0
        %v1606 = vadd.f32 %v530, %v1605
        %v1607 = vpop.f32.mrb[0].mxu0
        %1608 = vdwg.mxu0
        %v1609 = vmax.f32 %v1099, 0.0
        %v1610 = vmax.f32 %v1102, 0.0
        %v1611 = vmax.f32 %v1107, 0.0
        %v1612 = vmax.f32 %v1110, 0.0
        %v1613 = vmax.f32 %v1115, 0.0
        %v1614 = vmax.f32 %v1118, 0.0
        %v1615 = vmax.f32 %v1123, 0.0
        %v1616 = vmax.f32 %v1126, 0.0
        %v1617 = vmax.f32 %v1131, 0.0
        %v1618 = vmax.f32 %v1134, 0.0
        %v1619 = vmax.f32 %v1139, 0.0
        %v1620 = vmax.f32 %v1142, 0.0
        %v1621 = vmax.f32 %v1147, 0.0
        %v1622 = vmax.f32 %v1150, 0.0
        %v1623 = vmax.f32 %v1155, 0.0
        %v1624 = vmax.f32 %v1158, 0.0
        %v1625 = vmax.f32 %v1163, 0.0
        %v1626 = vmax.f32 %v1166, 0.0
        %v1627 = vmax.f32 %v1171, 0.0
        %v1628 = vmax.f32 %v1174, 0.0
        %v1629 = vmax.f32 %v1179, 0.0
        %v1630 = vmax.f32 %v1182, 0.0
        %v1631 = vmax.f32 %v1187, 0.0
        %v1632 = vmax.f32 %v1190, 0.0
        %v1633 = vmax.f32 %v1195, 0.0
        %v1634 = vmax.f32 %v1198, 0.0
        %v1635 = vmax.f32 %v1203, 0.0
        %v1636 = vmax.f32 %v1206, 0.0
        %v1637 = vmax.f32 %v1211, 0.0
        %v1638 = vmax.f32 %v1214, 0.0
        %v1639 = vmax.f32 %v1219, 0.0
        %v1640 = vmax.f32 %v1222, 0.0
        %v1641 = vmax.f32 %v1227, 0.0
        %v1642 = vmax.f32 %v1230, 0.0
        %v1643 = vmax.f32 %v1235, 0.0
        %v1644 = vmax.f32 %v1238, 0.0
        %v1645 = vmax.f32 %v1243, 0.0
        %v1646 = vmax.f32 %v1246, 0.0
        %v1647 = vmax.f32 %v1251, 0.0
        %v1648 = vmax.f32 %v1254, 0.0
        %v1649 = vmax.f32 %v1259, 0.0
        %v1650 = vmax.f32 %v1262, 0.0
        %v1651 = vmax.f32 %v1267, 0.0
        %v1652 = vmax.f32 %v1270, 0.0
        %v1653 = vmax.f32 %v1275, 0.0
        %v1654 = vmax.f32 %v1278, 0.0
        %v1655 = vmax.f32 %v1283, 0.0
        %v1656 = vmax.f32 %v1286, 0.0
        %v1657 = vmax.f32 %v1291, 0.0
        %v1658 = vmax.f32 %v1294, 0.0
        %v1659 = vmax.f32 %v1299, 0.0
        %v1660 = vmax.f32 %v1302, 0.0
        %v1661 = vmax.f32 %v1307, 0.0
        %v1662 = vmax.f32 %v1310, 0.0
        %v1663 = vmax.f32 %v1315, 0.0
        %v1664 = vmax.f32 %v1318, 0.0
        %v1665 = vmax.f32 %v1323, 0.0
        %v1666 = vmax.f32 %v1326, 0.0
        %v1667 = vmax.f32 %v1331, 0.0
        %v1668 = vmax.f32 %v1334, 0.0
        %v1669 = vmax.f32 %v1339, 0.0
        %v1670 = vmax.f32 %v1342, 0.0
        %v1671 = vmax.f32 %v1347, 0.0
        %v1672 = vmax.f32 %v1350, 0.0
        %v1673 = vmax.f32 %v1355, 0.0
        %v1674 = vmax.f32 %v1358, 0.0
        %v1675 = vmax.f32 %v1363, 0.0
        %v1676 = vmax.f32 %v1366, 0.0
        %v1677 = vmax.f32 %v1371, 0.0
        %v1678 = vmax.f32 %v1374, 0.0
        %v1679 = vmax.f32 %v1379, 0.0
        %v1680 = vmax.f32 %v1382, 0.0
        %v1681 = vmax.f32 %v1387, 0.0
        %v1682 = vmax.f32 %v1390, 0.0
        %v1683 = vmax.f32 %v1395, 0.0
        %v1684 = vmax.f32 %v1398, 0.0
        %v1685 = vmax.f32 %v1403, 0.0
        %v1686 = vmax.f32 %v1406, 0.0
        %v1687 = vmax.f32 %v1411, 0.0
        %v1688 = vmax.f32 %v1414, 0.0
        %v1689 = vmax.f32 %v1419, 0.0
        %v1690 = vmax.f32 %v1422, 0.0
        %v1691 = vmax.f32 %v1427, 0.0
        %v1692 = vmax.f32 %v1430, 0.0
        %v1693 = vmax.f32 %v1435, 0.0
        %v1694 = vmax.f32 %v1438, 0.0
        %v1695 = vmax.f32 %v1443, 0.0
        %v1696 = vmax.f32 %v1446, 0.0
        %v1697 = vmax.f32 %v1451, 0.0
        %v1698 = vmax.f32 %v1454, 0.0
        %v1699 = vmax.f32 %v1459, 0.0
        %v1700 = vmax.f32 %v1462, 0.0
        %v1701 = vmax.f32 %v1467, 0.0
        %v1702 = vmax.f32 %v1470, 0.0
        %v1703 = vmax.f32 %v1475, 0.0
        %v1704 = vmax.f32 %v1478, 0.0
        %v1705 = vmax.f32 %v1483, 0.0
        %v1706 = vmax.f32 %v1486, 0.0
        %v1707 = vmax.f32 %v1491, 0.0
        %v1708 = vmax.f32 %v1494, 0.0
        %v1709 = vmax.f32 %v1499, 0.0
        %v1710 = vmax.f32 %v1502, 0.0
        %v1711 = vmax.f32 %v1507, 0.0
        %v1712 = vmax.f32 %v1510, 0.0
        %v1713 = vmax.f32 %v1515, 0.0
        %v1714 = vmax.f32 %v1518, 0.0
        %v1715 = vmax.f32 %v1523, 0.0
        %v1716 = vmax.f32 %v1526, 0.0
        %v1717 = vmax.f32 %v1531, 0.0
        %v1718 = vmax.f32 %v1534, 0.0
        %v1719 = vmax.f32 %v1539, 0.0
        %v1720 = vmax.f32 %v1542, 0.0
        %v1721 = vmax.f32 %v1547, 0.0
        %v1722 = vmax.f32 %v1550, 0.0
        %v1723 = vmax.f32 %v1555, 0.0
        %v1724 = vmax.f32 %v1558, 0.0
        %v1725 = vmax.f32 %v1563, 0.0
        %v1726 = vmax.f32 %v1566, 0.0
        %v1727 = vmax.f32 %v1571, 0.0
        %v1728 = vmax.f32 %v1574, 0.0
        %v1729 = vmax.f32 %v1579, 0.0
        %v1730 = vmax.f32 %v1582, 0.0
        %v1731 = vmax.f32 %v1587, 0.0
        %v1732 = vmax.f32 %v1590, 0.0
        %v1733 = vmax.f32 %v1595, 0.0
        %v1734 = vmax.f32 %v1598, 0.0
        %v1735 = vmax.f32 %v1603, 0.0
        %v1736 = vmax.f32 %v1606, 0.0
        %v1737 = vpack.c.bf16 %v1610, %v1609
        %v1738 = vpack.c.bf16 %v1612, %v1611
        %v1739 = vpack.c.bf16 %v1614, %v1613
        %v1740 = vpack.c.bf16 %v1616, %v1615
        %v1741 = vpack.c.bf16 %v1618, %v1617
        %v1742 = vpack.c.bf16 %v1620, %v1619
        %v1743 = vpack.c.bf16 %v1622, %v1621
        %v1744 = vpack.c.bf16 %v1624, %v1623
        %v1745 = vpack.c.bf16 %v1626, %v1625
        %v1746 = vpack.c.bf16 %v1628, %v1627
        %v1747 = vpack.c.bf16 %v1630, %v1629
        %v1748 = vpack.c.bf16 %v1632, %v1631
        %v1749 = vpack.c.bf16 %v1634, %v1633
        %v1750 = vpack.c.bf16 %v1636, %v1635
        %v1751 = vpack.c.bf16 %v1638, %v1637
        %v1752 = vpack.c.bf16 %v1640, %v1639
        %v1753 = vpack.c.bf16 %v1642, %v1641
        %v1754 = vpack.c.bf16 %v1644, %v1643
        %v1755 = vpack.c.bf16 %v1646, %v1645
        %v1756 = vpack.c.bf16 %v1648, %v1647
        %v1757 = vpack.c.bf16 %v1650, %v1649
        %v1758 = vpack.c.bf16 %v1652, %v1651
        %v1759 = vpack.c.bf16 %v1654, %v1653
        %v1760 = vpack.c.bf16 %v1656, %v1655
        %v1761 = vpack.c.bf16 %v1658, %v1657
        %v1762 = vpack.c.bf16 %v1660, %v1659
        %v1763 = vpack.c.bf16 %v1662, %v1661
        %v1764 = vpack.c.bf16 %v1664, %v1663
        %v1765 = vpack.c.bf16 %v1666, %v1665
        %v1766 = vpack.c.bf16 %v1668, %v1667
        %v1767 = vpack.c.bf16 %v1670, %v1669
        %v1768 = vpack.c.bf16 %v1672, %v1671
        %v1769 = vpack.c.bf16 %v1674, %v1673
        %v1770 = vpack.c.bf16 %v1676, %v1675
        %v1771 = vpack.c.bf16 %v1678, %v1677
        %v1772 = vpack.c.bf16 %v1680, %v1679
        %v1773 = vpack.c.bf16 %v1682, %v1681
        %v1774 = vpack.c.bf16 %v1684, %v1683
        %v1775 = vpack.c.bf16 %v1686, %v1685
        %v1776 = vpack.c.bf16 %v1688, %v1687
        %v1777 = vpack.c.bf16 %v1690, %v1689
        %v1778 = vpack.c.bf16 %v1692, %v1691
        %v1779 = vpack.c.bf16 %v1694, %v1693
        %v1780 = vpack.c.bf16 %v1696, %v1695
        %v1781 = vpack.c.bf16 %v1698, %v1697
        %v1782 = vpack.c.bf16 %v1700, %v1699
        %v1783 = vpack.c.bf16 %v1702, %v1701
        %v1784 = vpack.c.bf16 %v1704, %v1703
        %v1785 = vpack.c.bf16 %v1706, %v1705
        %v1786 = vpack.c.bf16 %v1708, %v1707
        %v1787 = vpack.c.bf16 %v1710, %v1709
        %v1788 = vpack.c.bf16 %v1712, %v1711
        %v1789 = vpack.c.bf16 %v1714, %v1713
        %v1790 = vpack.c.bf16 %v1716, %v1715
        %v1791 = vpack.c.bf16 %v1718, %v1717
        %v1792 = vpack.c.bf16 %v1720, %v1719
        %v1793 = vpack.c.bf16 %v1722, %v1721
        %v1794 = vpack.c.bf16 %v1724, %v1723
        %v1795 = vpack.c.bf16 %v1726, %v1725
        %v1796 = vpack.c.bf16 %v1728, %v1727
        %v1797 = vpack.c.bf16 %v1730, %v1729
        %v1798 = vpack.c.bf16 %v1732, %v1731
        %v1799 = vpack.c.bf16 %v1734, %v1733
        %v1800 = vpack.c.bf16 %v1736, %v1735
        %v1801 = vld [vmem:[%s4] sm:$0xff]
        %v1802 = vld [vmem:[%s4 + $0x8] sm:$0xff]
        %v1803 = vld [vmem:[%s4 + $0x10] sm:$0xff]
        %v1804 = vld [vmem:[%s4 + $0x18] sm:$0xff]
        %v1805 = vld [vmem:[%s4 + $0x20] sm:$0xff]
        %v1806 = vld [vmem:[%s4 + $0x28] sm:$0xff]
        %v1807 = vld [vmem:[%s4 + $0x30] sm:$0xff]
        %v1808 = vld [vmem:[%s4 + $0x38] sm:$0xff]
        %v1809 = vld [vmem:[%s4 + $0x40] sm:$0xff]
        %v1810 = vld [vmem:[%s4 + $0x48] sm:$0xff]
        %v1811 = vld [vmem:[%s4 + $0x50] sm:$0xff]
        %v1812 = vld [vmem:[%s4 + $0x58] sm:$0xff]
        %v1813 = vld [vmem:[%s4 + $0x60] sm:$0xff]
        %v1814 = vld [vmem:[%s4 + $0x68] sm:$0xff]
        %v1815 = vld [vmem:[%s4 + $0x70] sm:$0xff]
        %v1816 = vld [vmem:[%s4 + $0x78] sm:$0xff]
        %v1817 = vld [vmem:[%s4 + $0x80] sm:$0xff]
        %v1818 = vld [vmem:[%s4 + $0x88] sm:$0xff]
        %v1819 = vld [vmem:[%s4 + $0x90] sm:$0xff]
        %v1820 = vld [vmem:[%s4 + $0x98] sm:$0xff]
        %v1821 = vld [vmem:[%s4 + $0xa0] sm:$0xff]
        %v1822 = vld [vmem:[%s4 + $0xa8] sm:$0xff]
        %v1823 = vld [vmem:[%s4 + $0xb0] sm:$0xff]
        %v1824 = vld [vmem:[%s4 + $0xb8] sm:$0xff]
        %v1825 = vld [vmem:[%s4 + $0xc0] sm:$0xff]
        %v1826 = vld [vmem:[%s4 + $0xc8] sm:$0xff]
        %v1827 = vld [vmem:[%s4 + $0xd0] sm:$0xff]
        %v1828 = vld [vmem:[%s4 + $0xd8] sm:$0xff]
        %v1829 = vld [vmem:[%s4 + $0xe0] sm:$0xff]
        %v1830 = vld [vmem:[%s4 + $0xe8] sm:$0xff]
        %v1861 = vunpack.c.l.b16 %v1801
        %v1862 = vunpack.c.h.b16 %v1801
        %v1863 = vunpack.c.l.b16 %v1802
        %v1864 = vunpack.c.h.b16 %v1802
        %v1865 = vunpack.c.l.b16 %v1803
        %v1866 = vunpack.c.h.b16 %v1803
        %v1867 = vunpack.c.l.b16 %v1804
        %v1868 = vunpack.c.h.b16 %v1804
        %v1869 = vunpack.c.l.b16 %v1805
        %v1870 = vunpack.c.h.b16 %v1805
        %v1871 = vunpack.c.l.b16 %v1806
        %v1872 = vunpack.c.h.b16 %v1806
        %v1873 = vunpack.c.l.b16 %v1807
        %v1874 = vunpack.c.h.b16 %v1807
        %v1875 = vunpack.c.l.b16 %v1808
        %v1876 = vunpack.c.h.b16 %v1808
        %v1877 = vunpack.c.l.b16 %v1809
        %v1878 = vunpack.c.h.b16 %v1809
        %v1879 = vunpack.c.l.b16 %v1810
        %v1880 = vunpack.c.h.b16 %v1810
        %v1881 = vunpack.c.l.b16 %v1811
        %v1882 = vunpack.c.h.b16 %v1811
        %v1883 = vunpack.c.l.b16 %v1812
        %v1884 = vunpack.c.h.b16 %v1812
        %v1885 = vunpack.c.l.b16 %v1813
        %v1886 = vunpack.c.h.b16 %v1813
        %v1887 = vunpack.c.l.b16 %v1814
        %v1888 = vunpack.c.h.b16 %v1814
        %v1889 = vunpack.c.l.b16 %v1815
        %v1890 = vunpack.c.h.b16 %v1815
        %v1891 = vunpack.c.l.b16 %v1816
        %v1892 = vunpack.c.h.b16 %v1816
        %v1893 = vunpack.c.l.b16 %v1817
        %v1894 = vunpack.c.h.b16 %v1817
        %v1895 = vunpack.c.l.b16 %v1818
        %v1896 = vunpack.c.h.b16 %v1818
        %v1897 = vunpack.c.l.b16 %v1819
        %v1898 = vunpack.c.h.b16 %v1819
        %v1899 = vunpack.c.l.b16 %v1820
        %v1900 = vunpack.c.h.b16 %v1820
        %v1901 = vunpack.c.l.b16 %v1821
        %v1902 = vunpack.c.h.b16 %v1821
        %v1903 = vunpack.c.l.b16 %v1822
        %v1904 = vunpack.c.h.b16 %v1822
        %v1905 = vunpack.c.l.b16 %v1823
        %v1906 = vunpack.c.h.b16 %v1823
        %v1907 = vunpack.c.l.b16 %v1824
        %v1908 = vunpack.c.h.b16 %v1824
        %v1909 = vunpack.c.l.b16 %v1825
        %v1910 = vunpack.c.h.b16 %v1825
        %v1911 = vunpack.c.l.b16 %v1826
        %v1912 = vunpack.c.h.b16 %v1826
        %v1913 = vunpack.c.l.b16 %v1827
        %v1914 = vunpack.c.h.b16 %v1827
        %v1915 = vunpack.c.l.b16 %v1828
        %v1916 = vunpack.c.h.b16 %v1828
        %v1917 = vunpack.c.l.b16 %v1829
        %v1918 = vunpack.c.h.b16 %v1829
        %v1919 = vunpack.c.l.b16 %v1830
        %v1920 = vunpack.c.h.b16 %v1830
        %v1921 = vpack.c.b16 %v1863, %v1861
        %v1922 = vpack.c.b16 %v1864, %v1862
        %v1923 = vpack.c.b16 %v1867, %v1865
        %v1924 = vpack.c.b16 %v1868, %v1866
        %v1925 = vpack.c.b16 %v1871, %v1869
        %v1926 = vpack.c.b16 %v1872, %v1870
        %v1927 = vpack.c.b16 %v1875, %v1873
        %v1928 = vpack.c.b16 %v1876, %v1874
        %v1929 = vpack.c.b16 %v1879, %v1877
        %v1930 = vpack.c.b16 %v1880, %v1878
        %v1931 = vpack.c.b16 %v1883, %v1881
        %v1932 = vpack.c.b16 %v1884, %v1882
        %v1933 = vpack.c.b16 %v1887, %v1885
        %v1934 = vpack.c.b16 %v1888, %v1886
        %v1935 = vpack.c.b16 %v1891, %v1889
        %v1936 = vpack.c.b16 %v1892, %v1890
        %v1937 = vpack.c.b16 %v1895, %v1893
        %v1938 = vpack.c.b16 %v1896, %v1894
        %v1939 = vpack.c.b16 %v1899, %v1897
        %v1940 = vpack.c.b16 %v1900, %v1898
        %v1941 = vpack.c.b16 %v1903, %v1901
        %v1942 = vpack.c.b16 %v1904, %v1902
        %v1943 = vpack.c.b16 %v1907, %v1905
        %v1944 = vpack.c.b16 %v1908, %v1906
        %v1945 = vpack.c.b16 %v1911, %v1909
        %v1946 = vpack.c.b16 %v1912, %v1910
        %v1947 = vpack.c.b16 %v1915, %v1913
        %v1948 = vpack.c.b16 %v1916, %v1914
        %v1949 = vpack.c.b16 %v1919, %v1917
        %v1950 = vpack.c.b16 %v1920, %v1918
        %1981 = vmatprep.subr.bf16.mxu0 0
        %1982 = vmatpush1.bf16.msra.mxu0 %v1737
        %1983 = vmatprep.subr.bf16.mxu0 0
        %1984 = vmatpush1.bf16.msra.mxu0 %v1738
        %1985 = vmatprep.subr.bf16.mxu0 0
        %1986 = vmatpush1.bf16.msra.mxu0 %v1739
        %1987 = vmatprep.subr.bf16.mxu0 0
        %1988 = vmatpush1.bf16.msra.mxu0 %v1740
        %1989 = vmatprep.subr.bf16.mxu0 0
        %1990 = vmatpush1.bf16.msra.mxu0 %v1741
        %1991 = vmatprep.subr.bf16.mxu0 0
        %1992 = vmatpush1.bf16.msra.mxu0 %v1742
        %1993 = vmatprep.subr.bf16.mxu0 0
        %1994 = vmatpush1.bf16.msra.mxu0 %v1743
        %1995 = vmatprep.subr.bf16.mxu0 0
        %1996 = vmatpush1.bf16.msra.mxu0 %v1744
        %1997 = vmatprep.subr.bf16.mxu0 0
        %1998 = vmatpush1.bf16.msra.mxu0 %v1745
        %1999 = vmatprep.subr.bf16.mxu0 0
        %2000 = vmatpush1.bf16.msra.mxu0 %v1746
        %2001 = vmatprep.subr.bf16.mxu0 0
        %2002 = vmatpush1.bf16.msra.mxu0 %v1747
        %2003 = vmatprep.subr.bf16.mxu0 0
        %2004 = vmatpush1.bf16.msra.mxu0 %v1748
        %2005 = vmatprep.subr.bf16.mxu0 0
        %2006 = vmatpush1.bf16.msra.mxu0 %v1749
        %2007 = vmatprep.subr.bf16.mxu0 0
        %2008 = vmatpush1.bf16.msra.mxu0 %v1750
        %2009 = vmatprep.subr.bf16.mxu0 0
        %2010 = vmatpush1.bf16.msra.mxu0 %v1751
        %2011 = vmatprep.subr.bf16.mxu0 0
        %2012 = vmatpush1.bf16.msra.mxu0 %v1752
        %2013 = vmatprep.mubr.bf16.mxu0 %v1922
        %2014 = vmatmul.mubr.bf16.gmra.mrb[0].mxu0 %v1921
        %v2015 = vpop.f32.mrb[0].mxu0
        %v2016 = vadd.f32 0.0, %v2015
        %v2017 = vpop.f32.mrb[0].mxu0
        %v2018 = vpop.f32.mrb[0].mxu0
        %v2019 = vadd.f32 0.0, %v2018
        %v2020 = vpop.f32.mrb[0].mxu0
        %2021 = vmatprep.mubr.bf16.mxu0 %v1924
        %2022 = vmatmul.mubr.bf16.gmra.mrb[0].mxu0 %v1923
        %v2023 = vpop.f32.mrb[0].mxu0
        %v2024 = vadd.f32 0.0, %v2023
        %v2025 = vpop.f32.mrb[0].mxu0
        %v2026 = vpop.f32.mrb[0].mxu0
        %v2027 = vadd.f32 0.0, %v2026
        %v2028 = vpop.f32.mrb[0].mxu0
        %2029 = vmatprep.mubr.bf16.mxu0 %v1926
        %2030 = vmatmul.mubr.bf16.gmra.mrb[0].mxu0 %v1925
        %v2031 = vpop.f32.mrb[0].mxu0
        %v2032 = vadd.f32 0.0, %v2031
        %v2033 = vpop.f32.mrb[0].mxu0
        %v2034 = vpop.f32.mrb[0].mxu0
        %v2035 = vadd.f32 0.0, %v2034
        %v2036 = vpop.f32.mrb[0].mxu0
        %2037 = vmatprep.mubr.bf16.mxu0 %v1928
        %2038 = vmatmul.mubr.bf16.gmra.mrb[0].mxu0 %v1927
        %v2039 = vpop.f32.mrb[0].mxu0
        %v2040 = vadd.f32 0.0, %v2039
        %v2041 = vpop.f32.mrb[0].mxu0
        %v2042 = vpop.f32.mrb[0].mxu0
        %v2043 = vadd.f32 0.0, %v2042
        %v2044 = vpop.f32.mrb[0].mxu0
        %2045 = vmatprep.mubr.bf16.mxu0 %v1930
        %2046 = vmatmul.mubr.bf16.gmra.mrb[0].mxu0 %v1929
        %v2047 = vpop.f32.mrb[0].mxu0
        %v2048 = vadd.f32 0.0, %v2047
        %v2049 = vpop.f32.mrb[0].mxu0
        %v2050 = vpop.f32.mrb[0].mxu0
        %v2051 = vadd.f32 0.0, %v2050
        %v2052 = vpop.f32.mrb[0].mxu0
        %2053 = vmatprep.mubr.bf16.mxu0 %v1932
        %2054 = vmatmul.mubr.bf16.gmra.mrb[0].mxu0 %v1931
        %v2055 = vpop.f32.mrb[0].mxu0
        %v2056 = vadd.f32 0.0, %v2055
        %v2057 = vpop.f32.mrb[0].mxu0
        %v2058 = vpop.f32.mrb[0].mxu0
        %v2059 = vadd.f32 0.0, %v2058
        %v2060 = vpop.f32.mrb[0].mxu0
        %2061 = vmatprep.mubr.bf16.mxu0 %v1934
        %2062 = vmatmul.mubr.bf16.gmra.mrb[0].mxu0 %v1933
        %v2063 = vpop.f32.mrb[0].mxu0
        %v2064 = vadd.f32 0.0, %v2063
        %v2065 = vpop.f32.mrb[0].mxu0
        %v2066 = vpop.f32.mrb[0].mxu0
        %v2067 = vadd.f32 0.0, %v2066
        %v2068 = vpop.f32.mrb[0].mxu0
        %2069 = vmatprep.mubr.bf16.mxu0 %v1936
        %2070 = vmatmul.mubr.bf16.gmra.mrb[0].mxu0 %v1935
        %v2071 = vpop.f32.mrb[0].mxu0
        %v2072 = vadd.f32 0.0, %v2071
        %v2073 = vpop.f32.mrb[0].mxu0
        %v2074 = vpop.f32.mrb[0].mxu0
        %v2075 = vadd.f32 0.0, %v2074
        %v2076 = vpop.f32.mrb[0].mxu0
        %2077 = vmatprep.mubr.bf16.mxu0 %v1938
        %2078 = vmatmul.mubr.bf16.gmra.mrb[0].mxu0 %v1937
        %v2079 = vpop.f32.mrb[0].mxu0
        %v2080 = vadd.f32 0.0, %v2079
        %v2081 = vpop.f32.mrb[0].mxu0
        %v2082 = vpop.f32.mrb[0].mxu0
        %v2083 = vadd.f32 0.0, %v2082
        %v2084 = vpop.f32.mrb[0].mxu0
        %2085 = vmatprep.mubr.bf16.mxu0 %v1940
        %2086 = vmatmul.mubr.bf16.gmra.mrb[0].mxu0 %v1939
        %v2087 = vpop.f32.mrb[0].mxu0
        %v2088 = vadd.f32 0.0, %v2087
        %v2089 = vpop.f32.mrb[0].mxu0
        %v2090 = vpop.f32.mrb[0].mxu0
        %v2091 = vadd.f32 0.0, %v2090
        %v2092 = vpop.f32.mrb[0].mxu0
        %2093 = vmatprep.mubr.bf16.mxu0 %v1942
        %2094 = vmatmul.mubr.bf16.gmra.mrb[0].mxu0 %v1941
        %v2095 = vpop.f32.mrb[0].mxu0
        %v2096 = vadd.f32 0.0, %v2095
        %v2097 = vpop.f32.mrb[0].mxu0
        %v2098 = vpop.f32.mrb[0].mxu0
        %v2099 = vadd.f32 0.0, %v2098
        %v2100 = vpop.f32.mrb[0].mxu0
        %2101 = vmatprep.mubr.bf16.mxu0 %v1944
        %2102 = vmatmul.mubr.bf16.gmra.mrb[0].mxu0 %v1943
        %v2103 = vpop.f32.mrb[0].mxu0
        %v2104 = vadd.f32 0.0, %v2103
        %v2105 = vpop.f32.mrb[0].mxu0
        %v2106 = vpop.f32.mrb[0].mxu0
        %v2107 = vadd.f32 0.0, %v2106
        %v2108 = vpop.f32.mrb[0].mxu0
        %2109 = vmatprep.mubr.bf16.mxu0 %v1946
        %2110 = vmatmul.mubr.bf16.gmra.mrb[0].mxu0 %v1945
        %v2111 = vpop.f32.mrb[0].mxu0
        %v2112 = vadd.f32 0.0, %v2111
        %v2113 = vpop.f32.mrb[0].mxu0
        %v2114 = vpop.f32.mrb[0].mxu0
        %v2115 = vadd.f32 0.0, %v2114
        %v2116 = vpop.f32.mrb[0].mxu0
        %2117 = vmatprep.mubr.bf16.mxu0 %v1948
        %2118 = vmatmul.mubr.bf16.gmra.mrb[0].mxu0 %v1947
        %v2119 = vpop.f32.mrb[0].mxu0
        %v2120 = vadd.f32 0.0, %v2119
        %v2121 = vpop.f32.mrb[0].mxu0
        %v2122 = vpop.f32.mrb[0].mxu0
        %v2123 = vadd.f32 0.0, %v2122
        %v2124 = vpop.f32.mrb[0].mxu0
        %2125 = vmatprep.mubr.bf16.mxu0 %v1950
        %2126 = vmatmul.mubr.bf16.gmra.mrb[0].mxu0 %v1949
        %v2127 = vpop.f32.mrb[0].mxu0
        %v2128 = vadd.f32 0.0, %v2127
        %v2129 = vpop.f32.mrb[0].mxu0
        %v2130 = vpop.f32.mrb[0].mxu0
        %v2131 = vadd.f32 0.0, %v2130
        %v2132 = vpop.f32.mrb[0].mxu0
        %2133 = vdwg.mxu0
        %2134 = vmatprep.subr.bf16.mxu0 0
        %2135 = vmatpush1.bf16.msra.mxu0 %v1753
        %2136 = vmatprep.subr.bf16.mxu0 0
        %2137 = vmatpush1.bf16.msra.mxu0 %v1754
        %2138 = vmatprep.subr.bf16.mxu0 0
        %2139 = vmatpush1.bf16.msra.mxu0 %v1755
        %2140 = vmatprep.subr.bf16.mxu0 0
        %2141 = vmatpush1.bf16.msra.mxu0 %v1756
        %2142 = vmatprep.subr.bf16.mxu0 0
        %2143 = vmatpush1.bf16.msra.mxu0 %v1757
        %2144 = vmatprep.subr.bf16.mxu0 0
        %2145 = vmatpush1.bf16.msra.mxu0 %v1758
        %2146 = vmatprep.subr.bf16.mxu0 0
        %2147 = vmatpush1.bf16.msra.mxu0 %v1759
        %2148 = vmatprep.subr.bf16.mxu0 0
        %2149 = vmatpush1.bf16.msra.mxu0 %v1760
        %2150 = vmatprep.subr.bf16.mxu0 0
        %2151 = vmatpush1.bf16.msra.mxu0 %v1761
        %2152 = vmatprep.subr.bf16.mxu0 0
        %2153 = vmatpush1.bf16.msra.mxu0 %v1762
        %2154 = vmatprep.subr.bf16.mxu0 0
        %2155 = vmatpush1.bf16.msra.mxu0 %v1763
        %2156 = vmatprep.subr.bf16.mxu0 0
        %2157 = vmatpush1.bf16.msra.mxu0 %v1764
        %2158 = vmatprep.subr.bf16.mxu0 0
        %2159 = vmatpush1.bf16.msra.mxu0 %v1765
        %2160 = vmatprep.subr.bf16.mxu0 0
        %2161 = vmatpush1.bf16.msra.mxu0 %v1766
        %2162 = vmatprep.subr.bf16.mxu0 0
        %2163 = vmatpush1.bf16.msra.mxu0 %v1767
        %2164 = vmatprep.subr.bf16.mxu0 0
        %2165 = vmatpush1.bf16.msra.mxu0 %v1768
        %2166 = vmatprep.mubr.bf16.mxu0 %v1922
        %2167 = vmatmul.mubr.bf16.gmra.mrb[0].mxu0 %v1921
        %v2168 = vpop.f32.mrb[0].mxu0
        %v2169 = vadd.f32 0.0, %v2168
        %v2170 = vpop.f32.mrb[0].mxu0
        %v2171 = vpop.f32.mrb[0].mxu0
        %v2172 = vadd.f32 0.0, %v2171
        %v2173 = vpop.f32.mrb[0].mxu0
        %2174 = vmatprep.mubr.bf16.mxu0 %v1924
        %2175 = vmatmul.mubr.bf16.gmra.mrb[0].mxu0 %v1923
        %v2176 = vpop.f32.mrb[0].mxu0
        %v2177 = vadd.f32 0.0, %v2176
        %v2178 = vpop.f32.mrb[0].mxu0
        %v2179 = vpop.f32.mrb[0].mxu0
        %v2180 = vadd.f32 0.0, %v2179
        %v2181 = vpop.f32.mrb[0].mxu0
        %2182 = vmatprep.mubr.bf16.mxu0 %v1926
        %2183 = vmatmul.mubr.bf16.gmra.mrb[0].mxu0 %v1925
        %v2184 = vpop.f32.mrb[0].mxu0
        %v2185 = vadd.f32 0.0, %v2184
        %v2186 = vpop.f32.mrb[0].mxu0
        %v2187 = vpop.f32.mrb[0].mxu0
        %v2188 = vadd.f32 0.0, %v2187
        %v2189 = vpop.f32.mrb[0].mxu0
        %2190 = vmatprep.mubr.bf16.mxu0 %v1928
        %2191 = vmatmul.mubr.bf16.gmra.mrb[0].mxu0 %v1927
        %v2192 = vpop.f32.mrb[0].mxu0
        %v2193 = vadd.f32 0.0, %v2192
        %v2194 = vpop.f32.mrb[0].mxu0
        %v2195 = vpop.f32.mrb[0].mxu0
        %v2196 = vadd.f32 0.0, %v2195
        %v2197 = vpop.f32.mrb[0].mxu0
        %2198 = vmatprep.mubr.bf16.mxu0 %v1930
        %2199 = vmatmul.mubr.bf16.gmra.mrb[0].mxu0 %v1929
        %v2200 = vpop.f32.mrb[0].mxu0
        %v2201 = vadd.f32 0.0, %v2200
        %v2202 = vpop.f32.mrb[0].mxu0
        %v2203 = vpop.f32.mrb[0].mxu0
        %v2204 = vadd.f32 0.0, %v2203
        %v2205 = vpop.f32.mrb[0].mxu0
        %2206 = vmatprep.mubr.bf16.mxu0 %v1932
        %2207 = vmatmul.mubr.bf16.gmra.mrb[0].mxu0 %v1931
        %v2208 = vpop.f32.mrb[0].mxu0
        %v2209 = vadd.f32 0.0, %v2208
        %v2210 = vpop.f32.mrb[0].mxu0
        %v2211 = vpop.f32.mrb[0].mxu0
        %v2212 = vadd.f32 0.0, %v2211
        %v2213 = vpop.f32.mrb[0].mxu0
        %2214 = vmatprep.mubr.bf16.mxu0 %v1934
        %2215 = vmatmul.mubr.bf16.gmra.mrb[0].mxu0 %v1933
        %v2216 = vpop.f32.mrb[0].mxu0
        %v2217 = vadd.f32 0.0, %v2216
        %v2218 = vpop.f32.mrb[0].mxu0
        %v2219 = vpop.f32.mrb[0].mxu0
        %v2220 = vadd.f32 0.0, %v2219
        %v2221 = vpop.f32.mrb[0].mxu0
        %2222 = vmatprep.mubr.bf16.mxu0 %v1936
        %2223 = vmatmul.mubr.bf16.gmra.mrb[0].mxu0 %v1935
        %v2224 = vpop.f32.mrb[0].mxu0
        %v2225 = vadd.f32 0.0, %v2224
        %v2226 = vpop.f32.mrb[0].mxu0
        %v2227 = vpop.f32.mrb[0].mxu0
        %v2228 = vadd.f32 0.0, %v2227
        %v2229 = vpop.f32.mrb[0].mxu0
        %2230 = vmatprep.mubr.bf16.mxu0 %v1938
        %2231 = vmatmul.mubr.bf16.gmra.mrb[0].mxu0 %v1937
        %v2232 = vpop.f32.mrb[0].mxu0
        %v2233 = vadd.f32 0.0, %v2232
        %v2234 = vpop.f32.mrb[0].mxu0
        %v2235 = vpop.f32.mrb[0].mxu0
        %v2236 = vadd.f32 0.0, %v2235
        %v2237 = vpop.f32.mrb[0].mxu0
        %2238 = vmatprep.mubr.bf16.mxu0 %v1940
        %2239 = vmatmul.mubr.bf16.gmra.mrb[0].mxu0 %v1939
        %v2240 = vpop.f32.mrb[0].mxu0
        %v2241 = vadd.f32 0.0, %v2240
        %v2242 = vpop.f32.mrb[0].mxu0
        %v2243 = vpop.f32.mrb[0].mxu0
        %v2244 = vadd.f32 0.0, %v2243
        %v2245 = vpop.f32.mrb[0].mxu0
        %2246 = vmatprep.mubr.bf16.mxu0 %v1942
        %2247 = vmatmul.mubr.bf16.gmra.mrb[0].mxu0 %v1941
        %v2248 = vpop.f32.mrb[0].mxu0
        %v2249 = vadd.f32 0.0, %v2248
        %v2250 = vpop.f32.mrb[0].mxu0
        %v2251 = vpop.f32.mrb[0].mxu0
        %v2252 = vadd.f32 0.0, %v2251
        %v2253 = vpop.f32.mrb[0].mxu0
        %2254 = vmatprep.mubr.bf16.mxu0 %v1944
        %2255 = vmatmul.mubr.bf16.gmra.mrb[0].mxu0 %v1943
        %v2256 = vpop.f32.mrb[0].mxu0
        %v2257 = vadd.f32 0.0, %v2256
        %v2258 = vpop.f32.mrb[0].mxu0
        %v2259 = vpop.f32.mrb[0].mxu0
        %v2260 = vadd.f32 0.0, %v2259
        %v2261 = vpop.f32.mrb[0].mxu0
        %2262 = vmatprep.mubr.bf16.mxu0 %v1946
        %2263 = vmatmul.mubr.bf16.gmra.mrb[0].mxu0 %v1945
        %v2264 = vpop.f32.mrb[0].mxu0
        %v2265 = vadd.f32 0.0, %v2264
        %v2266 = vpop.f32.mrb[0].mxu0
        %v2267 = vpop.f32.mrb[0].mxu0
        %v2268 = vadd.f32 0.0, %v2267
        %v2269 = vpop.f32.mrb[0].mxu0
        %2270 = vmatprep.mubr.bf16.mxu0 %v1948
        %2271 = vmatmul.mubr.bf16.gmra.mrb[0].mxu0 %v1947
        %v2272 = vpop.f32.mrb[0].mxu0
        %v2273 = vadd.f32 0.0, %v2272
        %v2274 = vpop.f32.mrb[0].mxu0
        %v2275 = vpop.f32.mrb[0].mxu0
        %v2276 = vadd.f32 0.0, %v2275
        %v2277 = vpop.f32.mrb[0].mxu0
        %2278 = vmatprep.mubr.bf16.mxu0 %v1950
        %2279 = vmatmul.mubr.bf16.gmra.mrb[0].mxu0 %v1949
        %v2280 = vpop.f32.mrb[0].mxu0
        %v2281 = vadd.f32 0.0, %v2280
        %v2282 = vpop.f32.mrb[0].mxu0
        %v2283 = vpop.f32.mrb[0].mxu0
        %v2284 = vadd.f32 0.0, %v2283
        %v2285 = vpop.f32.mrb[0].mxu0
        %2286 = vdwg.mxu0
        %2287 = vmatprep.subr.bf16.mxu0 0
        %2288 = vmatpush1.bf16.msra.mxu0 %v1769
        %2289 = vmatprep.subr.bf16.mxu0 0
        %2290 = vmatpush1.bf16.msra.mxu0 %v1770
        %2291 = vmatprep.subr.bf16.mxu0 0
        %2292 = vmatpush1.bf16.msra.mxu0 %v1771
        %2293 = vmatprep.subr.bf16.mxu0 0
        %2294 = vmatpush1.bf16.msra.mxu0 %v1772
        %2295 = vmatprep.subr.bf16.mxu0 0
        %2296 = vmatpush1.bf16.msra.mxu0 %v1773
        %2297 = vmatprep.subr.bf16.mxu0 0
        %2298 = vmatpush1.bf16.msra.mxu0 %v1774
        %2299 = vmatprep.subr.bf16.mxu0 0
        %2300 = vmatpush1.bf16.msra.mxu0 %v1775
        %2301 = vmatprep.subr.bf16.mxu0 0
        %2302 = vmatpush1.bf16.msra.mxu0 %v1776
        %2303 = vmatprep.subr.bf16.mxu0 0
        %2304 = vmatpush1.bf16.msra.mxu0 %v1777
        %2305 = vmatprep.subr.bf16.mxu0 0
        %2306 = vmatpush1.bf16.msra.mxu0 %v1778
        %2307 = vmatprep.subr.bf16.mxu0 0
        %2308 = vmatpush1.bf16.msra.mxu0 %v1779
        %2309 = vmatprep.subr.bf16.mxu0 0
        %2310 = vmatpush1.bf16.msra.mxu0 %v1780
        %2311 = vmatprep.subr.bf16.mxu0 0
        %2312 = vmatpush1.bf16.msra.mxu0 %v1781
        %2313 = vmatprep.subr.bf16.mxu0 0
        %2314 = vmatpush1.bf16.msra.mxu0 %v1782
        %2315 = vmatprep.subr.bf16.mxu0 0
        %2316 = vmatpush1.bf16.msra.mxu0 %v1783
        %2317 = vmatprep.subr.bf16.mxu0 0
        %2318 = vmatpush1.bf16.msra.mxu0 %v1784
        %2319 = vmatprep.mubr.bf16.mxu0 %v1922
        %2320 = vmatmul.mubr.bf16.gmra.mrb[0].mxu0 %v1921
        %v2321 = vpop.f32.mrb[0].mxu0
        %v2322 = vadd.f32 0.0, %v2321
        %v2323 = vpop.f32.mrb[0].mxu0
        %v2324 = vpop.f32.mrb[0].mxu0
        %v2325 = vadd.f32 0.0, %v2324
        %v2326 = vpop.f32.mrb[0].mxu0
        %2327 = vmatprep.mubr.bf16.mxu0 %v1924
        %2328 = vmatmul.mubr.bf16.gmra.mrb[0].mxu0 %v1923
        %v2329 = vpop.f32.mrb[0].mxu0
        %v2330 = vadd.f32 0.0, %v2329
        %v2331 = vpop.f32.mrb[0].mxu0
        %v2332 = vpop.f32.mrb[0].mxu0
        %v2333 = vadd.f32 0.0, %v2332
        %v2334 = vpop.f32.mrb[0].mxu0
        %2335 = vmatprep.mubr.bf16.mxu0 %v1926
        %2336 = vmatmul.mubr.bf16.gmra.mrb[0].mxu0 %v1925
        %v2337 = vpop.f32.mrb[0].mxu0
        %v2338 = vadd.f32 0.0, %v2337
        %v2339 = vpop.f32.mrb[0].mxu0
        %v2340 = vpop.f32.mrb[0].mxu0
        %v2341 = vadd.f32 0.0, %v2340
        %v2342 = vpop.f32.mrb[0].mxu0
        %2343 = vmatprep.mubr.bf16.mxu0 %v1928
        %2344 = vmatmul.mubr.bf16.gmra.mrb[0].mxu0 %v1927
        %v2345 = vpop.f32.mrb[0].mxu0
        %v2346 = vadd.f32 0.0, %v2345
        %v2347 = vpop.f32.mrb[0].mxu0
        %v2348 = vpop.f32.mrb[0].mxu0
        %v2349 = vadd.f32 0.0, %v2348
        %v2350 = vpop.f32.mrb[0].mxu0
        %2351 = vmatprep.mubr.bf16.mxu0 %v1930
        %2352 = vmatmul.mubr.bf16.gmra.mrb[0].mxu0 %v1929
        %v2353 = vpop.f32.mrb[0].mxu0
        %v2354 = vadd.f32 0.0, %v2353
        %v2355 = vpop.f32.mrb[0].mxu0
        %v2356 = vpop.f32.mrb[0].mxu0
        %v2357 = vadd.f32 0.0, %v2356
        %v2358 = vpop.f32.mrb[0].mxu0
        %2359 = vmatprep.mubr.bf16.mxu0 %v1932
        %2360 = vmatmul.mubr.bf16.gmra.mrb[0].mxu0 %v1931
        %v2361 = vpop.f32.mrb[0].mxu0
        %v2362 = vadd.f32 0.0, %v2361
        %v2363 = vpop.f32.mrb[0].mxu0
        %v2364 = vpop.f32.mrb[0].mxu0
        %v2365 = vadd.f32 0.0, %v2364
        %v2366 = vpop.f32.mrb[0].mxu0
        %2367 = vmatprep.mubr.bf16.mxu0 %v1934
        %2368 = vmatmul.mubr.bf16.gmra.mrb[0].mxu0 %v1933
        %v2369 = vpop.f32.mrb[0].mxu0
        %v2370 = vadd.f32 0.0, %v2369
        %v2371 = vpop.f32.mrb[0].mxu0
        %v2372 = vpop.f32.mrb[0].mxu0
        %v2373 = vadd.f32 0.0, %v2372
        %v2374 = vpop.f32.mrb[0].mxu0
        %2375 = vmatprep.mubr.bf16.mxu0 %v1936
        %2376 = vmatmul.mubr.bf16.gmra.mrb[0].mxu0 %v1935
        %v2377 = vpop.f32.mrb[0].mxu0
        %v2378 = vadd.f32 0.0, %v2377
        %v2379 = vpop.f32.mrb[0].mxu0
        %v2380 = vpop.f32.mrb[0].mxu0
        %v2381 = vadd.f32 0.0, %v2380
        %v2382 = vpop.f32.mrb[0].mxu0
        %2383 = vmatprep.mubr.bf16.mxu0 %v1938
        %2384 = vmatmul.mubr.bf16.gmra.mrb[0].mxu0 %v1937
        %v2385 = vpop.f32.mrb[0].mxu0
        %v2386 = vadd.f32 0.0, %v2385
        %v2387 = vpop.f32.mrb[0].mxu0
        %v2388 = vpop.f32.mrb[0].mxu0
        %v2389 = vadd.f32 0.0, %v2388
        %v2390 = vpop.f32.mrb[0].mxu0
        %2391 = vmatprep.mubr.bf16.mxu0 %v1940
        %2392 = vmatmul.mubr.bf16.gmra.mrb[0].mxu0 %v1939
        %v2393 = vpop.f32.mrb[0].mxu0
        %v2394 = vadd.f32 0.0, %v2393
        %v2395 = vpop.f32.mrb[0].mxu0
        %v2396 = vpop.f32.mrb[0].mxu0
        %v2397 = vadd.f32 0.0, %v2396
        %v2398 = vpop.f32.mrb[0].mxu0
        %2399 = vmatprep.mubr.bf16.mxu0 %v1942
        %2400 = vmatmul.mubr.bf16.gmra.mrb[0].mxu0 %v1941
        %v2401 = vpop.f32.mrb[0].mxu0
        %v2402 = vadd.f32 0.0, %v2401
        %v2403 = vpop.f32.mrb[0].mxu0
        %v2404 = vpop.f32.mrb[0].mxu0
        %v2405 = vadd.f32 0.0, %v2404
        %v2406 = vpop.f32.mrb[0].mxu0
        %2407 = vmatprep.mubr.bf16.mxu0 %v1944
        %2408 = vmatmul.mubr.bf16.gmra.mrb[0].mxu0 %v1943
        %v2409 = vpop.f32.mrb[0].mxu0
        %v2410 = vadd.f32 0.0, %v2409
        %v2411 = vpop.f32.mrb[0].mxu0
        %v2412 = vpop.f32.mrb[0].mxu0
        %v2413 = vadd.f32 0.0, %v2412
        %v2414 = vpop.f32.mrb[0].mxu0
        %2415 = vmatprep.mubr.bf16.mxu0 %v1946
        %2416 = vmatmul.mubr.bf16.gmra.mrb[0].mxu0 %v1945
        %v2417 = vpop.f32.mrb[0].mxu0
        %v2418 = vadd.f32 0.0, %v2417
        %v2419 = vpop.f32.mrb[0].mxu0
        %v2420 = vpop.f32.mrb[0].mxu0
        %v2421 = vadd.f32 0.0, %v2420
        %v2422 = vpop.f32.mrb[0].mxu0
        %2423 = vmatprep.mubr.bf16.mxu0 %v1948
        %2424 = vmatmul.mubr.bf16.gmra.mrb[0].mxu0 %v1947
        %v2425 = vpop.f32.mrb[0].mxu0
        %v2426 = vadd.f32 0.0, %v2425
        %v2427 = vpop.f32.mrb[0].mxu0
        %v2428 = vpop.f32.mrb[0].mxu0
        %v2429 = vadd.f32 0.0, %v2428
        %v2430 = vpop.f32.mrb[0].mxu0
        %2431 = vmatprep.mubr.bf16.mxu0 %v1950
        %2432 = vmatmul.mubr.bf16.gmra.mrb[0].mxu0 %v1949
        %v2433 = vpop.f32.mrb[0].mxu0
        %v2434 = vadd.f32 0.0, %v2433
        %v2435 = vpop.f32.mrb[0].mxu0
        %v2436 = vpop.f32.mrb[0].mxu0
        %v2437 = vadd.f32 0.0, %v2436
        %v2438 = vpop.f32.mrb[0].mxu0
        %2439 = vdwg.mxu0
        %2440 = vmatprep.subr.bf16.mxu0 0
        %2441 = vmatpush1.bf16.msra.mxu0 %v1785
        %2442 = vmatprep.subr.bf16.mxu0 0
        %2443 = vmatpush1.bf16.msra.mxu0 %v1786
        %2444 = vmatprep.subr.bf16.mxu0 0
        %2445 = vmatpush1.bf16.msra.mxu0 %v1787
        %2446 = vmatprep.subr.bf16.mxu0 0
        %2447 = vmatpush1.bf16.msra.mxu0 %v1788
        %2448 = vmatprep.subr.bf16.mxu0 0
        %2449 = vmatpush1.bf16.msra.mxu0 %v1789
        %2450 = vmatprep.subr.bf16.mxu0 0
        %2451 = vmatpush1.bf16.msra.mxu0 %v1790
        %2452 = vmatprep.subr.bf16.mxu0 0
        %2453 = vmatpush1.bf16.msra.mxu0 %v1791
        %2454 = vmatprep.subr.bf16.mxu0 0
        %2455 = vmatpush1.bf16.msra.mxu0 %v1792
        %2456 = vmatprep.subr.bf16.mxu0 0
        %2457 = vmatpush1.bf16.msra.mxu0 %v1793
        %2458 = vmatprep.subr.bf16.mxu0 0
        %2459 = vmatpush1.bf16.msra.mxu0 %v1794
        %2460 = vmatprep.subr.bf16.mxu0 0
        %2461 = vmatpush1.bf16.msra.mxu0 %v1795
        %2462 = vmatprep.subr.bf16.mxu0 0
        %2463 = vmatpush1.bf16.msra.mxu0 %v1796
        %2464 = vmatprep.subr.bf16.mxu0 0
        %2465 = vmatpush1.bf16.msra.mxu0 %v1797
        %2466 = vmatprep.subr.bf16.mxu0 0
        %2467 = vmatpush1.bf16.msra.mxu0 %v1798
        %2468 = vmatprep.subr.bf16.mxu0 0
        %2469 = vmatpush1.bf16.msra.mxu0 %v1799
        %2470 = vmatprep.subr.bf16.mxu0 0
        %2471 = vmatpush1.bf16.msra.mxu0 %v1800
        %2472 = vmatprep.mubr.bf16.mxu0 %v1922
        %2473 = vmatmul.mubr.bf16.gmra.mrb[0].mxu0 %v1921
        %v2474 = vpop.f32.mrb[0].mxu0
        %v2475 = vadd.f32 0.0, %v2474
        %v2476 = vpop.f32.mrb[0].mxu0
        %v2477 = vpop.f32.mrb[0].mxu0
        %v2478 = vadd.f32 0.0, %v2477
        %v2479 = vpop.f32.mrb[0].mxu0
        %2480 = vmatprep.mubr.bf16.mxu0 %v1924
        %2481 = vmatmul.mubr.bf16.gmra.mrb[0].mxu0 %v1923
        %v2482 = vpop.f32.mrb[0].mxu0
        %v2483 = vadd.f32 0.0, %v2482
        %v2484 = vpop.f32.mrb[0].mxu0
        %v2485 = vpop.f32.mrb[0].mxu0
        %v2486 = vadd.f32 0.0, %v2485
        %v2487 = vpop.f32.mrb[0].mxu0
        %2488 = vmatprep.mubr.bf16.mxu0 %v1926
        %2489 = vmatmul.mubr.bf16.gmra.mrb[0].mxu0 %v1925
        %v2490 = vpop.f32.mrb[0].mxu0
        %v2491 = vadd.f32 0.0, %v2490
        %v2492 = vpop.f32.mrb[0].mxu0
        %v2493 = vpop.f32.mrb[0].mxu0
        %v2494 = vadd.f32 0.0, %v2493
        %v2495 = vpop.f32.mrb[0].mxu0
        %2496 = vmatprep.mubr.bf16.mxu0 %v1928
        %2497 = vmatmul.mubr.bf16.gmra.mrb[0].mxu0 %v1927
        %v2498 = vpop.f32.mrb[0].mxu0
        %v2499 = vadd.f32 0.0, %v2498
        %v2500 = vpop.f32.mrb[0].mxu0
        %v2501 = vpop.f32.mrb[0].mxu0
        %v2502 = vadd.f32 0.0, %v2501
        %v2503 = vpop.f32.mrb[0].mxu0
        %2504 = vmatprep.mubr.bf16.mxu0 %v1930
        %2505 = vmatmul.mubr.bf16.gmra.mrb[0].mxu0 %v1929
        %v2506 = vpop.f32.mrb[0].mxu0
        %v2507 = vadd.f32 0.0, %v2506
        %v2508 = vpop.f32.mrb[0].mxu0
        %v2509 = vpop.f32.mrb[0].mxu0
        %v2510 = vadd.f32 0.0, %v2509
        %v2511 = vpop.f32.mrb[0].mxu0
        %2512 = vmatprep.mubr.bf16.mxu0 %v1932
        %2513 = vmatmul.mubr.bf16.gmra.mrb[0].mxu0 %v1931
        %v2514 = vpop.f32.mrb[0].mxu0
        %v2515 = vadd.f32 0.0, %v2514
        %v2516 = vpop.f32.mrb[0].mxu0
        %v2517 = vpop.f32.mrb[0].mxu0
        %v2518 = vadd.f32 0.0, %v2517
        %v2519 = vpop.f32.mrb[0].mxu0
        %2520 = vmatprep.mubr.bf16.mxu0 %v1934
        %2521 = vmatmul.mubr.bf16.gmra.mrb[0].mxu0 %v1933
        %v2522 = vpop.f32.mrb[0].mxu0
        %v2523 = vadd.f32 0.0, %v2522
        %v2524 = vpop.f32.mrb[0].mxu0
        %v2525 = vpop.f32.mrb[0].mxu0
        %v2526 = vadd.f32 0.0, %v2525
        %v2527 = vpop.f32.mrb[0].mxu0
        %2528 = vmatprep.mubr.bf16.mxu0 %v1936
        %2529 = vmatmul.mubr.bf16.gmra.mrb[0].mxu0 %v1935
        %v2530 = vpop.f32.mrb[0].mxu0
        %v2531 = vadd.f32 0.0, %v2530
        %v2532 = vpop.f32.mrb[0].mxu0
        %v2533 = vpop.f32.mrb[0].mxu0
        %v2534 = vadd.f32 0.0, %v2533
        %v2535 = vpop.f32.mrb[0].mxu0
        %2536 = vmatprep.mubr.bf16.mxu0 %v1938
        %2537 = vmatmul.mubr.bf16.gmra.mrb[0].mxu0 %v1937
        %v2538 = vpop.f32.mrb[0].mxu0
        %v2539 = vadd.f32 0.0, %v2538
        %v2540 = vpop.f32.mrb[0].mxu0
        %v2541 = vpop.f32.mrb[0].mxu0
        %v2542 = vadd.f32 0.0, %v2541
        %v2543 = vpop.f32.mrb[0].mxu0
        %2544 = vmatprep.mubr.bf16.mxu0 %v1940
        %2545 = vmatmul.mubr.bf16.gmra.mrb[0].mxu0 %v1939
        %v2546 = vpop.f32.mrb[0].mxu0
        %v2547 = vadd.f32 0.0, %v2546
        %v2548 = vpop.f32.mrb[0].mxu0
        %v2549 = vpop.f32.mrb[0].mxu0
        %v2550 = vadd.f32 0.0, %v2549
        %v2551 = vpop.f32.mrb[0].mxu0
        %2552 = vmatprep.mubr.bf16.mxu0 %v1942
        %2553 = vmatmul.mubr.bf16.gmra.mrb[0].mxu0 %v1941
        %v2554 = vpop.f32.mrb[0].mxu0
        %v2555 = vadd.f32 0.0, %v2554
        %v2556 = vpop.f32.mrb[0].mxu0
        %v2557 = vpop.f32.mrb[0].mxu0
        %v2558 = vadd.f32 0.0, %v2557
        %v2559 = vpop.f32.mrb[0].mxu0
        %2560 = vmatprep.mubr.bf16.mxu0 %v1944
        %2561 = vmatmul.mubr.bf16.gmra.mrb[0].mxu0 %v1943
        %v2562 = vpop.f32.mrb[0].mxu0
        %v2563 = vadd.f32 0.0, %v2562
        %v2564 = vpop.f32.mrb[0].mxu0
        %v2565 = vpop.f32.mrb[0].mxu0
        %v2566 = vadd.f32 0.0, %v2565
        %v2567 = vpop.f32.mrb[0].mxu0
        %2568 = vmatprep.mubr.bf16.mxu0 %v1946
        %2569 = vmatmul.mubr.bf16.gmra.mrb[0].mxu0 %v1945
        %v2570 = vpop.f32.mrb[0].mxu0
        %v2571 = vadd.f32 0.0, %v2570
        %v2572 = vpop.f32.mrb[0].mxu0
        %v2573 = vpop.f32.mrb[0].mxu0
        %v2574 = vadd.f32 0.0, %v2573
        %v2575 = vpop.f32.mrb[0].mxu0
        %2576 = vmatprep.mubr.bf16.mxu0 %v1948
        %2577 = vmatmul.mubr.bf16.gmra.mrb[0].mxu0 %v1947
        %v2578 = vpop.f32.mrb[0].mxu0
        %v2579 = vadd.f32 0.0, %v2578
        %v2580 = vpop.f32.mrb[0].mxu0
        %v2581 = vpop.f32.mrb[0].mxu0
        %v2582 = vadd.f32 0.0, %v2581
        %v2583 = vpop.f32.mrb[0].mxu0
        %2584 = vmatprep.mubr.bf16.mxu0 %v1950
        %2585 = vmatmul.mubr.bf16.gmra.mrb[0].mxu0 %v1949
        %v2586 = vpop.f32.mrb[0].mxu0
        %v2587 = vadd.f32 0.0, %v2586
        %v2588 = vpop.f32.mrb[0].mxu0
        %v2589 = vpop.f32.mrb[0].mxu0
        %v2590 = vadd.f32 0.0, %v2589
        %v2591 = vpop.f32.mrb[0].mxu0
        %2592 = vdwg.mxu0
        %v2593 = vpack.c.bf16 %v2019, %v2016
        %v2594 = vpack.c.bf16 %v2027, %v2024
        %v2595 = vpack.c.bf16 %v2035, %v2032
        %v2596 = vpack.c.bf16 %v2043, %v2040
        %v2597 = vpack.c.bf16 %v2172, %v2169
        %v2598 = vpack.c.bf16 %v2180, %v2177
        %v2599 = vpack.c.bf16 %v2188, %v2185
        %v2600 = vpack.c.bf16 %v2196, %v2193
        %v2601 = vpack.c.bf16 %v2325, %v2322
        %v2602 = vpack.c.bf16 %v2333, %v2330
        %v2603 = vpack.c.bf16 %v2341, %v2338
        %v2604 = vpack.c.bf16 %v2349, %v2346
        %v2605 = vpack.c.bf16 %v2478, %v2475
        %v2606 = vpack.c.bf16 %v2486, %v2483
        %v2607 = vpack.c.bf16 %v2494, %v2491
        %v2608 = vpack.c.bf16 %v2502, %v2499
        %v2609 = vld [vmem:[%s5] sm:$0xf]
        %v2610 = vld [vmem:[%s5 + $0x4] sm:$0xf]
        %v2611 = vpack.c.bf16 %v2059, %v2056
        %v2612 = vpack.c.bf16 %v2067, %v2064
        %v2613 = vpack.c.bf16 %v2075, %v2072
        %v2614 = vpack.c.bf16 %v2083, %v2080
        %v2615 = vpack.c.bf16 %v2212, %v2209
        %v2616 = vpack.c.bf16 %v2220, %v2217
        %v2617 = vpack.c.bf16 %v2228, %v2225
        %v2618 = vpack.c.bf16 %v2236, %v2233
        %v2619 = vpack.c.bf16 %v2365, %v2362
        %v2620 = vpack.c.bf16 %v2373, %v2370
        %v2621 = vpack.c.bf16 %v2381, %v2378
        %v2622 = vpack.c.bf16 %v2389, %v2386
        %v2623 = vpack.c.bf16 %v2518, %v2515
        %v2624 = vpack.c.bf16 %v2526, %v2523
        %v2625 = vpack.c.bf16 %v2534, %v2531
        %v2626 = vpack.c.bf16 %v2542, %v2539
        %s2627 = scalar_lea.vmem %s5, 8
        %v2628 = vld [vmem:[%s2627] sm:$0xf]
        %v2629 = vld [vmem:[%s2627 + $0x4] sm:$0xf]
        %v2632 = vunpack.c.l.b16 %v2628
        %v2633 = vunpack.c.l.b16 %v2629
        %v2634 = vpack.c.b16 %v2633, %v2632
        %vm2636 = vcmask 130048
        %v2638 = vsel %vm2636, %v2611, 0
        %v2641 = vsel %vm2636, %v2612, 0
        %v2644 = vsel %vm2636, %v2613, 0
        %v2647 = vsel %vm2636, %v2614, 0
        %v2650 = vsel %vm2636, %v2615, 0
        %v2653 = vsel %vm2636, %v2616, 0
        %v2656 = vsel %vm2636, %v2617, 0
        %v2659 = vsel %vm2636, %v2618, 0
        %v2662 = vsel %vm2636, %v2619, 0
        %v2665 = vsel %vm2636, %v2620, 0
        %v2668 = vsel %vm2636, %v2621, 0
        %v2671 = vsel %vm2636, %v2622, 0
        %v2674 = vsel %vm2636, %v2623, 0
        %v2677 = vsel %vm2636, %v2624, 0
        %v2680 = vsel %vm2636, %v2625, 0
        %v2683 = vsel %vm2636, %v2626, 0
        %2685 = vmatprep.subr.bf16.mxu0 0
        %2686 = vmatpush1.bf16.msra.mxu0 %v2634
        %2687 = vmatprep.subr.bf16.mxu0 0
        %2688 = vmatpush1.bf16.msra.mxu0 0
        %2689 = vmatprep.subr.bf16.mxu0 0
        %2690 = vmatpush1.bf16.msra.mxu0 0
        %2691 = vmatprep.subr.bf16.mxu0 0
        %2692 = vmatpush1.bf16.msra.mxu0 0
        %2693 = vmatprep.subr.bf16.mxu0 0
        %2694 = vmatpush1.bf16.msra.mxu0 0
        %2695 = vmatprep.subr.bf16.mxu0 0
        %2696 = vmatpush1.bf16.msra.mxu0 0
        %2697 = vmatprep.subr.bf16.mxu0 0
        %2698 = vmatpush1.bf16.msra.mxu0 0
        %2699 = vmatprep.subr.bf16.mxu0 0
        %2700 = vmatpush1.bf16.msra.mxu0 0
        %2701 = vmatprep.subr.bf16.mxu0 0
        %2702 = vmatpush1.bf16.msra.mxu0 0
        %2703 = vmatprep.subr.bf16.mxu0 0
        %2704 = vmatpush1.bf16.msra.mxu0 0
        %2705 = vmatprep.subr.bf16.mxu0 0
        %2706 = vmatpush1.bf16.msra.mxu0 0
        %2707 = vmatprep.subr.bf16.mxu0 0
        %2708 = vmatpush1.bf16.msra.mxu0 0
        %2709 = vmatprep.subr.bf16.mxu0 0
        %2710 = vmatpush1.bf16.msra.mxu0 0
        %2711 = vmatprep.subr.bf16.mxu0 0
        %2712 = vmatpush1.bf16.msra.mxu0 0
        %2713 = vmatprep.subr.bf16.mxu0 0
        %2714 = vmatpush1.bf16.msra.mxu0 0
        %2715 = vmatprep.subr.bf16.mxu0 0
        %2716 = vmatpush1.bf16.msra.mxu0 0
        %2717 = vmatprep.mubr.bf16.mxu0 0
        %2718 = vmatmul.mubr.bf16.gmra.mrb[0].mxu0 %v2638
        %v2719 = vpop.f32.mrb[0].mxu0
        %v2720 = vadd.f32 0.0, %v2719
        %v2721 = vpop.f32.mrb[0].mxu0
        %v2722 = vpop.f32.mrb[0].mxu0
        %v2723 = vadd.f32 0.0, %v2722
        %v2724 = vpop.f32.mrb[0].mxu0
        %2725 = vmatprep.mubr.bf16.mxu0 0
        %2726 = vmatmul.mubr.bf16.gmra.mrb[0].mxu0 %v2641
        %v2727 = vpop.f32.mrb[0].mxu0
        %v2728 = vadd.f32 0.0, %v2727
        %v2729 = vpop.f32.mrb[0].mxu0
        %v2730 = vpop.f32.mrb[0].mxu0
        %v2731 = vadd.f32 0.0, %v2730
        %v2732 = vpop.f32.mrb[0].mxu0
        %2733 = vmatprep.mubr.bf16.mxu0 0
        %2734 = vmatmul.mubr.bf16.gmra.mrb[0].mxu0 %v2644
        %v2735 = vpop.f32.mrb[0].mxu0
        %v2736 = vadd.f32 0.0, %v2735
        %v2737 = vpop.f32.mrb[0].mxu0
        %v2738 = vpop.f32.mrb[0].mxu0
        %v2739 = vadd.f32 0.0, %v2738
        %v2740 = vpop.f32.mrb[0].mxu0
        %2741 = vmatprep.mubr.bf16.mxu0 0
        %2742 = vmatmul.mubr.bf16.gmra.mrb[0].mxu0 %v2647
        %v2743 = vpop.f32.mrb[0].mxu0
        %v2744 = vadd.f32 0.0, %v2743
        %v2745 = vpop.f32.mrb[0].mxu0
        %v2746 = vpop.f32.mrb[0].mxu0
        %v2747 = vadd.f32 0.0, %v2746
        %v2748 = vpop.f32.mrb[0].mxu0
        %2749 = vmatprep.mubr.bf16.mxu0 0
        %2750 = vmatmul.mubr.bf16.gmra.mrb[0].mxu0 %v2650
        %v2751 = vpop.f32.mrb[0].mxu0
        %v2752 = vadd.f32 0.0, %v2751
        %v2753 = vpop.f32.mrb[0].mxu0
        %v2754 = vpop.f32.mrb[0].mxu0
        %v2755 = vadd.f32 0.0, %v2754
        %v2756 = vpop.f32.mrb[0].mxu0
        %2757 = vmatprep.mubr.bf16.mxu0 0
        %2758 = vmatmul.mubr.bf16.gmra.mrb[0].mxu0 %v2653
        %v2759 = vpop.f32.mrb[0].mxu0
        %v2760 = vadd.f32 0.0, %v2759
        %v2761 = vpop.f32.mrb[0].mxu0
        %v2762 = vpop.f32.mrb[0].mxu0
        %v2763 = vadd.f32 0.0, %v2762
        %v2764 = vpop.f32.mrb[0].mxu0
        %2765 = vmatprep.mubr.bf16.mxu0 0
        %2766 = vmatmul.mubr.bf16.gmra.mrb[0].mxu0 %v2656
        %v2767 = vpop.f32.mrb[0].mxu0
        %v2768 = vadd.f32 0.0, %v2767
        %v2769 = vpop.f32.mrb[0].mxu0
        %v2770 = vpop.f32.mrb[0].mxu0
        %v2771 = vadd.f32 0.0, %v2770
        %v2772 = vpop.f32.mrb[0].mxu0
        %2773 = vmatprep.mubr.bf16.mxu0 0
        %2774 = vmatmul.mubr.bf16.gmra.mrb[0].mxu0 %v2659
        %v2775 = vpop.f32.mrb[0].mxu0
        %v2776 = vadd.f32 0.0, %v2775
        %v2777 = vpop.f32.mrb[0].mxu0
        %v2778 = vpop.f32.mrb[0].mxu0
        %v2779 = vadd.f32 0.0, %v2778
        %v2780 = vpop.f32.mrb[0].mxu0
        %2781 = vmatprep.mubr.bf16.mxu0 0
        %2782 = vmatmul.mubr.bf16.gmra.mrb[0].mxu0 %v2662
        %v2783 = vpop.f32.mrb[0].mxu0
        %v2784 = vadd.f32 0.0, %v2783
        %v2785 = vpop.f32.mrb[0].mxu0
        %v2786 = vpop.f32.mrb[0].mxu0
        %v2787 = vadd.f32 0.0, %v2786
        %v2788 = vpop.f32.mrb[0].mxu0
        %2789 = vmatprep.mubr.bf16.mxu0 0
        %2790 = vmatmul.mubr.bf16.gmra.mrb[0].mxu0 %v2665
        %v2791 = vpop.f32.mrb[0].mxu0
        %v2792 = vadd.f32 0.0, %v2791
        %v2793 = vpop.f32.mrb[0].mxu0
        %v2794 = vpop.f32.mrb[0].mxu0
        %v2795 = vadd.f32 0.0, %v2794
        %v2796 = vpop.f32.mrb[0].mxu0
        %2797 = vmatprep.mubr.bf16.mxu0 0
        %2798 = vmatmul.mubr.bf16.gmra.mrb[0].mxu0 %v2668
        %v2799 = vpop.f32.mrb[0].mxu0
        %v2800 = vadd.f32 0.0, %v2799
        %v2801 = vpop.f32.mrb[0].mxu0
        %v2802 = vpop.f32.mrb[0].mxu0
        %v2803 = vadd.f32 0.0, %v2802
        %v2804 = vpop.f32.mrb[0].mxu0
        %2805 = vmatprep.mubr.bf16.mxu0 0
        %2806 = vmatmul.mubr.bf16.gmra.mrb[0].mxu0 %v2671
        %v2807 = vpop.f32.mrb[0].mxu0
        %v2808 = vadd.f32 0.0, %v2807
        %v2809 = vpop.f32.mrb[0].mxu0
        %v2810 = vpop.f32.mrb[0].mxu0
        %v2811 = vadd.f32 0.0, %v2810
        %v2812 = vpop.f32.mrb[0].mxu0
        %2813 = vmatprep.mubr.bf16.mxu0 0
        %2814 = vmatmul.mubr.bf16.gmra.mrb[0].mxu0 %v2674
        %v2815 = vpop.f32.mrb[0].mxu0
        %v2816 = vadd.f32 0.0, %v2815
        %v2817 = vpop.f32.mrb[0].mxu0
        %v2818 = vpop.f32.mrb[0].mxu0
        %v2819 = vadd.f32 0.0, %v2818
        %v2820 = vpop.f32.mrb[0].mxu0
        %2821 = vmatprep.mubr.bf16.mxu0 0
        %2822 = vmatmul.mubr.bf16.gmra.mrb[0].mxu0 %v2677
        %v2823 = vpop.f32.mrb[0].mxu0
        %v2824 = vadd.f32 0.0, %v2823
        %v2825 = vpop.f32.mrb[0].mxu0
        %v2826 = vpop.f32.mrb[0].mxu0
        %v2827 = vadd.f32 0.0, %v2826
        %v2828 = vpop.f32.mrb[0].mxu0
        %2829 = vmatprep.mubr.bf16.mxu0 0
        %2830 = vmatmul.mubr.bf16.gmra.mrb[0].mxu0 %v2680
        %v2831 = vpop.f32.mrb[0].mxu0
        %v2832 = vadd.f32 0.0, %v2831
        %v2833 = vpop.f32.mrb[0].mxu0
        %v2834 = vpop.f32.mrb[0].mxu0
        %v2835 = vadd.f32 0.0, %v2834
        %v2836 = vpop.f32.mrb[0].mxu0
        %2837 = vmatprep.mubr.bf16.mxu0 0
        %2838 = vmatmul.mubr.bf16.gmra.mrb[0].mxu0 %v2683
        %v2839 = vpop.f32.mrb[0].mxu0
        %v2840 = vadd.f32 0.0, %v2839
        %v2841 = vpop.f32.mrb[0].mxu0
        %v2842 = vpop.f32.mrb[0].mxu0
        %v2843 = vadd.f32 0.0, %v2842
        %v2844 = vpop.f32.mrb[0].mxu0
        %2845 = vdwg.mxu0
        %v2848 = vunpack.c.l.b16 %v2609
        %v2849 = vunpack.c.l.b16 %v2610
        %v2850 = vpack.c.b16 %v2849, %v2848
        %v2853 = vsel %vm2636, %v2593, 0
        %v2856 = vsel %vm2636, %v2594, 0
        %v2859 = vsel %vm2636, %v2595, 0
        %v2862 = vsel %vm2636, %v2596, 0
        %v2865 = vsel %vm2636, %v2597, 0
        %v2868 = vsel %vm2636, %v2598, 0
        %v2871 = vsel %vm2636, %v2599, 0
        %v2874 = vsel %vm2636, %v2600, 0
        %v2877 = vsel %vm2636, %v2601, 0
        %v2880 = vsel %vm2636, %v2602, 0
        %v2883 = vsel %vm2636, %v2603, 0
        %v2886 = vsel %vm2636, %v2604, 0
        %v2889 = vsel %vm2636, %v2605, 0
        %v2892 = vsel %vm2636, %v2606, 0
        %v2895 = vsel %vm2636, %v2607, 0
        %v2898 = vsel %vm2636, %v2608, 0
        %2900 = vmatprep.subr.bf16.mxu0 0
        %2901 = vmatpush1.bf16.msra.mxu0 %v2850
        %2902 = vmatprep.subr.bf16.mxu0 0
        %2903 = vmatpush1.bf16.msra.mxu0 0
        %2904 = vmatprep.subr.bf16.mxu0 0
        %2905 = vmatpush1.bf16.msra.mxu0 0
        %2906 = vmatprep.subr.bf16.mxu0 0
        %2907 = vmatpush1.bf16.msra.mxu0 0
        %2908 = vmatprep.subr.bf16.mxu0 0
        %2909 = vmatpush1.bf16.msra.mxu0 0
        %2910 = vmatprep.subr.bf16.mxu0 0
        %2911 = vmatpush1.bf16.msra.mxu0 0
        %2912 = vmatprep.subr.bf16.mxu0 0
        %2913 = vmatpush1.bf16.msra.mxu0 0
        %2914 = vmatprep.subr.bf16.mxu0 0
        %2915 = vmatpush1.bf16.msra.mxu0 0
        %2916 = vmatprep.subr.bf16.mxu0 0
        %2917 = vmatpush1.bf16.msra.mxu0 0
        %2918 = vmatprep.subr.bf16.mxu0 0
        %2919 = vmatpush1.bf16.msra.mxu0 0
        %2920 = vmatprep.subr.bf16.mxu0 0
        %2921 = vmatpush1.bf16.msra.mxu0 0
        %2922 = vmatprep.subr.bf16.mxu0 0
        %2923 = vmatpush1.bf16.msra.mxu0 0
        %2924 = vmatprep.subr.bf16.mxu0 0
        %2925 = vmatpush1.bf16.msra.mxu0 0
        %2926 = vmatprep.subr.bf16.mxu0 0
        %2927 = vmatpush1.bf16.msra.mxu0 0
        %2928 = vmatprep.subr.bf16.mxu0 0
        %2929 = vmatpush1.bf16.msra.mxu0 0
        %2930 = vmatprep.subr.bf16.mxu0 0
        %2931 = vmatpush1.bf16.msra.mxu0 0
        %2932 = vmatprep.mubr.bf16.mxu0 0
        %2933 = vmatmul.mubr.bf16.gmra.mrb[0].mxu0 %v2853
        %v2934 = vpop.f32.mrb[0].mxu0
        %v2935 = vadd.f32 %v2720, %v2934
        %v2936 = vpop.f32.mrb[0].mxu0
        %v2937 = vpop.f32.mrb[0].mxu0
        %v2938 = vadd.f32 %v2723, %v2937
        %v2939 = vpop.f32.mrb[0].mxu0
        %2940 = vmatprep.mubr.bf16.mxu0 0
        %2941 = vmatmul.mubr.bf16.gmra.mrb[0].mxu0 %v2856
        %v2942 = vpop.f32.mrb[0].mxu0
        %v2943 = vadd.f32 %v2728, %v2942
        %v2944 = vpop.f32.mrb[0].mxu0
        %v2945 = vpop.f32.mrb[0].mxu0
        %v2946 = vadd.f32 %v2731, %v2945
        %v2947 = vpop.f32.mrb[0].mxu0
        %2948 = vmatprep.mubr.bf16.mxu0 0
        %2949 = vmatmul.mubr.bf16.gmra.mrb[0].mxu0 %v2859
        %v2950 = vpop.f32.mrb[0].mxu0
        %v2951 = vadd.f32 %v2736, %v2950
        %v2952 = vpop.f32.mrb[0].mxu0
        %v2953 = vpop.f32.mrb[0].mxu0
        %v2954 = vadd.f32 %v2739, %v2953
        %v2955 = vpop.f32.mrb[0].mxu0
        %2956 = vmatprep.mubr.bf16.mxu0 0
        %2957 = vmatmul.mubr.bf16.gmra.mrb[0].mxu0 %v2862
        %v2958 = vpop.f32.mrb[0].mxu0
        %v2959 = vadd.f32 %v2744, %v2958
        %v2960 = vpop.f32.mrb[0].mxu0
        %v2961 = vpop.f32.mrb[0].mxu0
        %v2962 = vadd.f32 %v2747, %v2961
        %v2963 = vpop.f32.mrb[0].mxu0
        %2964 = vmatprep.mubr.bf16.mxu0 0
        %2965 = vmatmul.mubr.bf16.gmra.mrb[0].mxu0 %v2865
        %v2966 = vpop.f32.mrb[0].mxu0
        %v2967 = vadd.f32 %v2752, %v2966
        %v2968 = vpop.f32.mrb[0].mxu0
        %v2969 = vpop.f32.mrb[0].mxu0
        %v2970 = vadd.f32 %v2755, %v2969
        %v2971 = vpop.f32.mrb[0].mxu0
        %2972 = vmatprep.mubr.bf16.mxu0 0
        %2973 = vmatmul.mubr.bf16.gmra.mrb[0].mxu0 %v2868
        %v2974 = vpop.f32.mrb[0].mxu0
        %v2975 = vadd.f32 %v2760, %v2974
        %v2976 = vpop.f32.mrb[0].mxu0
        %v2977 = vpop.f32.mrb[0].mxu0
        %v2978 = vadd.f32 %v2763, %v2977
        %v2979 = vpop.f32.mrb[0].mxu0
        %2980 = vmatprep.mubr.bf16.mxu0 0
        %2981 = vmatmul.mubr.bf16.gmra.mrb[0].mxu0 %v2871
        %v2982 = vpop.f32.mrb[0].mxu0
        %v2983 = vadd.f32 %v2768, %v2982
        %v2984 = vpop.f32.mrb[0].mxu0
        %v2985 = vpop.f32.mrb[0].mxu0
        %v2986 = vadd.f32 %v2771, %v2985
        %v2987 = vpop.f32.mrb[0].mxu0
        %2988 = vmatprep.mubr.bf16.mxu0 0
        %2989 = vmatmul.mubr.bf16.gmra.mrb[0].mxu0 %v2874
        %v2990 = vpop.f32.mrb[0].mxu0
        %v2991 = vadd.f32 %v2776, %v2990
        %v2992 = vpop.f32.mrb[0].mxu0
        %v2993 = vpop.f32.mrb[0].mxu0
        %v2994 = vadd.f32 %v2779, %v2993
        %v2995 = vpop.f32.mrb[0].mxu0
        %2996 = vmatprep.mubr.bf16.mxu0 0
        %2997 = vmatmul.mubr.bf16.gmra.mrb[0].mxu0 %v2877
        %v2998 = vpop.f32.mrb[0].mxu0
        %v2999 = vadd.f32 %v2784, %v2998
        %v3000 = vpop.f32.mrb[0].mxu0
        %v3001 = vpop.f32.mrb[0].mxu0
        %v3002 = vadd.f32 %v2787, %v3001
        %v3003 = vpop.f32.mrb[0].mxu0
        %3004 = vmatprep.mubr.bf16.mxu0 0
        %3005 = vmatmul.mubr.bf16.gmra.mrb[0].mxu0 %v2880
        %v3006 = vpop.f32.mrb[0].mxu0
        %v3007 = vadd.f32 %v2792, %v3006
        %v3008 = vpop.f32.mrb[0].mxu0
        %v3009 = vpop.f32.mrb[0].mxu0
        %v3010 = vadd.f32 %v2795, %v3009
        %v3011 = vpop.f32.mrb[0].mxu0
        %3012 = vmatprep.mubr.bf16.mxu0 0
        %3013 = vmatmul.mubr.bf16.gmra.mrb[0].mxu0 %v2883
        %v3014 = vpop.f32.mrb[0].mxu0
        %v3015 = vadd.f32 %v2800, %v3014
        %v3016 = vpop.f32.mrb[0].mxu0
        %v3017 = vpop.f32.mrb[0].mxu0
        %v3018 = vadd.f32 %v2803, %v3017
        %v3019 = vpop.f32.mrb[0].mxu0
        %3020 = vmatprep.mubr.bf16.mxu0 0
        %3021 = vmatmul.mubr.bf16.gmra.mrb[0].mxu0 %v2886
        %v3022 = vpop.f32.mrb[0].mxu0
        %v3023 = vadd.f32 %v2808, %v3022
        %v3024 = vpop.f32.mrb[0].mxu0
        %v3025 = vpop.f32.mrb[0].mxu0
        %v3026 = vadd.f32 %v2811, %v3025
        %v3027 = vpop.f32.mrb[0].mxu0
        %3028 = vmatprep.mubr.bf16.mxu0 0
        %3029 = vmatmul.mubr.bf16.gmra.mrb[0].mxu0 %v2889
        %v3030 = vpop.f32.mrb[0].mxu0
        %v3031 = vadd.f32 %v2816, %v3030
        %v3032 = vpop.f32.mrb[0].mxu0
        %v3033 = vpop.f32.mrb[0].mxu0
        %v3034 = vadd.f32 %v2819, %v3033
        %v3035 = vpop.f32.mrb[0].mxu0
        %3036 = vmatprep.mubr.bf16.mxu0 0
        %3037 = vmatmul.mubr.bf16.gmra.mrb[0].mxu0 %v2892
        %v3038 = vpop.f32.mrb[0].mxu0
        %v3039 = vadd.f32 %v2824, %v3038
        %v3040 = vpop.f32.mrb[0].mxu0
        %v3041 = vpop.f32.mrb[0].mxu0
        %v3042 = vadd.f32 %v2827, %v3041
        %v3043 = vpop.f32.mrb[0].mxu0
        %3044 = vmatprep.mubr.bf16.mxu0 0
        %3045 = vmatmul.mubr.bf16.gmra.mrb[0].mxu0 %v2895
        %v3046 = vpop.f32.mrb[0].mxu0
        %v3047 = vadd.f32 %v2832, %v3046
        %v3048 = vpop.f32.mrb[0].mxu0
        %v3049 = vpop.f32.mrb[0].mxu0
        %v3050 = vadd.f32 %v2835, %v3049
        %v3051 = vpop.f32.mrb[0].mxu0
        %3052 = vmatprep.mubr.bf16.mxu0 0
        %3053 = vmatmul.mubr.bf16.gmra.mrb[0].mxu0 %v2898
        %v3054 = vpop.f32.mrb[0].mxu0
        %v3055 = vadd.f32 %v2840, %v3054
        %v3056 = vpop.f32.mrb[0].mxu0
        %v3057 = vpop.f32.mrb[0].mxu0
        %v3058 = vadd.f32 %v2843, %v3057
        %v3059 = vpop.f32.mrb[0].mxu0
        %3060 = vdwg.mxu0
        %v3061 = vpack.c.bf16 %v2099, %v2096
        %v3062 = vpack.c.bf16 %v2107, %v2104
        %v3063 = vpack.c.bf16 %v2115, %v2112
        %v3064 = vpack.c.bf16 %v2123, %v2120
        %v3065 = vpack.c.bf16 %v2252, %v2249
        %v3066 = vpack.c.bf16 %v2260, %v2257
        %v3067 = vpack.c.bf16 %v2268, %v2265
        %v3068 = vpack.c.bf16 %v2276, %v2273
        %v3069 = vpack.c.bf16 %v2405, %v2402
        %v3070 = vpack.c.bf16 %v2413, %v2410
        %v3071 = vpack.c.bf16 %v2421, %v2418
        %v3072 = vpack.c.bf16 %v2429, %v2426
        %v3073 = vpack.c.bf16 %v2558, %v2555
        %v3074 = vpack.c.bf16 %v2566, %v2563
        %v3075 = vpack.c.bf16 %v2574, %v2571
        %v3076 = vpack.c.bf16 %v2582, %v2579
        %s3077 = scalar_lea.vmem %s5, 16
        %v3078 = vld [vmem:[%s3077] sm:$0xf]
        %v3079 = vld [vmem:[%s3077 + $0x4] sm:$0xf]
        %v3082 = vunpack.c.l.b16 %v3078
        %v3083 = vunpack.c.l.b16 %v3079
        %v3084 = vpack.c.b16 %v3083, %v3082
        %v3087 = vsel %vm2636, %v3061, 0
        %v3090 = vsel %vm2636, %v3062, 0
        %v3093 = vsel %vm2636, %v3063, 0
        %v3096 = vsel %vm2636, %v3064, 0
        %v3099 = vsel %vm2636, %v3065, 0
        %v3102 = vsel %vm2636, %v3066, 0
        %v3105 = vsel %vm2636, %v3067, 0
        %v3108 = vsel %vm2636, %v3068, 0
        %v3111 = vsel %vm2636, %v3069, 0
        %v3114 = vsel %vm2636, %v3070, 0
        %v3117 = vsel %vm2636, %v3071, 0
        %v3120 = vsel %vm2636, %v3072, 0
        %v3123 = vsel %vm2636, %v3073, 0
        %v3126 = vsel %vm2636, %v3074, 0
        %v3129 = vsel %vm2636, %v3075, 0
        %v3132 = vsel %vm2636, %v3076, 0
        %3134 = vmatprep.subr.bf16.mxu0 0
        %3135 = vmatpush1.bf16.msra.mxu0 %v3084
        %3136 = vmatprep.subr.bf16.mxu0 0
        %3137 = vmatpush1.bf16.msra.mxu0 0
        %3138 = vmatprep.subr.bf16.mxu0 0
        %3139 = vmatpush1.bf16.msra.mxu0 0
        %3140 = vmatprep.subr.bf16.mxu0 0
        %3141 = vmatpush1.bf16.msra.mxu0 0
        %3142 = vmatprep.subr.bf16.mxu0 0
        %3143 = vmatpush1.bf16.msra.mxu0 0
        %3144 = vmatprep.subr.bf16.mxu0 0
        %3145 = vmatpush1.bf16.msra.mxu0 0
        %3146 = vmatprep.subr.bf16.mxu0 0
        %3147 = vmatpush1.bf16.msra.mxu0 0
        %3148 = vmatprep.subr.bf16.mxu0 0
        %3149 = vmatpush1.bf16.msra.mxu0 0
        %3150 = vmatprep.subr.bf16.mxu0 0
        %3151 = vmatpush1.bf16.msra.mxu0 0
        %3152 = vmatprep.subr.bf16.mxu0 0
        %3153 = vmatpush1.bf16.msra.mxu0 0
        %3154 = vmatprep.subr.bf16.mxu0 0
        %3155 = vmatpush1.bf16.msra.mxu0 0
        %3156 = vmatprep.subr.bf16.mxu0 0
        %3157 = vmatpush1.bf16.msra.mxu0 0
        %3158 = vmatprep.subr.bf16.mxu0 0
        %3159 = vmatpush1.bf16.msra.mxu0 0
        %3160 = vmatprep.subr.bf16.mxu0 0
        %3161 = vmatpush1.bf16.msra.mxu0 0
        %3162 = vmatprep.subr.bf16.mxu0 0
        %3163 = vmatpush1.bf16.msra.mxu0 0
        %3164 = vmatprep.subr.bf16.mxu0 0
        %3165 = vmatpush1.bf16.msra.mxu0 0
        %3166 = vmatprep.mubr.bf16.mxu0 0
        %3167 = vmatmul.mubr.bf16.gmra.mrb[0].mxu0 %v3087
        %v3168 = vpop.f32.mrb[0].mxu0
        %v3169 = vadd.f32 0.0, %v3168
        %v3170 = vpop.f32.mrb[0].mxu0
        %v3171 = vpop.f32.mrb[0].mxu0
        %v3172 = vadd.f32 0.0, %v3171
        %v3173 = vpop.f32.mrb[0].mxu0
        %3174 = vmatprep.mubr.bf16.mxu0 0
        %3175 = vmatmul.mubr.bf16.gmra.mrb[0].mxu0 %v3090
        %v3176 = vpop.f32.mrb[0].mxu0
        %v3177 = vadd.f32 0.0, %v3176
        %v3178 = vpop.f32.mrb[0].mxu0
        %v3179 = vpop.f32.mrb[0].mxu0
        %v3180 = vadd.f32 0.0, %v3179
        %v3181 = vpop.f32.mrb[0].mxu0
        %3182 = vmatprep.mubr.bf16.mxu0 0
        %3183 = vmatmul.mubr.bf16.gmra.mrb[0].mxu0 %v3093
        %v3184 = vpop.f32.mrb[0].mxu0
        %v3185 = vadd.f32 0.0, %v3184
        %v3186 = vpop.f32.mrb[0].mxu0
        %v3187 = vpop.f32.mrb[0].mxu0
        %v3188 = vadd.f32 0.0, %v3187
        %v3189 = vpop.f32.mrb[0].mxu0
        %3190 = vmatprep.mubr.bf16.mxu0 0
        %3191 = vmatmul.mubr.bf16.gmra.mrb[0].mxu0 %v3096
        %v3192 = vpop.f32.mrb[0].mxu0
        %v3193 = vadd.f32 0.0, %v3192
        %v3194 = vpop.f32.mrb[0].mxu0
        %v3195 = vpop.f32.mrb[0].mxu0
        %v3196 = vadd.f32 0.0, %v3195
        %v3197 = vpop.f32.mrb[0].mxu0
        %3198 = vmatprep.mubr.bf16.mxu0 0
        %3199 = vmatmul.mubr.bf16.gmra.mrb[0].mxu0 %v3099
        %v3200 = vpop.f32.mrb[0].mxu0
        %v3201 = vadd.f32 0.0, %v3200
        %v3202 = vpop.f32.mrb[0].mxu0
        %v3203 = vpop.f32.mrb[0].mxu0
        %v3204 = vadd.f32 0.0, %v3203
        %v3205 = vpop.f32.mrb[0].mxu0
        %3206 = vmatprep.mubr.bf16.mxu0 0
        %3207 = vmatmul.mubr.bf16.gmra.mrb[0].mxu0 %v3102
        %v3208 = vpop.f32.mrb[0].mxu0
        %v3209 = vadd.f32 0.0, %v3208
        %v3210 = vpop.f32.mrb[0].mxu0
        %v3211 = vpop.f32.mrb[0].mxu0
        %v3212 = vadd.f32 0.0, %v3211
        %v3213 = vpop.f32.mrb[0].mxu0
        %3214 = vmatprep.mubr.bf16.mxu0 0
        %3215 = vmatmul.mubr.bf16.gmra.mrb[0].mxu0 %v3105
        %v3216 = vpop.f32.mrb[0].mxu0
        %v3217 = vadd.f32 0.0, %v3216
        %v3218 = vpop.f32.mrb[0].mxu0
        %v3219 = vpop.f32.mrb[0].mxu0
        %v3220 = vadd.f32 0.0, %v3219
        %v3221 = vpop.f32.mrb[0].mxu0
        %3222 = vmatprep.mubr.bf16.mxu0 0
        %3223 = vmatmul.mubr.bf16.gmra.mrb[0].mxu0 %v3108
        %v3224 = vpop.f32.mrb[0].mxu0
        %v3225 = vadd.f32 0.0, %v3224
        %v3226 = vpop.f32.mrb[0].mxu0
        %v3227 = vpop.f32.mrb[0].mxu0
        %v3228 = vadd.f32 0.0, %v3227
        %v3229 = vpop.f32.mrb[0].mxu0
        %3230 = vmatprep.mubr.bf16.mxu0 0
        %3231 = vmatmul.mubr.bf16.gmra.mrb[0].mxu0 %v3111
        %v3232 = vpop.f32.mrb[0].mxu0
        %v3233 = vadd.f32 0.0, %v3232
        %v3234 = vpop.f32.mrb[0].mxu0
        %v3235 = vpop.f32.mrb[0].mxu0
        %v3236 = vadd.f32 0.0, %v3235
        %v3237 = vpop.f32.mrb[0].mxu0
        %3238 = vmatprep.mubr.bf16.mxu0 0
        %3239 = vmatmul.mubr.bf16.gmra.mrb[0].mxu0 %v3114
        %v3240 = vpop.f32.mrb[0].mxu0
        %v3241 = vadd.f32 0.0, %v3240
        %v3242 = vpop.f32.mrb[0].mxu0
        %v3243 = vpop.f32.mrb[0].mxu0
        %v3244 = vadd.f32 0.0, %v3243
        %v3245 = vpop.f32.mrb[0].mxu0
        %3246 = vmatprep.mubr.bf16.mxu0 0
        %3247 = vmatmul.mubr.bf16.gmra.mrb[0].mxu0 %v3117
        %v3248 = vpop.f32.mrb[0].mxu0
        %v3249 = vadd.f32 0.0, %v3248
        %v3250 = vpop.f32.mrb[0].mxu0
        %v3251 = vpop.f32.mrb[0].mxu0
        %v3252 = vadd.f32 0.0, %v3251
        %v3253 = vpop.f32.mrb[0].mxu0
        %3254 = vmatprep.mubr.bf16.mxu0 0
        %3255 = vmatmul.mubr.bf16.gmra.mrb[0].mxu0 %v3120
        %v3256 = vpop.f32.mrb[0].mxu0
        %v3257 = vadd.f32 0.0, %v3256
        %v3258 = vpop.f32.mrb[0].mxu0
        %v3259 = vpop.f32.mrb[0].mxu0
        %v3260 = vadd.f32 0.0, %v3259
        %v3261 = vpop.f32.mrb[0].mxu0
        %3262 = vmatprep.mubr.bf16.mxu0 0
        %3263 = vmatmul.mubr.bf16.gmra.mrb[0].mxu0 %v3123
        %v3264 = vpop.f32.mrb[0].mxu0
        %v3265 = vadd.f32 0.0, %v3264
        %v3266 = vpop.f32.mrb[0].mxu0
        %v3267 = vpop.f32.mrb[0].mxu0
        %v3268 = vadd.f32 0.0, %v3267
        %v3269 = vpop.f32.mrb[0].mxu0
        %3270 = vmatprep.mubr.bf16.mxu0 0
        %3271 = vmatmul.mubr.bf16.gmra.mrb[0].mxu0 %v3126
        %v3272 = vpop.f32.mrb[0].mxu0
        %v3273 = vadd.f32 0.0, %v3272
        %v3274 = vpop.f32.mrb[0].mxu0
        %v3275 = vpop.f32.mrb[0].mxu0
        %v3276 = vadd.f32 0.0, %v3275
        %v3277 = vpop.f32.mrb[0].mxu0
        %3278 = vmatprep.mubr.bf16.mxu0 0
        %3279 = vmatmul.mubr.bf16.gmra.mrb[0].mxu0 %v3129
        %v3280 = vpop.f32.mrb[0].mxu0
        %v3281 = vadd.f32 0.0, %v3280
        %v3282 = vpop.f32.mrb[0].mxu0
        %v3283 = vpop.f32.mrb[0].mxu0
        %v3284 = vadd.f32 0.0, %v3283
        %v3285 = vpop.f32.mrb[0].mxu0
        %3286 = vmatprep.mubr.bf16.mxu0 0
        %3287 = vmatmul.mubr.bf16.gmra.mrb[0].mxu0 %v3132
        %v3288 = vpop.f32.mrb[0].mxu0
        %v3289 = vadd.f32 0.0, %v3288
        %v3290 = vpop.f32.mrb[0].mxu0
        %v3291 = vpop.f32.mrb[0].mxu0
        %v3292 = vadd.f32 0.0, %v3291
        %v3293 = vpop.f32.mrb[0].mxu0
        %3294 = vdwg.mxu0
        %v3295 = vadd.f32 %v2935, %v3169
        %v3296 = vadd.f32 %v2938, %v3172
        %v3297 = vadd.f32 %v2943, %v3177
        %v3298 = vadd.f32 %v2946, %v3180
        %v3299 = vadd.f32 %v2951, %v3185
        %v3300 = vadd.f32 %v2954, %v3188
        %v3301 = vadd.f32 %v2959, %v3193
        %v3302 = vadd.f32 %v2962, %v3196
        %v3303 = vadd.f32 %v2967, %v3201
        %v3304 = vadd.f32 %v2970, %v3204
        %v3305 = vadd.f32 %v2975, %v3209
        %v3306 = vadd.f32 %v2978, %v3212
        %v3307 = vadd.f32 %v2983, %v3217
        %v3308 = vadd.f32 %v2986, %v3220
        %v3309 = vadd.f32 %v2991, %v3225
        %v3310 = vadd.f32 %v2994, %v3228
        %v3311 = vadd.f32 %v2999, %v3233
        %v3312 = vadd.f32 %v3002, %v3236
        %v3313 = vadd.f32 %v3007, %v3241
        %v3314 = vadd.f32 %v3010, %v3244
        %v3315 = vadd.f32 %v3015, %v3249
        %v3316 = vadd.f32 %v3018, %v3252
        %v3317 = vadd.f32 %v3023, %v3257
        %v3318 = vadd.f32 %v3026, %v3260
        %v3319 = vadd.f32 %v3031, %v3265
        %v3320 = vadd.f32 %v3034, %v3268
        %v3321 = vadd.f32 %v3039, %v3273
        %v3322 = vadd.f32 %v3042, %v3276
        %v3323 = vadd.f32 %v3047, %v3281
        %v3324 = vadd.f32 %v3050, %v3284
        %v3325 = vadd.f32 %v3055, %v3289
        %v3326 = vadd.f32 %v3058, %v3292
        %v3327 = vpack.c.bf16 %v2024, %v2019
        %v3328 = vpack.c.bf16 %v2032, %v2027
        %v3329 = vpack.c.bf16 %v2040, %v2035
        %v3330 = vpack.c.bf16 %v2048, %v2043
        %v3331 = vpack.c.bf16 %v2177, %v2172
        %v3332 = vpack.c.bf16 %v2185, %v2180
        %v3333 = vpack.c.bf16 %v2193, %v2188
        %v3334 = vpack.c.bf16 %v2201, %v2196
        %v3335 = vpack.c.bf16 %v2330, %v2325
        %v3336 = vpack.c.bf16 %v2338, %v2333
        %v3337 = vpack.c.bf16 %v2346, %v2341
        %v3338 = vpack.c.bf16 %v2354, %v2349
        %v3339 = vpack.c.bf16 %v2483, %v2478
        %v3340 = vpack.c.bf16 %v2491, %v2486
        %v3341 = vpack.c.bf16 %v2499, %v2494
        %v3342 = vpack.c.bf16 %v2507, %v2502
        %s3343 = scalar_lea.vmem %s5, 24
        %v3344 = vld [vmem:[%s3343] sm:$0xf]
        %v3345 = vld [vmem:[%s3343 + $0x4] sm:$0xf]
        %v3348 = vunpack.c.l.b16 %v3344
        %v3349 = vunpack.c.l.b16 %v3345
        %v3350 = vpack.c.b16 %v3349, %v3348
        %v3353 = vsel %vm2636, %v3327, 0
        %v3356 = vsel %vm2636, %v3328, 0
        %v3359 = vsel %vm2636, %v3329, 0
        %v3362 = vsel %vm2636, %v3330, 0
        %v3365 = vsel %vm2636, %v3331, 0
        %v3368 = vsel %vm2636, %v3332, 0
        %v3371 = vsel %vm2636, %v3333, 0
        %v3374 = vsel %vm2636, %v3334, 0
        %v3377 = vsel %vm2636, %v3335, 0
        %v3380 = vsel %vm2636, %v3336, 0
        %v3383 = vsel %vm2636, %v3337, 0
        %v3386 = vsel %vm2636, %v3338, 0
        %v3389 = vsel %vm2636, %v3339, 0
        %v3392 = vsel %vm2636, %v3340, 0
        %v3395 = vsel %vm2636, %v3341, 0
        %v3398 = vsel %vm2636, %v3342, 0
        %3400 = vmatprep.subr.bf16.mxu0 0
        %3401 = vmatpush1.bf16.msra.mxu0 %v3350
        %3402 = vmatprep.subr.bf16.mxu0 0
        %3403 = vmatpush1.bf16.msra.mxu0 0
        %3404 = vmatprep.subr.bf16.mxu0 0
        %3405 = vmatpush1.bf16.msra.mxu0 0
        %3406 = vmatprep.subr.bf16.mxu0 0
        %3407 = vmatpush1.bf16.msra.mxu0 0
        %3408 = vmatprep.subr.bf16.mxu0 0
        %3409 = vmatpush1.bf16.msra.mxu0 0
        %3410 = vmatprep.subr.bf16.mxu0 0
        %3411 = vmatpush1.bf16.msra.mxu0 0
        %3412 = vmatprep.subr.bf16.mxu0 0
        %3413 = vmatpush1.bf16.msra.mxu0 0
        %3414 = vmatprep.subr.bf16.mxu0 0
        %3415 = vmatpush1.bf16.msra.mxu0 0
        %3416 = vmatprep.subr.bf16.mxu0 0
        %3417 = vmatpush1.bf16.msra.mxu0 0
        %3418 = vmatprep.subr.bf16.mxu0 0
        %3419 = vmatpush1.bf16.msra.mxu0 0
        %3420 = vmatprep.subr.bf16.mxu0 0
        %3421 = vmatpush1.bf16.msra.mxu0 0
        %3422 = vmatprep.subr.bf16.mxu0 0
        %3423 = vmatpush1.bf16.msra.mxu0 0
        %3424 = vmatprep.subr.bf16.mxu0 0
        %3425 = vmatpush1.bf16.msra.mxu0 0
        %3426 = vmatprep.subr.bf16.mxu0 0
        %3427 = vmatpush1.bf16.msra.mxu0 0
        %3428 = vmatprep.subr.bf16.mxu0 0
        %3429 = vmatpush1.bf16.msra.mxu0 0
        %3430 = vmatprep.subr.bf16.mxu0 0
        %3431 = vmatpush1.bf16.msra.mxu0 0
        %3432 = vmatprep.mubr.bf16.mxu0 0
        %3433 = vmatmul.mubr.bf16.gmra.mrb[0].mxu0 %v3353
        %v3434 = vpop.f32.mrb[0].mxu0
        %v3435 = vadd.f32 0.0, %v3434
        %v3436 = vpop.f32.mrb[0].mxu0
        %v3437 = vpop.f32.mrb[0].mxu0
        %v3438 = vadd.f32 0.0, %v3437
        %v3439 = vpop.f32.mrb[0].mxu0
        %3440 = vmatprep.mubr.bf16.mxu0 0
        %3441 = vmatmul.mubr.bf16.gmra.mrb[0].mxu0 %v3356
        %v3442 = vpop.f32.mrb[0].mxu0
        %v3443 = vadd.f32 0.0, %v3442
        %v3444 = vpop.f32.mrb[0].mxu0
        %v3445 = vpop.f32.mrb[0].mxu0
        %v3446 = vadd.f32 0.0, %v3445
        %v3447 = vpop.f32.mrb[0].mxu0
        %3448 = vmatprep.mubr.bf16.mxu0 0
        %3449 = vmatmul.mubr.bf16.gmra.mrb[0].mxu0 %v3359
        %v3450 = vpop.f32.mrb[0].mxu0
        %v3451 = vadd.f32 0.0, %v3450
        %v3452 = vpop.f32.mrb[0].mxu0
        %v3453 = vpop.f32.mrb[0].mxu0
        %v3454 = vadd.f32 0.0, %v3453
        %v3455 = vpop.f32.mrb[0].mxu0
        %3456 = vmatprep.mubr.bf16.mxu0 0
        %3457 = vmatmul.mubr.bf16.gmra.mrb[0].mxu0 %v3362
        %v3458 = vpop.f32.mrb[0].mxu0
        %v3459 = vadd.f32 0.0, %v3458
        %v3460 = vpop.f32.mrb[0].mxu0
        %v3461 = vpop.f32.mrb[0].mxu0
        %v3462 = vadd.f32 0.0, %v3461
        %v3463 = vpop.f32.mrb[0].mxu0
        %3464 = vmatprep.mubr.bf16.mxu0 0
        %3465 = vmatmul.mubr.bf16.gmra.mrb[0].mxu0 %v3365
        %v3466 = vpop.f32.mrb[0].mxu0
        %v3467 = vadd.f32 0.0, %v3466
        %v3468 = vpop.f32.mrb[0].mxu0
        %v3469 = vpop.f32.mrb[0].mxu0
        %v3470 = vadd.f32 0.0, %v3469
        %v3471 = vpop.f32.mrb[0].mxu0
        %3472 = vmatprep.mubr.bf16.mxu0 0
        %3473 = vmatmul.mubr.bf16.gmra.mrb[0].mxu0 %v3368
        %v3474 = vpop.f32.mrb[0].mxu0
        %v3475 = vadd.f32 0.0, %v3474
        %v3476 = vpop.f32.mrb[0].mxu0
        %v3477 = vpop.f32.mrb[0].mxu0
        %v3478 = vadd.f32 0.0, %v3477
        %v3479 = vpop.f32.mrb[0].mxu0
        %3480 = vmatprep.mubr.bf16.mxu0 0
        %3481 = vmatmul.mubr.bf16.gmra.mrb[0].mxu0 %v3371
        %v3482 = vpop.f32.mrb[0].mxu0
        %v3483 = vadd.f32 0.0, %v3482
        %v3484 = vpop.f32.mrb[0].mxu0
        %v3485 = vpop.f32.mrb[0].mxu0
        %v3486 = vadd.f32 0.0, %v3485
        %v3487 = vpop.f32.mrb[0].mxu0
        %3488 = vmatprep.mubr.bf16.mxu0 0
        %3489 = vmatmul.mubr.bf16.gmra.mrb[0].mxu0 %v3374
        %v3490 = vpop.f32.mrb[0].mxu0
        %v3491 = vadd.f32 0.0, %v3490
        %v3492 = vpop.f32.mrb[0].mxu0
        %v3493 = vpop.f32.mrb[0].mxu0
        %v3494 = vadd.f32 0.0, %v3493
        %v3495 = vpop.f32.mrb[0].mxu0
        %3496 = vmatprep.mubr.bf16.mxu0 0
        %3497 = vmatmul.mubr.bf16.gmra.mrb[0].mxu0 %v3377
        %v3498 = vpop.f32.mrb[0].mxu0
        %v3499 = vadd.f32 0.0, %v3498
        %v3500 = vpop.f32.mrb[0].mxu0
        %v3501 = vpop.f32.mrb[0].mxu0
        %v3502 = vadd.f32 0.0, %v3501
        %v3503 = vpop.f32.mrb[0].mxu0
        %3504 = vmatprep.mubr.bf16.mxu0 0
        %3505 = vmatmul.mubr.bf16.gmra.mrb[0].mxu0 %v3380
        %v3506 = vpop.f32.mrb[0].mxu0
        %v3507 = vadd.f32 0.0, %v3506
        %v3508 = vpop.f32.mrb[0].mxu0
        %v3509 = vpop.f32.mrb[0].mxu0
        %v3510 = vadd.f32 0.0, %v3509
        %v3511 = vpop.f32.mrb[0].mxu0
        %3512 = vmatprep.mubr.bf16.mxu0 0
        %3513 = vmatmul.mubr.bf16.gmra.mrb[0].mxu0 %v3383
        %v3514 = vpop.f32.mrb[0].mxu0
        %v3515 = vadd.f32 0.0, %v3514
        %v3516 = vpop.f32.mrb[0].mxu0
        %v3517 = vpop.f32.mrb[0].mxu0
        %v3518 = vadd.f32 0.0, %v3517
        %v3519 = vpop.f32.mrb[0].mxu0
        %3520 = vmatprep.mubr.bf16.mxu0 0
        %3521 = vmatmul.mubr.bf16.gmra.mrb[0].mxu0 %v3386
        %v3522 = vpop.f32.mrb[0].mxu0
        %v3523 = vadd.f32 0.0, %v3522
        %v3524 = vpop.f32.mrb[0].mxu0
        %v3525 = vpop.f32.mrb[0].mxu0
        %v3526 = vadd.f32 0.0, %v3525
        %v3527 = vpop.f32.mrb[0].mxu0
        %3528 = vmatprep.mubr.bf16.mxu0 0
        %3529 = vmatmul.mubr.bf16.gmra.mrb[0].mxu0 %v3389
        %v3530 = vpop.f32.mrb[0].mxu0
        %v3531 = vadd.f32 0.0, %v3530
        %v3532 = vpop.f32.mrb[0].mxu0
        %v3533 = vpop.f32.mrb[0].mxu0
        %v3534 = vadd.f32 0.0, %v3533
        %v3535 = vpop.f32.mrb[0].mxu0
        %3536 = vmatprep.mubr.bf16.mxu0 0
        %3537 = vmatmul.mubr.bf16.gmra.mrb[0].mxu0 %v3392
        %v3538 = vpop.f32.mrb[0].mxu0
        %v3539 = vadd.f32 0.0, %v3538
        %v3540 = vpop.f32.mrb[0].mxu0
        %v3541 = vpop.f32.mrb[0].mxu0
        %v3542 = vadd.f32 0.0, %v3541
        %v3543 = vpop.f32.mrb[0].mxu0
        %3544 = vmatprep.mubr.bf16.mxu0 0
        %3545 = vmatmul.mubr.bf16.gmra.mrb[0].mxu0 %v3395
        %v3546 = vpop.f32.mrb[0].mxu0
        %v3547 = vadd.f32 0.0, %v3546
        %v3548 = vpop.f32.mrb[0].mxu0
        %v3549 = vpop.f32.mrb[0].mxu0
        %v3550 = vadd.f32 0.0, %v3549
        %v3551 = vpop.f32.mrb[0].mxu0
        %3552 = vmatprep.mubr.bf16.mxu0 0
        %3553 = vmatmul.mubr.bf16.gmra.mrb[0].mxu0 %v3398
        %v3554 = vpop.f32.mrb[0].mxu0
        %v3555 = vadd.f32 0.0, %v3554
        %v3556 = vpop.f32.mrb[0].mxu0
        %v3557 = vpop.f32.mrb[0].mxu0
        %v3558 = vadd.f32 0.0, %v3557
        %v3559 = vpop.f32.mrb[0].mxu0
        %3560 = vdwg.mxu0
        %v3561 = vadd.f32 %v3295, %v3435
        %v3562 = vadd.f32 %v3296, %v3438
        %v3563 = vadd.f32 %v3297, %v3443
        %v3564 = vadd.f32 %v3298, %v3446
        %v3565 = vadd.f32 %v3299, %v3451
        %v3566 = vadd.f32 %v3300, %v3454
        %v3567 = vadd.f32 %v3301, %v3459
        %v3568 = vadd.f32 %v3302, %v3462
        %v3569 = vadd.f32 %v3303, %v3467
        %v3570 = vadd.f32 %v3304, %v3470
        %v3571 = vadd.f32 %v3305, %v3475
        %v3572 = vadd.f32 %v3306, %v3478
        %v3573 = vadd.f32 %v3307, %v3483
        %v3574 = vadd.f32 %v3308, %v3486
        %v3575 = vadd.f32 %v3309, %v3491
        %v3576 = vadd.f32 %v3310, %v3494
        %v3577 = vadd.f32 %v3311, %v3499
        %v3578 = vadd.f32 %v3312, %v3502
        %v3579 = vadd.f32 %v3313, %v3507
        %v3580 = vadd.f32 %v3314, %v3510
        %v3581 = vadd.f32 %v3315, %v3515
        %v3582 = vadd.f32 %v3316, %v3518
        %v3583 = vadd.f32 %v3317, %v3523
        %v3584 = vadd.f32 %v3318, %v3526
        %v3585 = vadd.f32 %v3319, %v3531
        %v3586 = vadd.f32 %v3320, %v3534
        %v3587 = vadd.f32 %v3321, %v3539
        %v3588 = vadd.f32 %v3322, %v3542
        %v3589 = vadd.f32 %v3323, %v3547
        %v3590 = vadd.f32 %v3324, %v3550
        %v3591 = vadd.f32 %v3325, %v3555
        %v3592 = vadd.f32 %v3326, %v3558
        %v3593 = vpack.c.bf16 %v2064, %v2059
        %v3594 = vpack.c.bf16 %v2072, %v2067
        %v3595 = vpack.c.bf16 %v2080, %v2075
        %v3596 = vpack.c.bf16 %v2088, %v2083
        %v3597 = vpack.c.bf16 %v2217, %v2212
        %v3598 = vpack.c.bf16 %v2225, %v2220
        %v3599 = vpack.c.bf16 %v2233, %v2228
        %v3600 = vpack.c.bf16 %v2241, %v2236
        %v3601 = vpack.c.bf16 %v2370, %v2365
        %v3602 = vpack.c.bf16 %v2378, %v2373
        %v3603 = vpack.c.bf16 %v2386, %v2381
        %v3604 = vpack.c.bf16 %v2394, %v2389
        %v3605 = vpack.c.bf16 %v2523, %v2518
        %v3606 = vpack.c.bf16 %v2531, %v2526
        %v3607 = vpack.c.bf16 %v2539, %v2534
        %v3608 = vpack.c.bf16 %v2547, %v2542
        %s3609 = scalar_lea.vmem %s5, 32
        %v3610 = vld [vmem:[%s3609] sm:$0xf]
        %v3611 = vld [vmem:[%s3609 + $0x4] sm:$0xf]
        %v3614 = vunpack.c.l.b16 %v3610
        %v3615 = vunpack.c.l.b16 %v3611
        %v3616 = vpack.c.b16 %v3615, %v3614
        %v3619 = vsel %vm2636, %v3593, 0
        %v3622 = vsel %vm2636, %v3594, 0
        %v3625 = vsel %vm2636, %v3595, 0
        %v3628 = vsel %vm2636, %v3596, 0
        %v3631 = vsel %vm2636, %v3597, 0
        %v3634 = vsel %vm2636, %v3598, 0
        %v3637 = vsel %vm2636, %v3599, 0
        %v3640 = vsel %vm2636, %v3600, 0
        %v3643 = vsel %vm2636, %v3601, 0
        %v3646 = vsel %vm2636, %v3602, 0
        %v3649 = vsel %vm2636, %v3603, 0
        %v3652 = vsel %vm2636, %v3604, 0
        %v3655 = vsel %vm2636, %v3605, 0
        %v3658 = vsel %vm2636, %v3606, 0
        %v3661 = vsel %vm2636, %v3607, 0
        %v3664 = vsel %vm2636, %v3608, 0
        %3666 = vmatprep.subr.bf16.mxu0 0
        %3667 = vmatpush1.bf16.msra.mxu0 %v3616
        %3668 = vmatprep.subr.bf16.mxu0 0
        %3669 = vmatpush1.bf16.msra.mxu0 0
        %3670 = vmatprep.subr.bf16.mxu0 0
        %3671 = vmatpush1.bf16.msra.mxu0 0
        %3672 = vmatprep.subr.bf16.mxu0 0
        %3673 = vmatpush1.bf16.msra.mxu0 0
        %3674 = vmatprep.subr.bf16.mxu0 0
        %3675 = vmatpush1.bf16.msra.mxu0 0
        %3676 = vmatprep.subr.bf16.mxu0 0
        %3677 = vmatpush1.bf16.msra.mxu0 0
        %3678 = vmatprep.subr.bf16.mxu0 0
        %3679 = vmatpush1.bf16.msra.mxu0 0
        %3680 = vmatprep.subr.bf16.mxu0 0
        %3681 = vmatpush1.bf16.msra.mxu0 0
        %3682 = vmatprep.subr.bf16.mxu0 0
        %3683 = vmatpush1.bf16.msra.mxu0 0
        %3684 = vmatprep.subr.bf16.mxu0 0
        %3685 = vmatpush1.bf16.msra.mxu0 0
        %3686 = vmatprep.subr.bf16.mxu0 0
        %3687 = vmatpush1.bf16.msra.mxu0 0
        %3688 = vmatprep.subr.bf16.mxu0 0
        %3689 = vmatpush1.bf16.msra.mxu0 0
        %3690 = vmatprep.subr.bf16.mxu0 0
        %3691 = vmatpush1.bf16.msra.mxu0 0
        %3692 = vmatprep.subr.bf16.mxu0 0
        %3693 = vmatpush1.bf16.msra.mxu0 0
        %3694 = vmatprep.subr.bf16.mxu0 0
        %3695 = vmatpush1.bf16.msra.mxu0 0
        %3696 = vmatprep.subr.bf16.mxu0 0
        %3697 = vmatpush1.bf16.msra.mxu0 0
        %3698 = vmatprep.mubr.bf16.mxu0 0
        %3699 = vmatmul.mubr.bf16.gmra.mrb[0].mxu0 %v3619
        %v3700 = vpop.f32.mrb[0].mxu0
        %v3701 = vadd.f32 0.0, %v3700
        %v3702 = vpop.f32.mrb[0].mxu0
        %v3703 = vpop.f32.mrb[0].mxu0
        %v3704 = vadd.f32 0.0, %v3703
        %v3705 = vpop.f32.mrb[0].mxu0
        %3706 = vmatprep.mubr.bf16.mxu0 0
        %3707 = vmatmul.mubr.bf16.gmra.mrb[0].mxu0 %v3622
        %v3708 = vpop.f32.mrb[0].mxu0
        %v3709 = vadd.f32 0.0, %v3708
        %v3710 = vpop.f32.mrb[0].mxu0
        %v3711 = vpop.f32.mrb[0].mxu0
        %v3712 = vadd.f32 0.0, %v3711
        %v3713 = vpop.f32.mrb[0].mxu0
        %3714 = vmatprep.mubr.bf16.mxu0 0
        %3715 = vmatmul.mubr.bf16.gmra.mrb[0].mxu0 %v3625
        %v3716 = vpop.f32.mrb[0].mxu0
        %v3717 = vadd.f32 0.0, %v3716
        %v3718 = vpop.f32.mrb[0].mxu0
        %v3719 = vpop.f32.mrb[0].mxu0
        %v3720 = vadd.f32 0.0, %v3719
        %v3721 = vpop.f32.mrb[0].mxu0
        %3722 = vmatprep.mubr.bf16.mxu0 0
        %3723 = vmatmul.mubr.bf16.gmra.mrb[0].mxu0 %v3628
        %v3724 = vpop.f32.mrb[0].mxu0
        %v3725 = vadd.f32 0.0, %v3724
        %v3726 = vpop.f32.mrb[0].mxu0
        %v3727 = vpop.f32.mrb[0].mxu0
        %v3728 = vadd.f32 0.0, %v3727
        %v3729 = vpop.f32.mrb[0].mxu0
        %3730 = vmatprep.mubr.bf16.mxu0 0
        %3731 = vmatmul.mubr.bf16.gmra.mrb[0].mxu0 %v3631
        %v3732 = vpop.f32.mrb[0].mxu0
        %v3733 = vadd.f32 0.0, %v3732
        %v3734 = vpop.f32.mrb[0].mxu0
        %v3735 = vpop.f32.mrb[0].mxu0
        %v3736 = vadd.f32 0.0, %v3735
        %v3737 = vpop.f32.mrb[0].mxu0
        %3738 = vmatprep.mubr.bf16.mxu0 0
        %3739 = vmatmul.mubr.bf16.gmra.mrb[0].mxu0 %v3634
        %v3740 = vpop.f32.mrb[0].mxu0
        %v3741 = vadd.f32 0.0, %v3740
        %v3742 = vpop.f32.mrb[0].mxu0
        %v3743 = vpop.f32.mrb[0].mxu0
        %v3744 = vadd.f32 0.0, %v3743
        %v3745 = vpop.f32.mrb[0].mxu0
        %3746 = vmatprep.mubr.bf16.mxu0 0
        %3747 = vmatmul.mubr.bf16.gmra.mrb[0].mxu0 %v3637
        %v3748 = vpop.f32.mrb[0].mxu0
        %v3749 = vadd.f32 0.0, %v3748
        %v3750 = vpop.f32.mrb[0].mxu0
        %v3751 = vpop.f32.mrb[0].mxu0
        %v3752 = vadd.f32 0.0, %v3751
        %v3753 = vpop.f32.mrb[0].mxu0
        %3754 = vmatprep.mubr.bf16.mxu0 0
        %3755 = vmatmul.mubr.bf16.gmra.mrb[0].mxu0 %v3640
        %v3756 = vpop.f32.mrb[0].mxu0
        %v3757 = vadd.f32 0.0, %v3756
        %v3758 = vpop.f32.mrb[0].mxu0
        %v3759 = vpop.f32.mrb[0].mxu0
        %v3760 = vadd.f32 0.0, %v3759
        %v3761 = vpop.f32.mrb[0].mxu0
        %3762 = vmatprep.mubr.bf16.mxu0 0
        %3763 = vmatmul.mubr.bf16.gmra.mrb[0].mxu0 %v3643
        %v3764 = vpop.f32.mrb[0].mxu0
        %v3765 = vadd.f32 0.0, %v3764
        %v3766 = vpop.f32.mrb[0].mxu0
        %v3767 = vpop.f32.mrb[0].mxu0
        %v3768 = vadd.f32 0.0, %v3767
        %v3769 = vpop.f32.mrb[0].mxu0
        %3770 = vmatprep.mubr.bf16.mxu0 0
        %3771 = vmatmul.mubr.bf16.gmra.mrb[0].mxu0 %v3646
        %v3772 = vpop.f32.mrb[0].mxu0
        %v3773 = vadd.f32 0.0, %v3772
        %v3774 = vpop.f32.mrb[0].mxu0
        %v3775 = vpop.f32.mrb[0].mxu0
        %v3776 = vadd.f32 0.0, %v3775
        %v3777 = vpop.f32.mrb[0].mxu0
        %3778 = vmatprep.mubr.bf16.mxu0 0
        %3779 = vmatmul.mubr.bf16.gmra.mrb[0].mxu0 %v3649
        %v3780 = vpop.f32.mrb[0].mxu0
        %v3781 = vadd.f32 0.0, %v3780
        %v3782 = vpop.f32.mrb[0].mxu0
        %v3783 = vpop.f32.mrb[0].mxu0
        %v3784 = vadd.f32 0.0, %v3783
        %v3785 = vpop.f32.mrb[0].mxu0
        %3786 = vmatprep.mubr.bf16.mxu0 0
        %3787 = vmatmul.mubr.bf16.gmra.mrb[0].mxu0 %v3652
        %v3788 = vpop.f32.mrb[0].mxu0
        %v3789 = vadd.f32 0.0, %v3788
        %v3790 = vpop.f32.mrb[0].mxu0
        %v3791 = vpop.f32.mrb[0].mxu0
        %v3792 = vadd.f32 0.0, %v3791
        %v3793 = vpop.f32.mrb[0].mxu0
        %3794 = vmatprep.mubr.bf16.mxu0 0
        %3795 = vmatmul.mubr.bf16.gmra.mrb[0].mxu0 %v3655
        %v3796 = vpop.f32.mrb[0].mxu0
        %v3797 = vadd.f32 0.0, %v3796
        %v3798 = vpop.f32.mrb[0].mxu0
        %v3799 = vpop.f32.mrb[0].mxu0
        %v3800 = vadd.f32 0.0, %v3799
        %v3801 = vpop.f32.mrb[0].mxu0
        %3802 = vmatprep.mubr.bf16.mxu0 0
        %3803 = vmatmul.mubr.bf16.gmra.mrb[0].mxu0 %v3658
        %v3804 = vpop.f32.mrb[0].mxu0
        %v3805 = vadd.f32 0.0, %v3804
        %v3806 = vpop.f32.mrb[0].mxu0
        %v3807 = vpop.f32.mrb[0].mxu0
        %v3808 = vadd.f32 0.0, %v3807
        %v3809 = vpop.f32.mrb[0].mxu0
        %3810 = vmatprep.mubr.bf16.mxu0 0
        %3811 = vmatmul.mubr.bf16.gmra.mrb[0].mxu0 %v3661
        %v3812 = vpop.f32.mrb[0].mxu0
        %v3813 = vadd.f32 0.0, %v3812
        %v3814 = vpop.f32.mrb[0].mxu0
        %v3815 = vpop.f32.mrb[0].mxu0
        %v3816 = vadd.f32 0.0, %v3815
        %v3817 = vpop.f32.mrb[0].mxu0
        %3818 = vmatprep.mubr.bf16.mxu0 0
        %3819 = vmatmul.mubr.bf16.gmra.mrb[0].mxu0 %v3664
        %v3820 = vpop.f32.mrb[0].mxu0
        %v3821 = vadd.f32 0.0, %v3820
        %v3822 = vpop.f32.mrb[0].mxu0
        %v3823 = vpop.f32.mrb[0].mxu0
        %v3824 = vadd.f32 0.0, %v3823
        %v3825 = vpop.f32.mrb[0].mxu0
        %3826 = vdwg.mxu0
        %v3827 = vadd.f32 %v3561, %v3701
        %v3828 = vadd.f32 %v3562, %v3704
        %v3829 = vadd.f32 %v3563, %v3709
        %v3830 = vadd.f32 %v3564, %v3712
        %v3831 = vadd.f32 %v3565, %v3717
        %v3832 = vadd.f32 %v3566, %v3720
        %v3833 = vadd.f32 %v3567, %v3725
        %v3834 = vadd.f32 %v3568, %v3728
        %v3835 = vadd.f32 %v3569, %v3733
        %v3836 = vadd.f32 %v3570, %v3736
        %v3837 = vadd.f32 %v3571, %v3741
        %v3838 = vadd.f32 %v3572, %v3744
        %v3839 = vadd.f32 %v3573, %v3749
        %v3840 = vadd.f32 %v3574, %v3752
        %v3841 = vadd.f32 %v3575, %v3757
        %v3842 = vadd.f32 %v3576, %v3760
        %v3843 = vadd.f32 %v3577, %v3765
        %v3844 = vadd.f32 %v3578, %v3768
        %v3845 = vadd.f32 %v3579, %v3773
        %v3846 = vadd.f32 %v3580, %v3776
        %v3847 = vadd.f32 %v3581, %v3781
        %v3848 = vadd.f32 %v3582, %v3784
        %v3849 = vadd.f32 %v3583, %v3789
        %v3850 = vadd.f32 %v3584, %v3792
        %v3851 = vadd.f32 %v3585, %v3797
        %v3852 = vadd.f32 %v3586, %v3800
        %v3853 = vadd.f32 %v3587, %v3805
        %v3854 = vadd.f32 %v3588, %v3808
        %v3855 = vadd.f32 %v3589, %v3813
        %v3856 = vadd.f32 %v3590, %v3816
        %v3857 = vadd.f32 %v3591, %v3821
        %v3858 = vadd.f32 %v3592, %v3824
        %v3859 = vpack.c.bf16 %v2104, %v2099
        %v3860 = vpack.c.bf16 %v2112, %v2107
        %v3861 = vpack.c.bf16 %v2120, %v2115
        %v3862 = vpack.c.bf16 %v2128, %v2123
        %v3863 = vpack.c.bf16 %v2257, %v2252
        %v3864 = vpack.c.bf16 %v2265, %v2260
        %v3865 = vpack.c.bf16 %v2273, %v2268
        %v3866 = vpack.c.bf16 %v2281, %v2276
        %v3867 = vpack.c.bf16 %v2410, %v2405
        %v3868 = vpack.c.bf16 %v2418, %v2413
        %v3869 = vpack.c.bf16 %v2426, %v2421
        %v3870 = vpack.c.bf16 %v2434, %v2429
        %v3871 = vpack.c.bf16 %v2563, %v2558
        %v3872 = vpack.c.bf16 %v2571, %v2566
        %v3873 = vpack.c.bf16 %v2579, %v2574
        %v3874 = vpack.c.bf16 %v2587, %v2582
        %s3875 = scalar_lea.vmem %s5, 40
        %v3876 = vld [vmem:[%s3875] sm:$0xf]
        %v3877 = vld [vmem:[%s3875 + $0x4] sm:$0xf]
        %v3880 = vunpack.c.l.b16 %v3876
        %v3881 = vunpack.c.l.b16 %v3877
        %v3882 = vpack.c.b16 %v3881, %v3880
        %v3885 = vsel %vm2636, %v3859, 0
        %v3888 = vsel %vm2636, %v3860, 0
        %v3891 = vsel %vm2636, %v3861, 0
        %v3894 = vsel %vm2636, %v3862, 0
        %v3897 = vsel %vm2636, %v3863, 0
        %v3900 = vsel %vm2636, %v3864, 0
        %v3903 = vsel %vm2636, %v3865, 0
        %v3906 = vsel %vm2636, %v3866, 0
        %v3909 = vsel %vm2636, %v3867, 0
        %v3912 = vsel %vm2636, %v3868, 0
        %v3915 = vsel %vm2636, %v3869, 0
        %v3918 = vsel %vm2636, %v3870, 0
        %v3921 = vsel %vm2636, %v3871, 0
        %v3924 = vsel %vm2636, %v3872, 0
        %v3927 = vsel %vm2636, %v3873, 0
        %v3930 = vsel %vm2636, %v3874, 0
        %3932 = vmatprep.subr.bf16.mxu0 0
        %3933 = vmatpush1.bf16.msra.mxu0 %v3882
        %3934 = vmatprep.subr.bf16.mxu0 0
        %3935 = vmatpush1.bf16.msra.mxu0 0
        %3936 = vmatprep.subr.bf16.mxu0 0
        %3937 = vmatpush1.bf16.msra.mxu0 0
        %3938 = vmatprep.subr.bf16.mxu0 0
        %3939 = vmatpush1.bf16.msra.mxu0 0
        %3940 = vmatprep.subr.bf16.mxu0 0
        %3941 = vmatpush1.bf16.msra.mxu0 0
        %3942 = vmatprep.subr.bf16.mxu0 0
        %3943 = vmatpush1.bf16.msra.mxu0 0
        %3944 = vmatprep.subr.bf16.mxu0 0
        %3945 = vmatpush1.bf16.msra.mxu0 0
        %3946 = vmatprep.subr.bf16.mxu0 0
        %3947 = vmatpush1.bf16.msra.mxu0 0
        %3948 = vmatprep.subr.bf16.mxu0 0
        %3949 = vmatpush1.bf16.msra.mxu0 0
        %3950 = vmatprep.subr.bf16.mxu0 0
        %3951 = vmatpush1.bf16.msra.mxu0 0
        %3952 = vmatprep.subr.bf16.mxu0 0
        %3953 = vmatpush1.bf16.msra.mxu0 0
        %3954 = vmatprep.subr.bf16.mxu0 0
        %3955 = vmatpush1.bf16.msra.mxu0 0
        %3956 = vmatprep.subr.bf16.mxu0 0
        %3957 = vmatpush1.bf16.msra.mxu0 0
        %3958 = vmatprep.subr.bf16.mxu0 0
        %3959 = vmatpush1.bf16.msra.mxu0 0
        %3960 = vmatprep.subr.bf16.mxu0 0
        %3961 = vmatpush1.bf16.msra.mxu0 0
        %3962 = vmatprep.subr.bf16.mxu0 0
        %3963 = vmatpush1.bf16.msra.mxu0 0
        %3964 = vmatprep.mubr.bf16.mxu0 0
        %3965 = vmatmul.mubr.bf16.gmra.mrb[0].mxu0 %v3885
        %v3966 = vpop.f32.mrb[0].mxu0
        %v3967 = vadd.f32 0.0, %v3966
        %v3968 = vpop.f32.mrb[0].mxu0
        %v3969 = vpop.f32.mrb[0].mxu0
        %v3970 = vadd.f32 0.0, %v3969
        %v3971 = vpop.f32.mrb[0].mxu0
        %3972 = vmatprep.mubr.bf16.mxu0 0
        %3973 = vmatmul.mubr.bf16.gmra.mrb[0].mxu0 %v3888
        %v3974 = vpop.f32.mrb[0].mxu0
        %v3975 = vadd.f32 0.0, %v3974
        %v3976 = vpop.f32.mrb[0].mxu0
        %v3977 = vpop.f32.mrb[0].mxu0
        %v3978 = vadd.f32 0.0, %v3977
        %v3979 = vpop.f32.mrb[0].mxu0
        %3980 = vmatprep.mubr.bf16.mxu0 0
        %3981 = vmatmul.mubr.bf16.gmra.mrb[0].mxu0 %v3891
        %v3982 = vpop.f32.mrb[0].mxu0
        %v3983 = vadd.f32 0.0, %v3982
        %v3984 = vpop.f32.mrb[0].mxu0
        %v3985 = vpop.f32.mrb[0].mxu0
        %v3986 = vadd.f32 0.0, %v3985
        %v3987 = vpop.f32.mrb[0].mxu0
        %3988 = vmatprep.mubr.bf16.mxu0 0
        %3989 = vmatmul.mubr.bf16.gmra.mrb[0].mxu0 %v3894
        %v3990 = vpop.f32.mrb[0].mxu0
        %v3991 = vadd.f32 0.0, %v3990
        %v3992 = vpop.f32.mrb[0].mxu0
        %v3993 = vpop.f32.mrb[0].mxu0
        %v3994 = vadd.f32 0.0, %v3993
        %v3995 = vpop.f32.mrb[0].mxu0
        %3996 = vmatprep.mubr.bf16.mxu0 0
        %3997 = vmatmul.mubr.bf16.gmra.mrb[0].mxu0 %v3897
        %v3998 = vpop.f32.mrb[0].mxu0
        %v3999 = vadd.f32 0.0, %v3998
        %v4000 = vpop.f32.mrb[0].mxu0
        %v4001 = vpop.f32.mrb[0].mxu0
        %v4002 = vadd.f32 0.0, %v4001
        %v4003 = vpop.f32.mrb[0].mxu0
        %4004 = vmatprep.mubr.bf16.mxu0 0
        %4005 = vmatmul.mubr.bf16.gmra.mrb[0].mxu0 %v3900
        %v4006 = vpop.f32.mrb[0].mxu0
        %v4007 = vadd.f32 0.0, %v4006
        %v4008 = vpop.f32.mrb[0].mxu0
        %v4009 = vpop.f32.mrb[0].mxu0
        %v4010 = vadd.f32 0.0, %v4009
        %v4011 = vpop.f32.mrb[0].mxu0
        %4012 = vmatprep.mubr.bf16.mxu0 0
        %4013 = vmatmul.mubr.bf16.gmra.mrb[0].mxu0 %v3903
        %v4014 = vpop.f32.mrb[0].mxu0
        %v4015 = vadd.f32 0.0, %v4014
        %v4016 = vpop.f32.mrb[0].mxu0
        %v4017 = vpop.f32.mrb[0].mxu0
        %v4018 = vadd.f32 0.0, %v4017
        %v4019 = vpop.f32.mrb[0].mxu0
        %4020 = vmatprep.mubr.bf16.mxu0 0
        %4021 = vmatmul.mubr.bf16.gmra.mrb[0].mxu0 %v3906
        %v4022 = vpop.f32.mrb[0].mxu0
        %v4023 = vadd.f32 0.0, %v4022
        %v4024 = vpop.f32.mrb[0].mxu0
        %v4025 = vpop.f32.mrb[0].mxu0
        %v4026 = vadd.f32 0.0, %v4025
        %v4027 = vpop.f32.mrb[0].mxu0
        %4028 = vmatprep.mubr.bf16.mxu0 0
        %4029 = vmatmul.mubr.bf16.gmra.mrb[0].mxu0 %v3909
        %v4030 = vpop.f32.mrb[0].mxu0
        %v4031 = vadd.f32 0.0, %v4030
        %v4032 = vpop.f32.mrb[0].mxu0
        %v4033 = vpop.f32.mrb[0].mxu0
        %v4034 = vadd.f32 0.0, %v4033
        %v4035 = vpop.f32.mrb[0].mxu0
        %4036 = vmatprep.mubr.bf16.mxu0 0
        %4037 = vmatmul.mubr.bf16.gmra.mrb[0].mxu0 %v3912
        %v4038 = vpop.f32.mrb[0].mxu0
        %v4039 = vadd.f32 0.0, %v4038
        %v4040 = vpop.f32.mrb[0].mxu0
        %v4041 = vpop.f32.mrb[0].mxu0
        %v4042 = vadd.f32 0.0, %v4041
        %v4043 = vpop.f32.mrb[0].mxu0
        %4044 = vmatprep.mubr.bf16.mxu0 0
        %4045 = vmatmul.mubr.bf16.gmra.mrb[0].mxu0 %v3915
        %v4046 = vpop.f32.mrb[0].mxu0
        %v4047 = vadd.f32 0.0, %v4046
        %v4048 = vpop.f32.mrb[0].mxu0
        %v4049 = vpop.f32.mrb[0].mxu0
        %v4050 = vadd.f32 0.0, %v4049
        %v4051 = vpop.f32.mrb[0].mxu0
        %4052 = vmatprep.mubr.bf16.mxu0 0
        %4053 = vmatmul.mubr.bf16.gmra.mrb[0].mxu0 %v3918
        %v4054 = vpop.f32.mrb[0].mxu0
        %v4055 = vadd.f32 0.0, %v4054
        %v4056 = vpop.f32.mrb[0].mxu0
        %v4057 = vpop.f32.mrb[0].mxu0
        %v4058 = vadd.f32 0.0, %v4057
        %v4059 = vpop.f32.mrb[0].mxu0
        %4060 = vmatprep.mubr.bf16.mxu0 0
        %4061 = vmatmul.mubr.bf16.gmra.mrb[0].mxu0 %v3921
        %v4062 = vpop.f32.mrb[0].mxu0
        %v4063 = vadd.f32 0.0, %v4062
        %v4064 = vpop.f32.mrb[0].mxu0
        %v4065 = vpop.f32.mrb[0].mxu0
        %v4066 = vadd.f32 0.0, %v4065
        %v4067 = vpop.f32.mrb[0].mxu0
        %4068 = vmatprep.mubr.bf16.mxu0 0
        %4069 = vmatmul.mubr.bf16.gmra.mrb[0].mxu0 %v3924
        %v4070 = vpop.f32.mrb[0].mxu0
        %v4071 = vadd.f32 0.0, %v4070
        %v4072 = vpop.f32.mrb[0].mxu0
        %v4073 = vpop.f32.mrb[0].mxu0
        %v4074 = vadd.f32 0.0, %v4073
        %v4075 = vpop.f32.mrb[0].mxu0
        %4076 = vmatprep.mubr.bf16.mxu0 0
        %4077 = vmatmul.mubr.bf16.gmra.mrb[0].mxu0 %v3927
        %v4078 = vpop.f32.mrb[0].mxu0
        %v4079 = vadd.f32 0.0, %v4078
        %v4080 = vpop.f32.mrb[0].mxu0
        %v4081 = vpop.f32.mrb[0].mxu0
        %v4082 = vadd.f32 0.0, %v4081
        %v4083 = vpop.f32.mrb[0].mxu0
        %4084 = vmatprep.mubr.bf16.mxu0 0
        %4085 = vmatmul.mubr.bf16.gmra.mrb[0].mxu0 %v3930
        %v4086 = vpop.f32.mrb[0].mxu0
        %v4087 = vadd.f32 0.0, %v4086
        %v4088 = vpop.f32.mrb[0].mxu0
        %v4089 = vpop.f32.mrb[0].mxu0
        %v4090 = vadd.f32 0.0, %v4089
        %v4091 = vpop.f32.mrb[0].mxu0
        %4092 = vdwg.mxu0
        %v4093 = vadd.f32 %v3827, %v3967
        %v4094 = vadd.f32 %v3828, %v3970
        %v4095 = vadd.f32 %v3829, %v3975
        %v4096 = vadd.f32 %v3830, %v3978
        %v4097 = vadd.f32 %v3831, %v3983
        %v4098 = vadd.f32 %v3832, %v3986
        %v4099 = vadd.f32 %v3833, %v3991
        %v4100 = vadd.f32 %v3834, %v3994
        %v4101 = vadd.f32 %v3835, %v3999
        %v4102 = vadd.f32 %v3836, %v4002
        %v4103 = vadd.f32 %v3837, %v4007
        %v4104 = vadd.f32 %v3838, %v4010
        %v4105 = vadd.f32 %v3839, %v4015
        %v4106 = vadd.f32 %v3840, %v4018
        %v4107 = vadd.f32 %v3841, %v4023
        %v4108 = vadd.f32 %v3842, %v4026
        %v4109 = vadd.f32 %v3843, %v4031
        %v4110 = vadd.f32 %v3844, %v4034
        %v4111 = vadd.f32 %v3845, %v4039
        %v4112 = vadd.f32 %v3846, %v4042
        %v4113 = vadd.f32 %v3847, %v4047
        %v4114 = vadd.f32 %v3848, %v4050
        %v4115 = vadd.f32 %v3849, %v4055
        %v4116 = vadd.f32 %v3850, %v4058
        %v4117 = vadd.f32 %v3851, %v4063
        %v4118 = vadd.f32 %v3852, %v4066
        %v4119 = vadd.f32 %v3853, %v4071
        %v4120 = vadd.f32 %v3854, %v4074
        %v4121 = vadd.f32 %v3855, %v4079
        %v4122 = vadd.f32 %v3856, %v4082
        %v4123 = vadd.f32 %v3857, %v4087
        %v4124 = vadd.f32 %v3858, %v4090
        %v4125 = vpack.c.bf16 %v2051, %v2048
        %v4126 = vpack.c.bf16 %v2204, %v2201
        %v4127 = vpack.c.bf16 %v2357, %v2354
        %v4128 = vpack.c.bf16 %v2510, %v2507
        %s4129 = scalar_lea.vmem %s5, 48
        %v4130 = vld [vmem:[%s4129] sm:$0xf]
        %v4131 = vld [vmem:[%s4129 + $0x4] sm:$0xf]
        %v4134 = vunpack.c.l.b16 %v4130
        %v4135 = vunpack.c.l.b16 %v4131
        %v4136 = vpack.c.b16 %v4135, %v4134
        %v4139 = vsel %vm2636, %v4125, 0
        %v4142 = vsel %vm2636, %v4126, 0
        %v4145 = vsel %vm2636, %v4127, 0
        %v4148 = vsel %vm2636, %v4128, 0
        %4150 = vmatprep.subr.bf16.mxu0 0
        %4151 = vmatpush1.bf16.msra.mxu0 %v4136
        %4152 = vmatprep.subr.bf16.mxu0 0
        %4153 = vmatpush1.bf16.msra.mxu0 0
        %4154 = vmatprep.subr.bf16.mxu0 0
        %4155 = vmatpush1.bf16.msra.mxu0 0
        %4156 = vmatprep.subr.bf16.mxu0 0
        %4157 = vmatpush1.bf16.msra.mxu0 0
        %4158 = vmatprep.subr.bf16.mxu0 0
        %4159 = vmatpush1.bf16.msra.mxu0 0
        %4160 = vmatprep.subr.bf16.mxu0 0
        %4161 = vmatpush1.bf16.msra.mxu0 0
        %4162 = vmatprep.subr.bf16.mxu0 0
        %4163 = vmatpush1.bf16.msra.mxu0 0
        %4164 = vmatprep.subr.bf16.mxu0 0
        %4165 = vmatpush1.bf16.msra.mxu0 0
        %4166 = vmatprep.subr.bf16.mxu0 0
        %4167 = vmatpush1.bf16.msra.mxu0 0
        %4168 = vmatprep.subr.bf16.mxu0 0
        %4169 = vmatpush1.bf16.msra.mxu0 0
        %4170 = vmatprep.subr.bf16.mxu0 0
        %4171 = vmatpush1.bf16.msra.mxu0 0
        %4172 = vmatprep.subr.bf16.mxu0 0
        %4173 = vmatpush1.bf16.msra.mxu0 0
        %4174 = vmatprep.subr.bf16.mxu0 0
        %4175 = vmatpush1.bf16.msra.mxu0 0
        %4176 = vmatprep.subr.bf16.mxu0 0
        %4177 = vmatpush1.bf16.msra.mxu0 0
        %4178 = vmatprep.subr.bf16.mxu0 0
        %4179 = vmatpush1.bf16.msra.mxu0 0
        %4180 = vmatprep.subr.bf16.mxu0 0
        %4181 = vmatpush1.bf16.msra.mxu0 0
        %4182 = vmatprep.mubr.bf16.mxu0 0
        %4183 = vmatmul.mubr.bf16.gmra.mrb[0].mxu0 %v2856
        %v4184 = vpop.f32.mrb[0].mxu0
        %v4185 = vadd.f32 0.0, %v4184
        %v4186 = vpop.f32.mrb[0].mxu0
        %v4187 = vpop.f32.mrb[0].mxu0
        %v4188 = vadd.f32 0.0, %v4187
        %v4189 = vpop.f32.mrb[0].mxu0
        %4190 = vmatprep.mubr.bf16.mxu0 0
        %4191 = vmatmul.mubr.bf16.gmra.mrb[0].mxu0 %v2859
        %v4192 = vpop.f32.mrb[0].mxu0
        %v4193 = vadd.f32 0.0, %v4192
        %v4194 = vpop.f32.mrb[0].mxu0
        %v4195 = vpop.f32.mrb[0].mxu0
        %v4196 = vadd.f32 0.0, %v4195
        %v4197 = vpop.f32.mrb[0].mxu0
        %4198 = vmatprep.mubr.bf16.mxu0 0
        %4199 = vmatmul.mubr.bf16.gmra.mrb[0].mxu0 %v2862
        %v4200 = vpop.f32.mrb[0].mxu0
        %v4201 = vadd.f32 0.0, %v4200
        %v4202 = vpop.f32.mrb[0].mxu0
        %v4203 = vpop.f32.mrb[0].mxu0
        %v4204 = vadd.f32 0.0, %v4203
        %v4205 = vpop.f32.mrb[0].mxu0
        %4206 = vmatprep.mubr.bf16.mxu0 0
        %4207 = vmatmul.mubr.bf16.gmra.mrb[0].mxu0 %v4139
        %v4208 = vpop.f32.mrb[0].mxu0
        %v4209 = vadd.f32 0.0, %v4208
        %v4210 = vpop.f32.mrb[0].mxu0
        %v4211 = vpop.f32.mrb[0].mxu0
        %v4212 = vadd.f32 0.0, %v4211
        %v4213 = vpop.f32.mrb[0].mxu0
        %4214 = vmatprep.mubr.bf16.mxu0 0
        %4215 = vmatmul.mubr.bf16.gmra.mrb[0].mxu0 %v2868
        %v4216 = vpop.f32.mrb[0].mxu0
        %v4217 = vadd.f32 0.0, %v4216
        %v4218 = vpop.f32.mrb[0].mxu0
        %v4219 = vpop.f32.mrb[0].mxu0
        %v4220 = vadd.f32 0.0, %v4219
        %v4221 = vpop.f32.mrb[0].mxu0
        %4222 = vmatprep.mubr.bf16.mxu0 0
        %4223 = vmatmul.mubr.bf16.gmra.mrb[0].mxu0 %v2871
        %v4224 = vpop.f32.mrb[0].mxu0
        %v4225 = vadd.f32 0.0, %v4224
        %v4226 = vpop.f32.mrb[0].mxu0
        %v4227 = vpop.f32.mrb[0].mxu0
        %v4228 = vadd.f32 0.0, %v4227
        %v4229 = vpop.f32.mrb[0].mxu0
        %4230 = vmatprep.mubr.bf16.mxu0 0
        %4231 = vmatmul.mubr.bf16.gmra.mrb[0].mxu0 %v2874
        %v4232 = vpop.f32.mrb[0].mxu0
        %v4233 = vadd.f32 0.0, %v4232
        %v4234 = vpop.f32.mrb[0].mxu0
        %v4235 = vpop.f32.mrb[0].mxu0
        %v4236 = vadd.f32 0.0, %v4235
        %v4237 = vpop.f32.mrb[0].mxu0
        %4238 = vmatprep.mubr.bf16.mxu0 0
        %4239 = vmatmul.mubr.bf16.gmra.mrb[0].mxu0 %v4142
        %v4240 = vpop.f32.mrb[0].mxu0
        %v4241 = vadd.f32 0.0, %v4240
        %v4242 = vpop.f32.mrb[0].mxu0
        %v4243 = vpop.f32.mrb[0].mxu0
        %v4244 = vadd.f32 0.0, %v4243
        %v4245 = vpop.f32.mrb[0].mxu0
        %4246 = vmatprep.mubr.bf16.mxu0 0
        %4247 = vmatmul.mubr.bf16.gmra.mrb[0].mxu0 %v2880
        %v4248 = vpop.f32.mrb[0].mxu0
        %v4249 = vadd.f32 0.0, %v4248
        %v4250 = vpop.f32.mrb[0].mxu0
        %v4251 = vpop.f32.mrb[0].mxu0
        %v4252 = vadd.f32 0.0, %v4251
        %v4253 = vpop.f32.mrb[0].mxu0
        %4254 = vmatprep.mubr.bf16.mxu0 0
        %4255 = vmatmul.mubr.bf16.gmra.mrb[0].mxu0 %v2883
        %v4256 = vpop.f32.mrb[0].mxu0
        %v4257 = vadd.f32 0.0, %v4256
        %v4258 = vpop.f32.mrb[0].mxu0
        %v4259 = vpop.f32.mrb[0].mxu0
        %v4260 = vadd.f32 0.0, %v4259
        %v4261 = vpop.f32.mrb[0].mxu0
        %4262 = vmatprep.mubr.bf16.mxu0 0
        %4263 = vmatmul.mubr.bf16.gmra.mrb[0].mxu0 %v2886
        %v4264 = vpop.f32.mrb[0].mxu0
        %v4265 = vadd.f32 0.0, %v4264
        %v4266 = vpop.f32.mrb[0].mxu0
        %v4267 = vpop.f32.mrb[0].mxu0
        %v4268 = vadd.f32 0.0, %v4267
        %v4269 = vpop.f32.mrb[0].mxu0
        %4270 = vmatprep.mubr.bf16.mxu0 0
        %4271 = vmatmul.mubr.bf16.gmra.mrb[0].mxu0 %v4145
        %v4272 = vpop.f32.mrb[0].mxu0
        %v4273 = vadd.f32 0.0, %v4272
        %v4274 = vpop.f32.mrb[0].mxu0
        %v4275 = vpop.f32.mrb[0].mxu0
        %v4276 = vadd.f32 0.0, %v4275
        %v4277 = vpop.f32.mrb[0].mxu0
        %4278 = vmatprep.mubr.bf16.mxu0 0
        %4279 = vmatmul.mubr.bf16.gmra.mrb[0].mxu0 %v2892
        %v4280 = vpop.f32.mrb[0].mxu0
        %v4281 = vadd.f32 0.0, %v4280
        %v4282 = vpop.f32.mrb[0].mxu0
        %v4283 = vpop.f32.mrb[0].mxu0
        %v4284 = vadd.f32 0.0, %v4283
        %v4285 = vpop.f32.mrb[0].mxu0
        %4286 = vmatprep.mubr.bf16.mxu0 0
        %4287 = vmatmul.mubr.bf16.gmra.mrb[0].mxu0 %v2895
        %v4288 = vpop.f32.mrb[0].mxu0
        %v4289 = vadd.f32 0.0, %v4288
        %v4290 = vpop.f32.mrb[0].mxu0
        %v4291 = vpop.f32.mrb[0].mxu0
        %v4292 = vadd.f32 0.0, %v4291
        %v4293 = vpop.f32.mrb[0].mxu0
        %4294 = vmatprep.mubr.bf16.mxu0 0
        %4295 = vmatmul.mubr.bf16.gmra.mrb[0].mxu0 %v2898
        %v4296 = vpop.f32.mrb[0].mxu0
        %v4297 = vadd.f32 0.0, %v4296
        %v4298 = vpop.f32.mrb[0].mxu0
        %v4299 = vpop.f32.mrb[0].mxu0
        %v4300 = vadd.f32 0.0, %v4299
        %v4301 = vpop.f32.mrb[0].mxu0
        %4302 = vmatprep.mubr.bf16.mxu0 0
        %4303 = vmatmul.mubr.bf16.gmra.mrb[0].mxu0 %v4148
        %v4304 = vpop.f32.mrb[0].mxu0
        %v4305 = vadd.f32 0.0, %v4304
        %v4306 = vpop.f32.mrb[0].mxu0
        %v4307 = vpop.f32.mrb[0].mxu0
        %v4308 = vadd.f32 0.0, %v4307
        %v4309 = vpop.f32.mrb[0].mxu0
        %4310 = vdwg.mxu0
        %v4311 = vadd.f32 %v4093, %v4185
        %v4312 = vadd.f32 %v4094, %v4188
        %v4313 = vadd.f32 %v4095, %v4193
        %v4314 = vadd.f32 %v4096, %v4196
        %v4315 = vadd.f32 %v4097, %v4201
        %v4316 = vadd.f32 %v4098, %v4204
        %v4317 = vadd.f32 %v4099, %v4209
        %v4318 = vadd.f32 %v4100, %v4212
        %v4319 = vadd.f32 %v4101, %v4217
        %v4320 = vadd.f32 %v4102, %v4220
        %v4321 = vadd.f32 %v4103, %v4225
        %v4322 = vadd.f32 %v4104, %v4228
        %v4323 = vadd.f32 %v4105, %v4233
        %v4324 = vadd.f32 %v4106, %v4236
        %v4325 = vadd.f32 %v4107, %v4241
        %v4326 = vadd.f32 %v4108, %v4244
        %v4327 = vadd.f32 %v4109, %v4249
        %v4328 = vadd.f32 %v4110, %v4252
        %v4329 = vadd.f32 %v4111, %v4257
        %v4330 = vadd.f32 %v4112, %v4260
        %v4331 = vadd.f32 %v4113, %v4265
        %v4332 = vadd.f32 %v4114, %v4268
        %v4333 = vadd.f32 %v4115, %v4273
        %v4334 = vadd.f32 %v4116, %v4276
        %v4335 = vadd.f32 %v4117, %v4281
        %v4336 = vadd.f32 %v4118, %v4284
        %v4337 = vadd.f32 %v4119, %v4289
        %v4338 = vadd.f32 %v4120, %v4292
        %v4339 = vadd.f32 %v4121, %v4297
        %v4340 = vadd.f32 %v4122, %v4300
        %v4341 = vadd.f32 %v4123, %v4305
        %v4342 = vadd.f32 %v4124, %v4308
        %v4343 = vpack.c.bf16 %v2091, %v2088
        %v4344 = vpack.c.bf16 %v2244, %v2241
        %v4345 = vpack.c.bf16 %v2397, %v2394
        %v4346 = vpack.c.bf16 %v2550, %v2547
        %s4347 = scalar_lea.vmem %s5, 56
        %v4348 = vld [vmem:[%s4347] sm:$0xf]
        %v4349 = vld [vmem:[%s4347 + $0x4] sm:$0xf]
        %v4352 = vunpack.c.l.b16 %v4348
        %v4353 = vunpack.c.l.b16 %v4349
        %v4354 = vpack.c.b16 %v4353, %v4352
        %v4357 = vsel %vm2636, %v4343, 0
        %v4360 = vsel %vm2636, %v4344, 0
        %v4363 = vsel %vm2636, %v4345, 0
        %v4366 = vsel %vm2636, %v4346, 0
        %4368 = vmatprep.subr.bf16.mxu0 0
        %4369 = vmatpush1.bf16.msra.mxu0 %v4354
        %4370 = vmatprep.subr.bf16.mxu0 0
        %4371 = vmatpush1.bf16.msra.mxu0 0
        %4372 = vmatprep.subr.bf16.mxu0 0
        %4373 = vmatpush1.bf16.msra.mxu0 0
        %4374 = vmatprep.subr.bf16.mxu0 0
        %4375 = vmatpush1.bf16.msra.mxu0 0
        %4376 = vmatprep.subr.bf16.mxu0 0
        %4377 = vmatpush1.bf16.msra.mxu0 0
        %4378 = vmatprep.subr.bf16.mxu0 0
        %4379 = vmatpush1.bf16.msra.mxu0 0
        %4380 = vmatprep.subr.bf16.mxu0 0
        %4381 = vmatpush1.bf16.msra.mxu0 0
        %4382 = vmatprep.subr.bf16.mxu0 0
        %4383 = vmatpush1.bf16.msra.mxu0 0
        %4384 = vmatprep.subr.bf16.mxu0 0
        %4385 = vmatpush1.bf16.msra.mxu0 0
        %4386 = vmatprep.subr.bf16.mxu0 0
        %4387 = vmatpush1.bf16.msra.mxu0 0
        %4388 = vmatprep.subr.bf16.mxu0 0
        %4389 = vmatpush1.bf16.msra.mxu0 0
        %4390 = vmatprep.subr.bf16.mxu0 0
        %4391 = vmatpush1.bf16.msra.mxu0 0
        %4392 = vmatprep.subr.bf16.mxu0 0
        %4393 = vmatpush1.bf16.msra.mxu0 0
        %4394 = vmatprep.subr.bf16.mxu0 0
        %4395 = vmatpush1.bf16.msra.mxu0 0
        %4396 = vmatprep.subr.bf16.mxu0 0
        %4397 = vmatpush1.bf16.msra.mxu0 0
        %4398 = vmatprep.subr.bf16.mxu0 0
        %4399 = vmatpush1.bf16.msra.mxu0 0
        %4400 = vmatprep.mubr.bf16.mxu0 0
        %4401 = vmatmul.mubr.bf16.gmra.mrb[0].mxu0 %v2641
        %v4402 = vpop.f32.mrb[0].mxu0
        %v4403 = vadd.f32 0.0, %v4402
        %v4404 = vpop.f32.mrb[0].mxu0
        %v4405 = vpop.f32.mrb[0].mxu0
        %v4406 = vadd.f32 0.0, %v4405
        %v4407 = vpop.f32.mrb[0].mxu0
        %4408 = vmatprep.mubr.bf16.mxu0 0
        %4409 = vmatmul.mubr.bf16.gmra.mrb[0].mxu0 %v2644
        %v4410 = vpop.f32.mrb[0].mxu0
        %v4411 = vadd.f32 0.0, %v4410
        %v4412 = vpop.f32.mrb[0].mxu0
        %v4413 = vpop.f32.mrb[0].mxu0
        %v4414 = vadd.f32 0.0, %v4413
        %v4415 = vpop.f32.mrb[0].mxu0
        %4416 = vmatprep.mubr.bf16.mxu0 0
        %4417 = vmatmul.mubr.bf16.gmra.mrb[0].mxu0 %v2647
        %v4418 = vpop.f32.mrb[0].mxu0
        %v4419 = vadd.f32 0.0, %v4418
        %v4420 = vpop.f32.mrb[0].mxu0
        %v4421 = vpop.f32.mrb[0].mxu0
        %v4422 = vadd.f32 0.0, %v4421
        %v4423 = vpop.f32.mrb[0].mxu0
        %4424 = vmatprep.mubr.bf16.mxu0 0
        %4425 = vmatmul.mubr.bf16.gmra.mrb[0].mxu0 %v4357
        %v4426 = vpop.f32.mrb[0].mxu0
        %v4427 = vadd.f32 0.0, %v4426
        %v4428 = vpop.f32.mrb[0].mxu0
        %v4429 = vpop.f32.mrb[0].mxu0
        %v4430 = vadd.f32 0.0, %v4429
        %v4431 = vpop.f32.mrb[0].mxu0
        %4432 = vmatprep.mubr.bf16.mxu0 0
        %4433 = vmatmul.mubr.bf16.gmra.mrb[0].mxu0 %v2653
        %v4434 = vpop.f32.mrb[0].mxu0
        %v4435 = vadd.f32 0.0, %v4434
        %v4436 = vpop.f32.mrb[0].mxu0
        %v4437 = vpop.f32.mrb[0].mxu0
        %v4438 = vadd.f32 0.0, %v4437
        %v4439 = vpop.f32.mrb[0].mxu0
        %4440 = vmatprep.mubr.bf16.mxu0 0
        %4441 = vmatmul.mubr.bf16.gmra.mrb[0].mxu0 %v2656
        %v4442 = vpop.f32.mrb[0].mxu0
        %v4443 = vadd.f32 0.0, %v4442
        %v4444 = vpop.f32.mrb[0].mxu0
        %v4445 = vpop.f32.mrb[0].mxu0
        %v4446 = vadd.f32 0.0, %v4445
        %v4447 = vpop.f32.mrb[0].mxu0
        %4448 = vmatprep.mubr.bf16.mxu0 0
        %4449 = vmatmul.mubr.bf16.gmra.mrb[0].mxu0 %v2659
        %v4450 = vpop.f32.mrb[0].mxu0
        %v4451 = vadd.f32 0.0, %v4450
        %v4452 = vpop.f32.mrb[0].mxu0
        %v4453 = vpop.f32.mrb[0].mxu0
        %v4454 = vadd.f32 0.0, %v4453
        %v4455 = vpop.f32.mrb[0].mxu0
        %4456 = vmatprep.mubr.bf16.mxu0 0
        %4457 = vmatmul.mubr.bf16.gmra.mrb[0].mxu0 %v4360
        %v4458 = vpop.f32.mrb[0].mxu0
        %v4459 = vadd.f32 0.0, %v4458
        %v4460 = vpop.f32.mrb[0].mxu0
        %v4461 = vpop.f32.mrb[0].mxu0
        %v4462 = vadd.f32 0.0, %v4461
        %v4463 = vpop.f32.mrb[0].mxu0
        %4464 = vmatprep.mubr.bf16.mxu0 0
        %4465 = vmatmul.mubr.bf16.gmra.mrb[0].mxu0 %v2665
        %v4466 = vpop.f32.mrb[0].mxu0
        %v4467 = vadd.f32 0.0, %v4466
        %v4468 = vpop.f32.mrb[0].mxu0
        %v4469 = vpop.f32.mrb[0].mxu0
        %v4470 = vadd.f32 0.0, %v4469
        %v4471 = vpop.f32.mrb[0].mxu0
        %4472 = vmatprep.mubr.bf16.mxu0 0
        %4473 = vmatmul.mubr.bf16.gmra.mrb[0].mxu0 %v2668
        %v4474 = vpop.f32.mrb[0].mxu0
        %v4475 = vadd.f32 0.0, %v4474
        %v4476 = vpop.f32.mrb[0].mxu0
        %v4477 = vpop.f32.mrb[0].mxu0
        %v4478 = vadd.f32 0.0, %v4477
        %v4479 = vpop.f32.mrb[0].mxu0
        %4480 = vmatprep.mubr.bf16.mxu0 0
        %4481 = vmatmul.mubr.bf16.gmra.mrb[0].mxu0 %v2671
        %v4482 = vpop.f32.mrb[0].mxu0
        %v4483 = vadd.f32 0.0, %v4482
        %v4484 = vpop.f32.mrb[0].mxu0
        %v4485 = vpop.f32.mrb[0].mxu0
        %v4486 = vadd.f32 0.0, %v4485
        %v4487 = vpop.f32.mrb[0].mxu0
        %4488 = vmatprep.mubr.bf16.mxu0 0
        %4489 = vmatmul.mubr.bf16.gmra.mrb[0].mxu0 %v4363
        %v4490 = vpop.f32.mrb[0].mxu0
        %v4491 = vadd.f32 0.0, %v4490
        %v4492 = vpop.f32.mrb[0].mxu0
        %v4493 = vpop.f32.mrb[0].mxu0
        %v4494 = vadd.f32 0.0, %v4493
        %v4495 = vpop.f32.mrb[0].mxu0
        %4496 = vmatprep.mubr.bf16.mxu0 0
        %4497 = vmatmul.mubr.bf16.gmra.mrb[0].mxu0 %v2677
        %v4498 = vpop.f32.mrb[0].mxu0
        %v4499 = vadd.f32 0.0, %v4498
        %v4500 = vpop.f32.mrb[0].mxu0
        %v4501 = vpop.f32.mrb[0].mxu0
        %v4502 = vadd.f32 0.0, %v4501
        %v4503 = vpop.f32.mrb[0].mxu0
        %4504 = vmatprep.mubr.bf16.mxu0 0
        %4505 = vmatmul.mubr.bf16.gmra.mrb[0].mxu0 %v2680
        %v4506 = vpop.f32.mrb[0].mxu0
        %v4507 = vadd.f32 0.0, %v4506
        %v4508 = vpop.f32.mrb[0].mxu0
        %v4509 = vpop.f32.mrb[0].mxu0
        %v4510 = vadd.f32 0.0, %v4509
        %v4511 = vpop.f32.mrb[0].mxu0
        %4512 = vmatprep.mubr.bf16.mxu0 0
        %4513 = vmatmul.mubr.bf16.gmra.mrb[0].mxu0 %v2683
        %v4514 = vpop.f32.mrb[0].mxu0
        %v4515 = vadd.f32 0.0, %v4514
        %v4516 = vpop.f32.mrb[0].mxu0
        %v4517 = vpop.f32.mrb[0].mxu0
        %v4518 = vadd.f32 0.0, %v4517
        %v4519 = vpop.f32.mrb[0].mxu0
        %4520 = vmatprep.mubr.bf16.mxu0 0
        %4521 = vmatmul.mubr.bf16.gmra.mrb[0].mxu0 %v4366
        %v4522 = vpop.f32.mrb[0].mxu0
        %v4523 = vadd.f32 0.0, %v4522
        %v4524 = vpop.f32.mrb[0].mxu0
        %v4525 = vpop.f32.mrb[0].mxu0
        %v4526 = vadd.f32 0.0, %v4525
        %v4527 = vpop.f32.mrb[0].mxu0
        %4528 = vdwg.mxu0
        %v4529 = vadd.f32 %v4311, %v4403
        %v4530 = vadd.f32 %v4312, %v4406
        %v4531 = vadd.f32 %v4313, %v4411
        %v4532 = vadd.f32 %v4314, %v4414
        %v4533 = vadd.f32 %v4315, %v4419
        %v4534 = vadd.f32 %v4316, %v4422
        %v4535 = vadd.f32 %v4317, %v4427
        %v4536 = vadd.f32 %v4318, %v4430
        %v4537 = vadd.f32 %v4319, %v4435
        %v4538 = vadd.f32 %v4320, %v4438
        %v4539 = vadd.f32 %v4321, %v4443
        %v4540 = vadd.f32 %v4322, %v4446
        %v4541 = vadd.f32 %v4323, %v4451
        %v4542 = vadd.f32 %v4324, %v4454
        %v4543 = vadd.f32 %v4325, %v4459
        %v4544 = vadd.f32 %v4326, %v4462
        %v4545 = vadd.f32 %v4327, %v4467
        %v4546 = vadd.f32 %v4328, %v4470
        %v4547 = vadd.f32 %v4329, %v4475
        %v4548 = vadd.f32 %v4330, %v4478
        %v4549 = vadd.f32 %v4331, %v4483
        %v4550 = vadd.f32 %v4332, %v4486
        %v4551 = vadd.f32 %v4333, %v4491
        %v4552 = vadd.f32 %v4334, %v4494
        %v4553 = vadd.f32 %v4335, %v4499
        %v4554 = vadd.f32 %v4336, %v4502
        %v4555 = vadd.f32 %v4337, %v4507
        %v4556 = vadd.f32 %v4338, %v4510
        %v4557 = vadd.f32 %v4339, %v4515
        %v4558 = vadd.f32 %v4340, %v4518
        %v4559 = vadd.f32 %v4341, %v4523
        %v4560 = vadd.f32 %v4342, %v4526
        %v4561 = vpack.c.bf16 %v2131, %v2128
        %v4562 = vpack.c.bf16 %v2284, %v2281
        %v4563 = vpack.c.bf16 %v2437, %v2434
        %v4564 = vpack.c.bf16 %v2590, %v2587
        %s4565 = scalar_lea.vmem %s5, 64
        %v4566 = vld [vmem:[%s4565] sm:$0xf]
        %v4567 = vld [vmem:[%s4565 + $0x4] sm:$0xf]
        %v4570 = vunpack.c.l.b16 %v4566
        %v4571 = vunpack.c.l.b16 %v4567
        %v4572 = vpack.c.b16 %v4571, %v4570
        %v4575 = vsel %vm2636, %v4561, 0
        %v4578 = vsel %vm2636, %v4562, 0
        %v4581 = vsel %vm2636, %v4563, 0
        %v4584 = vsel %vm2636, %v4564, 0
        %4586 = vmatprep.subr.bf16.mxu0 0
        %4587 = vmatpush1.bf16.msra.mxu0 %v4572
        %4588 = vmatprep.subr.bf16.mxu0 0
        %4589 = vmatpush1.bf16.msra.mxu0 0
        %4590 = vmatprep.subr.bf16.mxu0 0
        %4591 = vmatpush1.bf16.msra.mxu0 0
        %4592 = vmatprep.subr.bf16.mxu0 0
        %4593 = vmatpush1.bf16.msra.mxu0 0
        %4594 = vmatprep.subr.bf16.mxu0 0
        %4595 = vmatpush1.bf16.msra.mxu0 0
        %4596 = vmatprep.subr.bf16.mxu0 0
        %4597 = vmatpush1.bf16.msra.mxu0 0
        %4598 = vmatprep.subr.bf16.mxu0 0
        %4599 = vmatpush1.bf16.msra.mxu0 0
        %4600 = vmatprep.subr.bf16.mxu0 0
        %4601 = vmatpush1.bf16.msra.mxu0 0
        %4602 = vmatprep.subr.bf16.mxu0 0
        %4603 = vmatpush1.bf16.msra.mxu0 0
        %4604 = vmatprep.subr.bf16.mxu0 0
        %4605 = vmatpush1.bf16.msra.mxu0 0
        %4606 = vmatprep.subr.bf16.mxu0 0
        %4607 = vmatpush1.bf16.msra.mxu0 0
        %4608 = vmatprep.subr.bf16.mxu0 0
        %4609 = vmatpush1.bf16.msra.mxu0 0
        %4610 = vmatprep.subr.bf16.mxu0 0
        %4611 = vmatpush1.bf16.msra.mxu0 0
        %4612 = vmatprep.subr.bf16.mxu0 0
        %4613 = vmatpush1.bf16.msra.mxu0 0
        %4614 = vmatprep.subr.bf16.mxu0 0
        %4615 = vmatpush1.bf16.msra.mxu0 0
        %4616 = vmatprep.subr.bf16.mxu0 0
        %4617 = vmatpush1.bf16.msra.mxu0 0
        %4618 = vmatprep.mubr.bf16.mxu0 0
        %4619 = vmatmul.mubr.bf16.gmra.mrb[0].mxu0 %v3090
        %v4620 = vpop.f32.mrb[0].mxu0
        %v4621 = vadd.f32 0.0, %v4620
        %v4622 = vpop.f32.mrb[0].mxu0
        %v4623 = vpop.f32.mrb[0].mxu0
        %v4624 = vadd.f32 0.0, %v4623
        %v4625 = vpop.f32.mrb[0].mxu0
        %4626 = vmatprep.mubr.bf16.mxu0 0
        %4627 = vmatmul.mubr.bf16.gmra.mrb[0].mxu0 %v3093
        %v4628 = vpop.f32.mrb[0].mxu0
        %v4629 = vadd.f32 0.0, %v4628
        %v4630 = vpop.f32.mrb[0].mxu0
        %v4631 = vpop.f32.mrb[0].mxu0
        %v4632 = vadd.f32 0.0, %v4631
        %v4633 = vpop.f32.mrb[0].mxu0
        %4634 = vmatprep.mubr.bf16.mxu0 0
        %4635 = vmatmul.mubr.bf16.gmra.mrb[0].mxu0 %v3096
        %v4636 = vpop.f32.mrb[0].mxu0
        %v4637 = vadd.f32 0.0, %v4636
        %v4638 = vpop.f32.mrb[0].mxu0
        %v4639 = vpop.f32.mrb[0].mxu0
        %v4640 = vadd.f32 0.0, %v4639
        %v4641 = vpop.f32.mrb[0].mxu0
        %4642 = vmatprep.mubr.bf16.mxu0 0
        %4643 = vmatmul.mubr.bf16.gmra.mrb[0].mxu0 %v4575
        %v4644 = vpop.f32.mrb[0].mxu0
        %v4645 = vadd.f32 0.0, %v4644
        %v4646 = vpop.f32.mrb[0].mxu0
        %v4647 = vpop.f32.mrb[0].mxu0
        %v4648 = vadd.f32 0.0, %v4647
        %v4649 = vpop.f32.mrb[0].mxu0
        %4650 = vmatprep.mubr.bf16.mxu0 0
        %4651 = vmatmul.mubr.bf16.gmra.mrb[0].mxu0 %v3102
        %v4652 = vpop.f32.mrb[0].mxu0
        %v4653 = vadd.f32 0.0, %v4652
        %v4654 = vpop.f32.mrb[0].mxu0
        %v4655 = vpop.f32.mrb[0].mxu0
        %v4656 = vadd.f32 0.0, %v4655
        %v4657 = vpop.f32.mrb[0].mxu0
        %4658 = vmatprep.mubr.bf16.mxu0 0
        %4659 = vmatmul.mubr.bf16.gmra.mrb[0].mxu0 %v3105
        %v4660 = vpop.f32.mrb[0].mxu0
        %v4661 = vadd.f32 0.0, %v4660
        %v4662 = vpop.f32.mrb[0].mxu0
        %v4663 = vpop.f32.mrb[0].mxu0
        %v4664 = vadd.f32 0.0, %v4663
        %v4665 = vpop.f32.mrb[0].mxu0
        %4666 = vmatprep.mubr.bf16.mxu0 0
        %4667 = vmatmul.mubr.bf16.gmra.mrb[0].mxu0 %v3108
        %v4668 = vpop.f32.mrb[0].mxu0
        %v4669 = vadd.f32 0.0, %v4668
        %v4670 = vpop.f32.mrb[0].mxu0
        %v4671 = vpop.f32.mrb[0].mxu0
        %v4672 = vadd.f32 0.0, %v4671
        %v4673 = vpop.f32.mrb[0].mxu0
        %4674 = vmatprep.mubr.bf16.mxu0 0
        %4675 = vmatmul.mubr.bf16.gmra.mrb[0].mxu0 %v4578
        %v4676 = vpop.f32.mrb[0].mxu0
        %v4677 = vadd.f32 0.0, %v4676
        %v4678 = vpop.f32.mrb[0].mxu0
        %v4679 = vpop.f32.mrb[0].mxu0
        %v4680 = vadd.f32 0.0, %v4679
        %v4681 = vpop.f32.mrb[0].mxu0
        %4682 = vmatprep.mubr.bf16.mxu0 0
        %4683 = vmatmul.mubr.bf16.gmra.mrb[0].mxu0 %v3114
        %v4684 = vpop.f32.mrb[0].mxu0
        %v4685 = vadd.f32 0.0, %v4684
        %v4686 = vpop.f32.mrb[0].mxu0
        %v4687 = vpop.f32.mrb[0].mxu0
        %v4688 = vadd.f32 0.0, %v4687
        %v4689 = vpop.f32.mrb[0].mxu0
        %4690 = vmatprep.mubr.bf16.mxu0 0
        %4691 = vmatmul.mubr.bf16.gmra.mrb[0].mxu0 %v3117
        %v4692 = vpop.f32.mrb[0].mxu0
        %v4693 = vadd.f32 0.0, %v4692
        %v4694 = vpop.f32.mrb[0].mxu0
        %v4695 = vpop.f32.mrb[0].mxu0
        %v4696 = vadd.f32 0.0, %v4695
        %v4697 = vpop.f32.mrb[0].mxu0
        %4698 = vmatprep.mubr.bf16.mxu0 0
        %4699 = vmatmul.mubr.bf16.gmra.mrb[0].mxu0 %v3120
        %v4700 = vpop.f32.mrb[0].mxu0
        %v4701 = vadd.f32 0.0, %v4700
        %v4702 = vpop.f32.mrb[0].mxu0
        %v4703 = vpop.f32.mrb[0].mxu0
        %v4704 = vadd.f32 0.0, %v4703
        %v4705 = vpop.f32.mrb[0].mxu0
        %4706 = vmatprep.mubr.bf16.mxu0 0
        %4707 = vmatmul.mubr.bf16.gmra.mrb[0].mxu0 %v4581
        %v4708 = vpop.f32.mrb[0].mxu0
        %v4709 = vadd.f32 0.0, %v4708
        %v4710 = vpop.f32.mrb[0].mxu0
        %v4711 = vpop.f32.mrb[0].mxu0
        %v4712 = vadd.f32 0.0, %v4711
        %v4713 = vpop.f32.mrb[0].mxu0
        %4714 = vmatprep.mubr.bf16.mxu0 0
        %4715 = vmatmul.mubr.bf16.gmra.mrb[0].mxu0 %v3126
        %v4716 = vpop.f32.mrb[0].mxu0
        %v4717 = vadd.f32 0.0, %v4716
        %v4718 = vpop.f32.mrb[0].mxu0
        %v4719 = vpop.f32.mrb[0].mxu0
        %v4720 = vadd.f32 0.0, %v4719
        %v4721 = vpop.f32.mrb[0].mxu0
        %4722 = vmatprep.mubr.bf16.mxu0 0
        %4723 = vmatmul.mubr.bf16.gmra.mrb[0].mxu0 %v3129
        %v4724 = vpop.f32.mrb[0].mxu0
        %v4725 = vadd.f32 0.0, %v4724
        %v4726 = vpop.f32.mrb[0].mxu0
        %v4727 = vpop.f32.mrb[0].mxu0
        %v4728 = vadd.f32 0.0, %v4727
        %v4729 = vpop.f32.mrb[0].mxu0
        %4730 = vmatprep.mubr.bf16.mxu0 0
        %4731 = vmatmul.mubr.bf16.gmra.mrb[0].mxu0 %v3132
        %v4732 = vpop.f32.mrb[0].mxu0
        %v4733 = vadd.f32 0.0, %v4732
        %v4734 = vpop.f32.mrb[0].mxu0
        %v4735 = vpop.f32.mrb[0].mxu0
        %v4736 = vadd.f32 0.0, %v4735
        %v4737 = vpop.f32.mrb[0].mxu0
        %4738 = vmatprep.mubr.bf16.mxu0 0
        %4739 = vmatmul.mubr.bf16.gmra.mrb[0].mxu0 %v4584
        %v4740 = vpop.f32.mrb[0].mxu0
        %v4741 = vadd.f32 0.0, %v4740
        %v4742 = vpop.f32.mrb[0].mxu0
        %v4743 = vpop.f32.mrb[0].mxu0
        %v4744 = vadd.f32 0.0, %v4743
        %v4745 = vpop.f32.mrb[0].mxu0
        %4746 = vdwg.mxu0
        %v4747 = vadd.f32 %v4529, %v4621
        %v4748 = vadd.f32 %v4530, %v4624
        %v4749 = vadd.f32 %v4531, %v4629
        %v4750 = vadd.f32 %v4532, %v4632
        %v4751 = vadd.f32 %v4533, %v4637
        %v4752 = vadd.f32 %v4534, %v4640
        %v4753 = vadd.f32 %v4535, %v4645
        %v4754 = vadd.f32 %v4536, %v4648
        %v4755 = vadd.f32 %v4537, %v4653
        %v4756 = vadd.f32 %v4538, %v4656
        %v4757 = vadd.f32 %v4539, %v4661
        %v4758 = vadd.f32 %v4540, %v4664
        %v4759 = vadd.f32 %v4541, %v4669
        %v4760 = vadd.f32 %v4542, %v4672
        %v4761 = vadd.f32 %v4543, %v4677
        %v4762 = vadd.f32 %v4544, %v4680
        %v4763 = vadd.f32 %v4545, %v4685
        %v4764 = vadd.f32 %v4546, %v4688
        %v4765 = vadd.f32 %v4547, %v4693
        %v4766 = vadd.f32 %v4548, %v4696
        %v4767 = vadd.f32 %v4549, %v4701
        %v4768 = vadd.f32 %v4550, %v4704
        %v4769 = vadd.f32 %v4551, %v4709
        %v4770 = vadd.f32 %v4552, %v4712
        %v4771 = vadd.f32 %v4553, %v4717
        %v4772 = vadd.f32 %v4554, %v4720
        %v4773 = vadd.f32 %v4555, %v4725
        %v4774 = vadd.f32 %v4556, %v4728
        %v4775 = vadd.f32 %v4557, %v4733
        %v4776 = vadd.f32 %v4558, %v4736
        %v4777 = vadd.f32 %v4559, %v4741
        %v4778 = vadd.f32 %v4560, %v4744
        %v4779 = vld [vmem:[%s6] sm:$0x1]
        %v4781 = vlaneseq
        %v4782 = vshrl.u32 %v4781, 7
        %v4783 = vsub.s32 0, %v4782
        %v4784 = vrot.slane %v4779, %v4783
        %v4786 = vadd.f32 %v4747, %v4784
        %v4787 = vadd.f32 %v4748, %v4784
        %v4788 = vadd.f32 %v4749, %v4784
        %v4789 = vadd.f32 %v4750, %v4784
        %v4790 = vadd.f32 %v4751, %v4784
        %v4791 = vadd.f32 %v4752, %v4784
        %v4792 = vadd.f32 %v4753, %v4784
        %v4793 = vadd.f32 %v4754, %v4784
        %v4794 = vadd.f32 %v4755, %v4784
        %v4795 = vadd.f32 %v4756, %v4784
        %v4796 = vadd.f32 %v4757, %v4784
        %v4797 = vadd.f32 %v4758, %v4784
        %v4798 = vadd.f32 %v4759, %v4784
        %v4799 = vadd.f32 %v4760, %v4784
        %v4800 = vadd.f32 %v4761, %v4784
        %v4801 = vadd.f32 %v4762, %v4784
        %v4802 = vadd.f32 %v4763, %v4784
        %v4803 = vadd.f32 %v4764, %v4784
        %v4804 = vadd.f32 %v4765, %v4784
        %v4805 = vadd.f32 %v4766, %v4784
        %v4806 = vadd.f32 %v4767, %v4784
        %v4807 = vadd.f32 %v4768, %v4784
        %v4808 = vadd.f32 %v4769, %v4784
        %v4809 = vadd.f32 %v4770, %v4784
        %v4810 = vadd.f32 %v4771, %v4784
        %v4811 = vadd.f32 %v4772, %v4784
        %v4812 = vadd.f32 %v4773, %v4784
        %v4813 = vadd.f32 %v4774, %v4784
        %v4814 = vadd.f32 %v4775, %v4784
        %v4815 = vadd.f32 %v4776, %v4784
        %v4816 = vadd.f32 %v4777, %v4784
        %v4817 = vadd.f32 %v4778, %v4784
        %v4818 = vmax.f32 %v4786, 0.0
        %v4819 = vmax.f32 %v4787, 0.0
        %v4820 = vmax.f32 %v4788, 0.0
        %v4821 = vmax.f32 %v4789, 0.0
        %v4822 = vmax.f32 %v4790, 0.0
        %v4823 = vmax.f32 %v4791, 0.0
        %v4824 = vmax.f32 %v4792, 0.0
        %v4825 = vmax.f32 %v4793, 0.0
        %v4826 = vmax.f32 %v4794, 0.0
        %v4827 = vmax.f32 %v4795, 0.0
        %v4828 = vmax.f32 %v4796, 0.0
        %v4829 = vmax.f32 %v4797, 0.0
        %v4830 = vmax.f32 %v4798, 0.0
        %v4831 = vmax.f32 %v4799, 0.0
        %v4832 = vmax.f32 %v4800, 0.0
        %v4833 = vmax.f32 %v4801, 0.0
        %v4834 = vmax.f32 %v4802, 0.0
        %v4835 = vmax.f32 %v4803, 0.0
        %v4836 = vmax.f32 %v4804, 0.0
        %v4837 = vmax.f32 %v4805, 0.0
        %v4838 = vmax.f32 %v4806, 0.0
        %v4839 = vmax.f32 %v4807, 0.0
        %v4840 = vmax.f32 %v4808, 0.0
        %v4841 = vmax.f32 %v4809, 0.0
        %v4842 = vmax.f32 %v4810, 0.0
        %v4843 = vmax.f32 %v4811, 0.0
        %v4844 = vmax.f32 %v4812, 0.0
        %v4845 = vmax.f32 %v4813, 0.0
        %v4846 = vmax.f32 %v4814, 0.0
        %v4847 = vmax.f32 %v4815, 0.0
        %v4848 = vmax.f32 %v4816, 0.0
        %v4849 = vmax.f32 %v4817, 0.0
        %v4850 = vadd.f32 %v4818, %v4819
        %v4851 = vadd.f32 %v4850, %v4820
        %v4852 = vadd.f32 %v4851, %v4821
        %v4853 = vadd.f32 %v4852, %v4822
        %v4854 = vadd.f32 %v4853, %v4823
        %v4855 = vadd.f32 %v4854, %v4824
        %v4856 = vadd.f32 %v4855, %v4825
        %v4857 = vrot.slane %v4856, 4
        %v4858 = vadd.f32 %v4856, %v4857
        %v4859 = vrot.slane %v4858, 2
        %v4860 = vadd.f32 %v4858, %v4859
        %v4861 = vrot.slane %v4860, 1
        %v4862 = vadd.f32 %v4860, %v4861
        %v4863 = vadd.f32 %v4826, %v4827
        %v4864 = vadd.f32 %v4863, %v4828
        %v4865 = vadd.f32 %v4864, %v4829
        %v4866 = vadd.f32 %v4865, %v4830
        %v4867 = vadd.f32 %v4866, %v4831
        %v4868 = vadd.f32 %v4867, %v4832
        %v4869 = vadd.f32 %v4868, %v4833
        %v4870 = vrot.slane %v4869, 4
        %v4871 = vadd.f32 %v4869, %v4870
        %v4872 = vrot.slane %v4871, 2
        %v4873 = vadd.f32 %v4871, %v4872
        %v4874 = vrot.slane %v4873, 1
        %v4875 = vadd.f32 %v4873, %v4874
        %v4876 = vadd.f32 %v4834, %v4835
        %v4877 = vadd.f32 %v4876, %v4836
        %v4878 = vadd.f32 %v4877, %v4837
        %v4879 = vadd.f32 %v4878, %v4838
        %v4880 = vadd.f32 %v4879, %v4839
        %v4881 = vadd.f32 %v4880, %v4840
        %v4882 = vadd.f32 %v4881, %v4841
        %v4883 = vrot.slane %v4882, 4
        %v4884 = vadd.f32 %v4882, %v4883
        %v4885 = vrot.slane %v4884, 2
        %v4886 = vadd.f32 %v4884, %v4885
        %v4887 = vrot.slane %v4886, 1
        %v4888 = vadd.f32 %v4886, %v4887
        %v4889 = vadd.f32 %v4842, %v4843
        %v4890 = vadd.f32 %v4889, %v4844
        %v4891 = vadd.f32 %v4890, %v4845
        %v4892 = vadd.f32 %v4891, %v4846
        %v4893 = vadd.f32 %v4892, %v4847
        %v4894 = vadd.f32 %v4893, %v4848
        %v4895 = vadd.f32 %v4894, %v4849
        %v4896 = vrot.slane %v4895, 4
        %v4897 = vadd.f32 %v4895, %v4896
        %v4898 = vrot.slane %v4897, 2
        %v4899 = vadd.f32 %v4897, %v4898
        %v4900 = vrot.slane %v4899, 1
        %v4901 = vadd.f32 %v4899, %v4900
        %v4902 = vrcp.pop 64.0
        %v4903 = vmul.f32 %v4862, %v4902
        %v4904 = vmul.f32 %v4875, %v4902
        %v4905 = vmul.f32 %v4888, %v4902
        %v4906 = vmul.f32 %v4901, %v4902
        %vm4911 = vcmask 1041409
        %v4912 = vsel %vm4911, %v4904, %v4903
        %vm4913 = vcmask 1042434
        %v4914 = vsel %vm4913, %v4905, %v4912
        %vm4915 = vcmask 1043459
        %v4916 = vsel %vm4915, %v4906, %v4914
        %4918 = vst [vmem:[%s366] sm:$0xf] %v4916
        %v4919 = vpack.c.bf16 %v4903, %v4903
        %v4920 = vpack.c.bf16 %v4904, %v4904
        %v4921 = vpack.c.bf16 %v4905, %v4905
        %v4922 = vpack.c.bf16 %v4906, %v4906
        %v4923 = vld [vmem:[%s7] sm:$0xf]
        %v4924 = vld [vmem:[%s7 + $0x4] sm:$0xf]
        %v4925 = vld [vmem:[%s7 + $0x8] sm:$0xf]
        %v4926 = vld [vmem:[%s7 + $0xc] sm:$0xf]
        %v4927 = vld [vmem:[%s7 + $0x10] sm:$0xf]
        %v4928 = vld [vmem:[%s7 + $0x14] sm:$0xf]
        %v4929 = vld [vmem:[%s7 + $0x18] sm:$0xf]
        %v4930 = vld [vmem:[%s7 + $0x1c] sm:$0xf]
        %v4931 = vld [vmem:[%s7 + $0x20] sm:$0xf]
        %v4932 = vld [vmem:[%s7 + $0x24] sm:$0xf]
        %v4933 = vld [vmem:[%s7 + $0x28] sm:$0xf]
        %v4934 = vld [vmem:[%s7 + $0x2c] sm:$0xf]
        %v4935 = vld [vmem:[%s7 + $0x30] sm:$0xf]
        %v4936 = vld [vmem:[%s7 + $0x34] sm:$0xf]
        %v4937 = vld [vmem:[%s7 + $0x38] sm:$0xf]
        %v4938 = vld [vmem:[%s7 + $0x3c] sm:$0xf]
        %v4939 = vld [vmem:[%s8] sm:$0x1]
        %v4941 = vlaneseq
        %v4942 = vshrl.u32 %v4941, 7
        %v4943 = vsub.s32 0, %v4942
        %v4944 = vrot.slane %v4939, %v4943
        %v4950 = vunpack.c.l.b16 %v4919
        %v4951 = vunpack.c.l.b16 %v4920
        %v4952 = vunpack.c.l.b16 %v4921
        %v4953 = vunpack.c.l.b16 %v4922
        %v4954 = vsel %vm4911, %v4951, %v4950
        %v4955 = vsel %vm4913, %v4952, %v4954
        %v4956 = vsel %vm4915, %v4953, %v4955
        %v4957 = vpack.c.b16 %v4956, %v4956
        %v4975 = vunpack.c.l.b16 %v4923
        %v4976 = vunpack.c.l.b16 %v4924
        %v4977 = vunpack.c.l.b16 %v4925
        %v4978 = vunpack.c.l.b16 %v4926
        %v4979 = vunpack.c.l.b16 %v4927
        %v4980 = vunpack.c.l.b16 %v4928
        %v4981 = vunpack.c.l.b16 %v4929
        %v4982 = vunpack.c.l.b16 %v4930
        %v4983 = vunpack.c.l.b16 %v4931
        %v4984 = vunpack.c.l.b16 %v4932
        %v4985 = vunpack.c.l.b16 %v4933
        %v4986 = vunpack.c.l.b16 %v4934
        %v4987 = vunpack.c.l.b16 %v4935
        %v4988 = vunpack.c.l.b16 %v4936
        %v4989 = vunpack.c.l.b16 %v4937
        %v4990 = vunpack.c.l.b16 %v4938
        %v4991 = vpack.c.b16 %v4976, %v4975
        %v4992 = vpack.c.b16 %v4978, %v4977
        %v4993 = vpack.c.b16 %v4980, %v4979
        %v4994 = vpack.c.b16 %v4982, %v4981
        %v4995 = vpack.c.b16 %v4984, %v4983
        %v4996 = vpack.c.b16 %v4986, %v4985
        %v4997 = vpack.c.b16 %v4988, %v4987
        %v4998 = vpack.c.b16 %v4990, %v4989
        %5007 = vmatprep.subr.bf16.mxu0 0
        %5008 = vmatpush1.bf16.msra.mxu0 %v4991
        %5009 = vmatprep.subr.bf16.mxu0 0
        %5010 = vmatpush1.bf16.msra.mxu0 %v4992
        %5011 = vmatprep.subr.bf16.mxu0 0
        %5012 = vmatpush1.bf16.msra.mxu0 %v4993
        %5013 = vmatprep.subr.bf16.mxu0 0
        %5014 = vmatpush1.bf16.msra.mxu0 %v4994
        %5015 = vmatprep.subr.bf16.mxu0 0
        %5016 = vmatpush1.bf16.msra.mxu0 %v4995
        %5017 = vmatprep.subr.bf16.mxu0 0
        %5018 = vmatpush1.bf16.msra.mxu0 %v4996
        %5019 = vmatprep.subr.bf16.mxu0 0
        %5020 = vmatpush1.bf16.msra.mxu0 %v4997
        %5021 = vmatprep.subr.bf16.mxu0 0
        %5022 = vmatpush1.bf16.msra.mxu0 %v4998
        %5023 = vmatprep.subr.bf16.mxu0 0
        %5024 = vmatpush1.bf16.msra.mxu0 0
        %5025 = vmatprep.subr.bf16.mxu0 0
        %5026 = vmatpush1.bf16.msra.mxu0 0
        %5027 = vmatprep.subr.bf16.mxu0 0
        %5028 = vmatpush1.bf16.msra.mxu0 0
        %5029 = vmatprep.subr.bf16.mxu0 0
        %5030 = vmatpush1.bf16.msra.mxu0 0
        %5031 = vmatprep.subr.bf16.mxu0 0
        %5032 = vmatpush1.bf16.msra.mxu0 0
        %5033 = vmatprep.subr.bf16.mxu0 0
        %5034 = vmatpush1.bf16.msra.mxu0 0
        %5035 = vmatprep.subr.bf16.mxu0 0
        %5036 = vmatpush1.bf16.msra.mxu0 0
        %5037 = vmatprep.subr.bf16.mxu0 0
        %5038 = vmatpush1.bf16.msra.mxu0 0
        %5039 = vmatprep.mubr.bf16.mxu0 0
        %5040 = vmatmul.mubr.bf16.gmra.mrb[0].mxu0 %v4957
        %v5041 = vpop.f32.mrb[0].mxu0
        %v5042 = vadd.f32 %v4944, %v5041
        %v5043 = vpop.f32.mrb[0].mxu0
        %v5044 = vpop.f32.mrb[0].mxu0
        %v5045 = vpop.f32.mrb[0].mxu0
        %5046 = vdwg.mxu0
        %v5047 = vlaneseq
        %v5048 = vand.u32 %v5047, 127
        %vm5049 = vcmp.lt.s32.totalorder %v5048, 10
        %v5050 = vsel %vm5049, %v5042, -1e+30
        %5051 = vst [vmem:[%s373] sm:$0xf] %v5050
        %s5052 = smul.u32 %s35, 4
        %s5053 = sld [smem:[#allocation3 + %s5052]]
        %v5054 = vstv %s5053
        %s5055 = sadd.s32 %s5052, 1
        %s5056 = sld [smem:[#allocation3 + %s5055]]
        %v5057 = vstv %s5056
        %s5058 = sadd.s32 %s5052, 2
        %s5059 = sld [smem:[#allocation3 + %s5058]]
        %v5060 = vstv %s5059
        %s5061 = sadd.s32 %s5052, 3
        %s5062 = sld [smem:[#allocation3 + %s5061]]
        %v5063 = vstv %s5062
        %vm5064 = vcmask 1040384
        %v5065 = vsel %vm5064, %v5054, %v5057
        %v5066 = vsel %vm1060, %v5065, %v5060
        %vm5067 = vcmask 1042432
        %v5068 = vsel %vm5067, %v5066, %v5063
        %vm5069 = vcmask 1043456
        %v5070 = vsel %vm5069, %v5050, -inf
        %5071 = vmax.xlane.f32.xlu0 %v5070
        %v5072 = vpop.xlane.xlu0 %5071
        %v5073 = vsub.f32 %v5050, %v5072
        %v5074 = vmul.f32 %v5073, 1.442695
        %v5075 = vpow.pop %v5074
        %v5076 = vsel %vm5069, %v5075, 0.0
        %5077 = vadd.xlane.f32.xlu0 %v5076
        %v5078 = vpop.xlane.xlu0 %5077
        %v5079 = vlog2.pop %v5078
        %v5080 = vmul.f32 %v5079, 0.6931472
        %v5081 = vadd.f32 %v5072, %v5080
        %5082 = vset.pattern.permute.xlu0 0
        %5083 = vperm.xlu0 %5082, %v5068
        %v5084 = vpop.permute.xlu0 %5083
        %vm5085 = vcmp.eq.s32.totalorder %v5048, %v5084
        %v5086 = vsel %vm5085, %v5050, 0.0
        %v5087 = vsel %vm5069, %v5086, 0.0
        %5088 = vadd.xlane.f32.xlu0 %v5087
        %v5089 = vpop.xlane.xlu0 %5088
        %v5090 = vsub.f32 %v5081, %v5089
        %vm5091 = vcmask 3072
        %5092 = vst.msk [vmem:[%s390] sm:$0xf] %vm5091, %v5090
        %s5093 = sand.u32 %s216, 1
        %s5094 = scalar_lea.sflag [#allocation5], %s5093
        %s5095 = sand.u32 %s216, 1
        %s5096 = smul.addr %s5095, 4
        %s5097 = scalar_lea.vmem [#allocation4], %s5096
        %s5098 = sand.u32 %s242, 1
        %s5099 = scalar_lea.sflag [#allocation7], %s5098
        %s5100 = sand.u32 %s242, 1
        %s5101 = smul.addr %s5100, 4
        %s5102 = scalar_lea.vmem [#allocation6], %s5101
        %p5103 = scmp.lt.s32.totalorder %s35, 1
        %s5104 = scalar_select %p5103, %s35, 1
        %s5105 = smul.addr %s5104, 4
        %s5106 = scalar_lea.vmem %s11, %s5105
        // Predicated region
        $region53: #{tpu_custom_call.1} parent=51 // pred_check
          %p5107 = pneg %p226
        $region54: #{tpu_custom_call.1} parent=51 // pred_check_branch
          %5109 = sbr.rel (%p5107) target = $region56
        $region55: #{tpu_custom_call.1} parent=51 // pred_region
          %s5111 = ssub.s32 64, 64
          %5112 = vsyncadd %s5094, %s5111
          %s5113 = smul.addr %s35, 64
          %s5114 = scalar_lea.hbm %s9, %s5113
          %s5116 = sshll.u32 %s5097, 4
          %s5117 = int_to_ptr.vmem [resolvable:$true] %s5116
          %5119 = dma.vmem_to_hbm [thread:$0]  %s5117, 64, %s5114, %s5094
        $region56: #{tpu_custom_call.1} parent=51 // pred_fallthru
          _
        // Predicated region
        $region57: #{tpu_custom_call.1} parent=51 // pred_check
          %p5120 = pneg %p252
        $region58: #{tpu_custom_call.1} parent=51 // pred_check_branch
          %5122 = sbr.rel (%p5120) target = $region60
        $region59: #{tpu_custom_call.1} parent=51 // pred_region
          %s5124 = ssub.s32 64, 64
          %5125 = vsyncadd %s5099, %s5124
          %s5126 = smul.addr %s35, 64
          %s5127 = scalar_lea.hbm %s10, %s5126
          %s5129 = sshll.u32 %s5102, 4
          %s5130 = int_to_ptr.vmem [resolvable:$true] %s5129
          %5132 = dma.vmem_to_hbm [thread:$0]  %s5130, 64, %s5127, %s5099
        $region60: #{tpu_custom_call.1} parent=51 // pred_fallthru
          _
        // Predicated region
        $region61: #{tpu_custom_call.1} parent=51 // pred_check
          %p5133 = pneg %p278
        $region62: #{tpu_custom_call.1} parent=51 // pred_check_branch
          %5135 = sbr.rel (%p5133) target = $region64
        $region63: #{tpu_custom_call.1} parent=51 // pred_region
          _
        $region64: #{tpu_custom_call.1} parent=51 // pred_fallthru
          _
      $region52: #{tpu_custom_call.1} parent=5 // pred_fallthru
        _
      %p5136 = scmp.le.s32.totalorder 2, %s30
      // Predicated region
      $region65: #{tpu_custom_call.1} parent=5 // pred_check
        %p5137 = pneg %p5136
      $region66: #{tpu_custom_call.1} parent=5 // pred_check_branch
        %5139 = sbr.rel (%p5137) target = $region68
      $region67: #{tpu_custom_call.1} parent=5 // pred_region
        %s5140 = ssub.s32 %s30, 2
        // Predicated region
        $region69: #{tpu_custom_call.1} parent=67 // pred_check
          %p5141 = pneg %p232
        $region70: #{tpu_custom_call.1} parent=67 // pred_check_branch
          %5143 = sbr.rel (%p5141) target = $region72
        $region71: #{tpu_custom_call.1} parent=67 // pred_region
          %s5144 = sand.u32 %s217, 1
          %s5145 = scalar_lea.sflag [#allocation5], %s5144
          %s5146 = sand.u32 %s217, 1
          %s5147 = smul.addr %s5146, 4
          %s5148 = scalar_lea.vmem [#allocation4], %s5147
          %5149 = dma.done %s5145, 64
        $region72: #{tpu_custom_call.1} parent=67 // pred_fallthru
          _
        // Predicated region
        $region73: #{tpu_custom_call.1} parent=67 // pred_check
          %p5150 = pneg %p258
        $region74: #{tpu_custom_call.1} parent=67 // pred_check_branch
          %5152 = sbr.rel (%p5150) target = $region76
        $region75: #{tpu_custom_call.1} parent=67 // pred_region
          %s5153 = sand.u32 %s243, 1
          %s5154 = scalar_lea.sflag [#allocation7], %s5153
          %s5155 = sand.u32 %s243, 1
          %s5156 = smul.addr %s5155, 4
          %s5157 = scalar_lea.vmem [#allocation6], %s5156
          %5158 = dma.done %s5154, 64
        $region76: #{tpu_custom_call.1} parent=67 // pred_fallthru
          _
        // Predicated region
        $region77: #{tpu_custom_call.1} parent=67 // pred_check
          %p5159 = pneg %p284
        $region78: #{tpu_custom_call.1} parent=67 // pred_check_branch
          %5161 = sbr.rel (%p5159) target = $region80
        $region79: #{tpu_custom_call.1} parent=67 // pred_region
          %p5162 = scmp.lt.s32.totalorder %s36, 1
          %s5163 = scalar_select %p5162, %s36, 1
          %s5164 = smul.addr %s5163, 4
          %s5165 = scalar_lea.vmem %s11, %s5164
        $region80: #{tpu_custom_call.1} parent=67 // pred_fallthru
          _
      $region68: #{tpu_custom_call.1} parent=5 // pred_fallthru
        _
    $region6: #{tpu_custom_call.1} parent=1 // loop_footer
      %s34 = sadd.s32 1, %s30
    $region7: #{tpu_custom_call.1} parent=1 // loop_footer_branch
      %29 = sbr.rel target = $region3
    $region8: #{tpu_custom_call.1} parent=1 // loop_exit
      _
    %5166 = vsyncpa [#allocation5], 1
    %s5167 = scalar_lea.sflag [#allocation5], 1
    %5168 = vsyncpa %s5167, 1
    %5169 = vsyncpa [#allocation7], 1
    %s5170 = scalar_lea.sflag [#allocation7], 1
    %5171 = vsyncpa %s5170, 1

</llo_original>
